<compile_context>
chip_gen: v7x
topology: tpu7x:2x2x1
jax: 0.10.0
libtpu: 0.0.40
codegen_flags: <defaults>
</compile_context>

<pallas_src>
import functools

import jax
import jax.numpy as jnp
import numpy as np
from jax.experimental import pallas as pl
from jax.experimental.pallas import tpu as pltpu


def bottleneck_kernel(x_ref, w1_ref, b1_ref, w2_ref, b2_ref, w3_ref, b3_ref,
                      out_ref, pad_ref, *, H, W):
    nb, _, _, Cin = x_ref.shape
    Pp = w1_ref.shape[1]            # padded planes (multiple of 128)
    Cout = w3_ref.shape[1]
    M = nb * H * W
    cd = pad_ref.dtype              # matmul / scratch compute dtype (bf16)

    # One unmasked bulk zero of the padded scratch per step (cheap, lane-dense,
    # and correct even when the "parallel" grid axis is split across cores).
    pad_ref[...] = jnp.zeros(pad_ref.shape, cd)

    x_f32 = x_ref[...].reshape(M, Cin)          # f32, kept for the residual add
    x_mm = x_f32.astype(cd)

    # ---- conv1 (1x1, BN1 scale folded into w1) + bias + ReLU ----------------
    h1 = jnp.dot(x_mm, w1_ref[...], preferred_element_type=jnp.float32)
    h1 = jnp.maximum(h1 + b1_ref[...], 0.0)                       # (M, Pp) f32

    # ---- conv2 (3x3, stride 1, pad 1): 9 shifted-slice matmuls --------------
    # Write h1 into the interior of the zero-bordered scratch, then accumulate
    # the 9 taps straight from shifted slices (no im2col buffer / copies).
    pad_ref[:, 1:H + 1, 1:W + 1, :] = h1.astype(cd).reshape(nb, H, W, Pp)

    def tap(t):
        dy, dx = divmod(t, 3)
        return pad_ref[:, dy:dy + H, dx:dx + W, :].reshape(M, Pp)

    acc = jnp.dot(tap(0), w2_ref[0], preferred_element_type=jnp.float32)
    for t in range(1, 9):                                         # static unroll
        acc = acc + jnp.dot(tap(t), w2_ref[t],
                            preferred_element_type=jnp.float32)
    h2 = jnp.maximum(acc + b2_ref[...], 0.0)                      # (M, Pp) f32

    # ---- conv3 (1x1, BN3 scale folded) + bias + residual + ReLU -------------
    h3 = jnp.dot(h2.astype(cd), w3_ref[...], preferred_element_type=jnp.float32)
    h3 = h3 + b3_ref[...] + x_f32
    out_ref[...] = jnp.maximum(h3, 0.0).reshape(out_ref.shape).astype(out_ref.dtype)


def fold_bn(gamma, beta, mean, var, eps=1e-5):
    scale = gamma / jnp.sqrt(var + eps)
    bias = beta - mean * scale
    return scale, bias


def _round_up(x, m):
    return (x + m - 1) // m * m


def _auto_images_per_block(N, H, W, Cin, Cout, Pp, cdb, odb, vmem_cap,
                           min_steps=8):
    """Largest image block whose working set stays under ~40% of VMEM, while
    keeping >= min_steps grid steps when the batch allows (v7x megacore)."""
    per_img = 2 * H * W * (Cin * 4 + Cout * odb)                # 2x-buffered I/O
    per_img += (H + 2) * (W + 2) * Pp * cdb                     # pad scratch
    per_img += 2 * H * W * (Cin * (4 + cdb) + 3 * Pp * 4 + Cout * 4)  # live vals
    budget = int(0.40 * vmem_cap)
    nb = max(1, budget // max(per_img, 1))
    nb = min(nb, N, max(1, N // min_steps))
    while N % nb:
        nb -= 1
    return int(nb)


def bottleneck_forward(x_nchw, params, *, images_per_block=None,
                       compute_dtype=jnp.bfloat16, out_dtype=jnp.bfloat16):
    """x_nchw: (N, Cin, H, W), Cin == 4 * planes (stride=1, no downsample)."""
    N, Cin, H, W = x_nchw.shape
    P = params["w1"].shape[0]                   # planes (torch OIHW: (P, Cin, 1, 1))
    Cout = 4 * P
    assert Cin == Cout, "identity residual requires inplanes == 4*planes"
    Pp = _round_up(P, 128)                      # lane-padded bottleneck width

    cdb = jnp.dtype(compute_dtype).itemsize
    odb = jnp.dtype(out_dtype).itemsize

    try:
        vmem_cap = int(pltpu.get_tpu_info().vmem_capacity_bytes)
    except Exception:
        vmem_cap = 64 << 20                     # assume the smallest (v7x)

    if images_per_block is None:
        nb = _auto_images_per_block(N, H, W, Cin, Cout, Pp, cdb, odb, vmem_cap)
    else:
        nb = images_per_block
    assert N % nb == 0, "batch must be divisible by images_per_block"

    # NCHW -> NHWC (channels on lanes).
    x_nhwc = jnp.transpose(x_nchw, (0, 2, 3, 1))                  # (N, H, W, Cin) f32

    # Fold BN (eval mode) into per-channel scale/bias; fold the scale straight
    # into the conv weights and zero-pad the `planes` dim to Pp lanes (one-time
    # XLA constant work).  Padded channels stay exactly zero through ReLU.
    s1, b1 = fold_bn(*params["bn1"])
    s2, b2 = fold_bn(*params["bn2"])
    s3, b3 = fold_bn(*params["bn3"])

    w1 = jnp.transpose(params["w1"][:, :, 0, 0], (1, 0)) * s1[None, :]        # (Cin, P)
    w1 = jnp.pad(w1, ((0, 0), (0, Pp - P))).astype(compute_dtype)             # (Cin, Pp)
    b1p = jnp.pad(b1, (0, Pp - P)).reshape(1, Pp).astype(jnp.float32)

    w2 = jnp.transpose(params["w2"], (2, 3, 1, 0)) * s2[None, None, None, :]  # (3,3,P,P)
    w2 = jnp.pad(w2, ((0, 0), (0, 0), (0, Pp - P), (0, Pp - P)))
    w2 = w2.reshape(9, Pp, Pp).astype(compute_dtype)                          # (9, Pp, Pp)
    b2p = jnp.pad(b2, (0, Pp - P)).reshape(1, Pp).astype(jnp.float32)

    w3 = jnp.transpose(params["w3"][:, :, 0, 0], (1, 0)) * s3[None, :]        # (P, Cout)
    w3 = jnp.pad(w3, ((0, Pp - P), (0, 0))).astype(compute_dtype)             # (Pp, Cout)
    b3p = b3.reshape(1, Cout).astype(jnp.float32)

    grid = (N // nb,)
    x_spec = pl.BlockSpec((nb, H, W, Cin), lambda i: (i, 0, 0, 0))
    out_spec = pl.BlockSpec((nb, H, W, Cout), lambda i: (i, 0, 0, 0))

    def full(a):                                # weights/biases: single resident block
        return pl.BlockSpec(a.shape, lambda i, _nd=a.ndim: (0,) * _nd)

    scratch_shapes = [pltpu.VMEM((nb, H + 2, W + 2, Pp), compute_dtype)]

    # Scoped-VMEM budget from the per-block footprint, clamped to physical VMEM
    # (v7x has only 64 MiB; v5e/v6e have 128 MiB).
    blk_io = nb * H * W * (Cin * 4 + Cout * odb)
    wgt = (Cin * Pp + 9 * Pp * Pp + Pp * Cout) * cdb + (2 * Pp + Cout) * 4
    scr = nb * (H + 2) * (W + 2) * Pp * cdb
    live = nb * H * W * (Cin * (4 + cdb) + 3 * Pp * 4 + Cout * 4)
    vmem_limit = int(2 * (blk_io + wgt) + scr + 2 * live + (4 << 20))
    vmem_limit = min(max(vmem_limit, 32 << 20), int(0.85 * vmem_cap))

    flops = 2 * N * H * W * (Cin * Pp + 9 * Pp * Pp + Pp * Cout)
    bytes_accessed = (N * H * W * (Cin * 4 + Cout * odb)
                      + (Cin * Pp + 9 * Pp * Pp + Pp * Cout) * cdb)
    cost = pl.CostEstimate(flops=flops, transcendentals=0,
                           bytes_accessed=bytes_accessed)

    out_nhwc = pl.pallas_call(
        functools.partial(bottleneck_kernel, H=H, W=W),
        out_shape=jax.ShapeDtypeStruct((N, H, W, Cout), out_dtype),
        grid_spec=pltpu.PrefetchScalarGridSpec(
            num_scalar_prefetch=0,
            grid=grid,
            in_specs=[x_spec, full(w1), full(b1p), full(w2), full(b2p),
                      full(w3), full(b3p)],
            out_specs=out_spec,
            scratch_shapes=scratch_shapes),
        compiler_params=pltpu.CompilerParams(
            dimension_semantics=("parallel",),
            vmem_limit_bytes=vmem_limit),
        cost_estimate=cost,
    )(x_nhwc, w1, b1p, w2, b2p, w3, b3p)

    # NHWC -> NCHW (kept in out_dtype; writeback from the kernel was bf16).
    return jnp.transpose(out_nhwc, (0, 3, 1, 2))


# ---------------------------- pure-JAX reference -----------------------------
def bottleneck_reference(x, params):
    def conv(x, w, stride=1, pad=0):
        return jax.lax.conv_general_dilated(
            x, w, (stride, stride), [(pad, pad), (pad, pad)],
            dimension_numbers=("NCHW", "OIHW", "NCHW"))

    def bn(x, stats, eps=1e-5):
        g, b, m, v = (s[None, :, None, None] for s in stats)
        return (x - m) / jnp.sqrt(v + eps) * g + b

    out = jax.nn.relu(bn(conv(x, params["w1"]), params["bn1"]))
    out = jax.nn.relu(bn(conv(out, params["w2"], pad=1), params["bn2"]))
    out = bn(conv(out, params["w3"]), params["bn3"])
    return jax.nn.relu(out + x)


if __name__ == "__main__":
    # Small but lane-dense shapes: planes=32 -> inplanes = Cout = 128.
    N, planes, H, W = 2, 32, 16, 16
    inplanes = planes * 4

    key = jax.random.PRNGKey(0)
    ks = jax.random.split(key, 12)

    params = {
        "w1": 0.1 * jax.random.normal(ks[0], (planes, inplanes, 1, 1), jnp.float32),
        "w2": 0.1 * jax.random.normal(ks[1], (planes, planes, 3, 3), jnp.float32),
        "w3": 0.1 * jax.random.normal(ks[2], (planes * 4, planes, 1, 1), jnp.float32),
        # BatchNorm (eval mode): (gamma, beta, running_mean, running_var)
        "bn1": (1.0 + 0.1 * jax.random.normal(ks[3], (planes,)),
                0.1 * jax.random.normal(ks[4], (planes,)),
                0.05 * jax.random.normal(ks[5], (planes,)),
                jnp.abs(1.0 + 0.1 * jax.random.normal(ks[6], (planes,)))),
        "bn2": (1.0 + 0.1 * jax.random.normal(ks[7], (planes,)),
                0.1 * jax.random.normal(ks[8], (planes,)),
                0.05 * jax.random.normal(ks[9], (planes,)),
                jnp.abs(1.0 + 0.1 * jax.random.normal(ks[10], (planes,)))),
        "bn3": (jnp.ones((planes * 4,)), jnp.zeros((planes * 4,)),
                jnp.zeros((planes * 4,)), jnp.ones((planes * 4,))),
    }

    x = jax.random.normal(ks[11], (N, inplanes, H, W), jnp.float32)

    out = jax.block_until_ready(bottleneck_forward(x, params))
    ref = jax.block_until_ready(bottleneck_reference(x, params))

    assert out.shape == (N, inplanes, H, W)
    # bf16 matmul operands + bf16 writeback (f32 accumulation/epilogue) vs
    # full-f32 reference.
    out_f32 = np.asarray(jnp.asarray(out, jnp.float32))
    np.testing.assert_allclose(out_f32, np.asarray(ref), rtol=3e-2, atol=3e-2)
    print("KERNEL_OK")
</pallas_src>

<mosaic_0001>
module attributes {stable_mosaic.version = 11 : i64} {
  func.func @bottleneck_kernel(%arg0: i32, %arg1: memref<1x16x16x128xf32, #tpu.memory_space<vmem>>, %arg2: memref<128x128xbf16, #tpu.memory_space<vmem>>, %arg3: memref<1x128xf32, #tpu.memory_space<vmem>>, %arg4: memref<9x128x128xbf16, #tpu.memory_space<vmem>>, %arg5: memref<1x128xf32, #tpu.memory_space<vmem>>, %arg6: memref<128x128xbf16, #tpu.memory_space<vmem>>, %arg7: memref<1x128xf32, #tpu.memory_space<vmem>>, %arg8: memref<1x16x16x128xbf16, #tpu.memory_space<vmem>>, %arg9: memref<1x18x18x128xbf16, #tpu.memory_space<vmem>>) attributes {dimension_semantics = [#tpu.dimension_semantics<parallel>], iteration_bounds = array<i64: 2>, scalar_prefetch = 0 : i64, scratch_operands = 1 : i64, tpu.core_type = #tpu.core_type<tc>, window_params = [{transform_indices = @transform_0, window_bounds = array<i64: 1, 16, 16, 128>}, {pipeline_mode = #tpu.pipeline_mode<synchronous>, transform_indices = @transform_1, window_bounds = array<i64: 128, 128>}, {pipeline_mode = #tpu.pipeline_mode<synchronous>, transform_indices = @transform_2, window_bounds = array<i64: 1, 128>}, {pipeline_mode = #tpu.pipeline_mode<synchronous>, transform_indices = @transform_3, window_bounds = array<i64: 9, 128, 128>}, {pipeline_mode = #tpu.pipeline_mode<synchronous>, transform_indices = @transform_4, window_bounds = array<i64: 1, 128>}, {pipeline_mode = #tpu.pipeline_mode<synchronous>, transform_indices = @transform_5, window_bounds = array<i64: 128, 128>}, {pipeline_mode = #tpu.pipeline_mode<synchronous>, transform_indices = @transform_6, window_bounds = array<i64: 1, 128>}, {transform_indices = @transform_7, window_bounds = array<i64: 1, 16, 16, 128>}]} {
    %cst = arith.constant 0.000000e+00 : bf16
    %0 = vector.broadcast %cst : bf16 to vector<1x18x18x128xbf16>
    %c0 = arith.constant 0 : index
    %c0_0 = arith.constant 0 : index
    %c0_1 = arith.constant 0 : index
    %c0_2 = arith.constant 0 : index
    %1 = vector.load %arg9[%c0, %c0_0, %c0_1, %c0_2] : memref<1x18x18x128xbf16, #tpu.memory_space<vmem>>, vector<1x18x18x128xbf16>
    tpu.vector_store %arg9[%c0, %c0_0, %c0_1, %c0_2], %0 {strides = array<i32>} : memref<1x18x18x128xbf16, #tpu.memory_space<vmem>>, vector<1x18x18x128xbf16>,
    %c0_3 = arith.constant 0 : index
    %c0_4 = arith.constant 0 : index
    %c0_5 = arith.constant 0 : index
    %c0_6 = arith.constant 0 : index
    %2 = vector.load %arg1[%c0_3, %c0_4, %c0_5, %c0_6] : memref<1x16x16x128xf32, #tpu.memory_space<vmem>>, vector<1x16x16x128xf32>
    %3 = vector.shape_cast %2 : vector<1x16x16x128xf32> to vector<256x128xf32>
    %4 = arith.truncf %3 : vector<256x128xf32> to vector<256x128xbf16>
    %c0_7 = arith.constant 0 : index
    %c0_8 = arith.constant 0 : index
    %5 = vector.load %arg2[%c0_7, %c0_8] : memref<128x128xbf16, #tpu.memory_space<vmem>>, vector<128x128xbf16>
    %cst_9 = arith.constant dense<0.000000e+00> : vector<256x128xf32>
    %6 = tpu.matmul %4, %5, %cst_9 {dimension_numbers = #tpu.dot_dimension_numbers<[1], [0], [0], [1], [0, 0, 1, 1], [], []>} : vector<256x128xbf16>, vector<128x128xbf16>, vector<256x128xf32> -> vector<256x128xf32>
    %c0_10 = arith.constant 0 : index
    %c0_11 = arith.constant 0 : index
    %7 = vector.load %arg3[%c0_10, %c0_11] : memref<1x128xf32, #tpu.memory_space<vmem>>, vector<1x128xf32>
    %8 = vector.broadcast %7 : vector<1x128xf32> to vector<256x128xf32>
    %9 = arith.addf %6, %8 : vector<256x128xf32>
    %cst_12 = arith.constant 0.000000e+00 : f32
    %10 = vector.broadcast %cst_12 : f32 to vector<256x128xf32>
    %11 = arith.maximumf %9, %10 : vector<256x128xf32>
    %12 = arith.truncf %11 : vector<256x128xf32> to vector<256x128xbf16>
    %13 = vector.shape_cast %12 : vector<256x128xbf16> to vector<1x16x16x128xbf16>
    %c0_13 = arith.constant 0 : index
    %c1 = arith.constant 1 : index
    %c1_14 = arith.constant 1 : index
    %c0_15 = arith.constant 0 : index
    %14 = vector.load %arg9[%c0_13, %c1, %c1_14, %c0_15] : memref<1x18x18x128xbf16, #tpu.memory_space<vmem>>, vector<1x16x16x128xbf16>
    tpu.vector_store %arg9[%c0_13, %c1, %c1_14, %c0_15], %13 {strides = array<i32>} : memref<1x18x18x128xbf16, #tpu.memory_space<vmem>>, vector<1x16x16x128xbf16>,
    %c0_16 = arith.constant 0 : index
    %c0_17 = arith.constant 0 : index
    %c0_18 = arith.constant 0 : index
    %c0_19 = arith.constant 0 : index
    %15 = vector.load %arg9[%c0_16, %c0_17, %c0_18, %c0_19] : memref<1x18x18x128xbf16, #tpu.memory_space<vmem>>, vector<1x16x16x128xbf16>
    %16 = vector.shape_cast %15 : vector<1x16x16x128xbf16> to vector<256x128xbf16>
    %c0_20 = arith.constant 0 : index
    %c0_21 = arith.constant 0 : index
    %c0_22 = arith.constant 0 : index
    %17 = vector.load %arg4[%c0_20, %c0_21, %c0_22] : memref<9x128x128xbf16, #tpu.memory_space<vmem>>, vector<1x128x128xbf16>
    %18 = vector.shape_cast %17 : vector<1x128x128xbf16> to vector<128x128xbf16>
    %cst_23 = arith.constant dense<0.000000e+00> : vector<256x128xf32>
    %19 = tpu.matmul %16, %18, %cst_23 {dimension_numbers = #tpu.dot_dimension_numbers<[1], [0], [0], [1], [0, 0, 1, 1], [], []>} : vector<256x128xbf16>, vector<128x128xbf16>, vector<256x128xf32> -> vector<256x128xf32>
    %c0_24 = arith.constant 0 : index
    %c0_25 = arith.constant 0 : index
    %c1_26 = arith.constant 1 : index
    %c0_27 = arith.constant 0 : index
    %20 = vector.load %arg9[%c0_24, %c0_25, %c1_26, %c0_27] : memref<1x18x18x128xbf16, #tpu.memory_space<vmem>>, vector<1x16x16x128xbf16>
    %21 = vector.shape_cast %20 : vector<1x16x16x128xbf16> to vector<256x128xbf16>
    %c1_28 = arith.constant 1 : index
    %c0_29 = arith.constant 0 : index
    %c0_30 = arith.constant 0 : index
    %22 = vector.load %arg4[%c1_28, %c0_29, %c0_30] : memref<9x128x128xbf16, #tpu.memory_space<vmem>>, vector<1x128x128xbf16>
    %23 = vector.shape_cast %22 : vector<1x128x128xbf16> to vector<128x128xbf16>
    %cst_31 = arith.constant dense<0.000000e+00> : vector<256x128xf32>
    %24 = tpu.matmul %21, %23, %cst_31 {dimension_numbers = #tpu.dot_dimension_numbers<[1], [0], [0], [1], [0, 0, 1, 1], [], []>} : vector<256x128xbf16>, vector<128x128xbf16>, vector<256x128xf32> -> vector<256x128xf32>
    %25 = arith.addf %19, %24 : vector<256x128xf32>
    %c0_32 = arith.constant 0 : index
    %c0_33 = arith.constant 0 : index
    %c2 = arith.constant 2 : index
    %c0_34 = arith.constant 0 : index
    %26 = vector.load %arg9[%c0_32, %c0_33, %c2, %c0_34] : memref<1x18x18x128xbf16, #tpu.memory_space<vmem>>, vector<1x16x16x128xbf16>
    %27 = vector.shape_cast %26 : vector<1x16x16x128xbf16> to vector<256x128xbf16>
    %c2_35 = arith.constant 2 : index
    %c0_36 = arith.constant 0 : index
    %c0_37 = arith.constant 0 : index
    %28 = vector.load %arg4[%c2_35, %c0_36, %c0_37] : memref<9x128x128xbf16, #tpu.memory_space<vmem>>, vector<1x128x128xbf16>
    %29 = vector.shape_cast %28 : vector<1x128x128xbf16> to vector<128x128xbf16>
    %cst_38 = arith.constant dense<0.000000e+00> : vector<256x128xf32>
    %30 = tpu.matmul %27, %29, %cst_38 {dimension_numbers = #tpu.dot_dimension_numbers<[1], [0], [0], [1], [0, 0, 1, 1], [], []>} : vector<256x128xbf16>, vector<128x128xbf16>, vector<256x128xf32> -> vector<256x128xf32>
    %31 = arith.addf %25, %30 : vector<256x128xf32>
    %c0_39 = arith.constant 0 : index
    %c1_40 = arith.constant 1 : index
    %c0_41 = arith.constant 0 : index
    %c0_42 = arith.constant 0 : index
    %32 = vector.load %arg9[%c0_39, %c1_40, %c0_41, %c0_42] : memref<1x18x18x128xbf16, #tpu.memory_space<vmem>>, vector<1x16x16x128xbf16>
    %33 = vector.shape_cast %32 : vector<1x16x16x128xbf16> to vector<256x128xbf16>
    %c3 = arith.constant 3 : index
    %c0_43 = arith.constant 0 : index
    %c0_44 = arith.constant 0 : index
    %34 = vector.load %arg4[%c3, %c0_43, %c0_44] : memref<9x128x128xbf16, #tpu.memory_space<vmem>>, vector<1x128x128xbf16>
    %35 = vector.shape_cast %34 : vector<1x128x128xbf16> to vector<128x128xbf16>
    %cst_45 = arith.constant dense<0.000000e+00> : vector<256x128xf32>
    %36 = tpu.matmul %33, %35, %cst_45 {dimension_numbers = #tpu.dot_dimension_numbers<[1], [0], [0], [1], [0, 0, 1, 1], [], []>} : vector<256x128xbf16>, vector<128x128xbf16>, vector<256x128xf32> -> vector<256x128xf32>
    %37 = arith.addf %31, %36 : vector<256x128xf32>
    %c0_46 = arith.constant 0 : index
    %c1_47 = arith.constant 1 : index
    %c1_48 = arith.constant 1 : index
    %c0_49 = arith.constant 0 : index
    %38 = vector.load %arg9[%c0_46, %c1_47, %c1_48, %c0_49] : memref<1x18x18x128xbf16, #tpu.memory_space<vmem>>, vector<1x16x16x128xbf16>
    %39 = vector.shape_cast %38 : vector<1x16x16x128xbf16> to vector<256x128xbf16>
    %c4 = arith.constant 4 : index
    %c0_50 = arith.constant 0 : index
    %c0_51 = arith.constant 0 : index
    %40 = vector.load %arg4[%c4, %c0_50, %c0_51] : memref<9x128x128xbf16, #tpu.memory_space<vmem>>, vector<1x128x128xbf16>
    %41 = vector.shape_cast %40 : vector<1x128x128xbf16> to vector<128x128xbf16>
    %cst_52 = arith.constant dense<0.000000e+00> : vector<256x128xf32>
    %42 = tpu.matmul %39, %41, %cst_52 {dimension_numbers = #tpu.dot_dimension_numbers<[1], [0], [0], [1], [0, 0, 1, 1], [], []>} : vector<256x128xbf16>, vector<128x128xbf16>, vector<256x128xf32> -> vector<256x128xf32>
    %43 = arith.addf %37, %42 : vector<256x128xf32>
    %c0_53 = arith.constant 0 : index
    %c1_54 = arith.constant 1 : index
    %c2_55 = arith.constant 2 : index
    %c0_56 = arith.constant 0 : index
    %44 = vector.load %arg9[%c0_53, %c1_54, %c2_55, %c0_56] : memref<1x18x18x128xbf16, #tpu.memory_space<vmem>>, vector<1x16x16x128xbf16>
    %45 = vector.shape_cast %44 : vector<1x16x16x128xbf16> to vector<256x128xbf16>
    %c5 = arith.constant 5 : index
    %c0_57 = arith.constant 0 : index
    %c0_58 = arith.constant 0 : index
    %46 = vector.load %arg4[%c5, %c0_57, %c0_58] : memref<9x128x128xbf16, #tpu.memory_space<vmem>>, vector<1x128x128xbf16>
    %47 = vector.shape_cast %46 : vector<1x128x128xbf16> to vector<128x128xbf16>
    %cst_59 = arith.constant dense<0.000000e+00> : vector<256x128xf32>
    %48 = tpu.matmul %45, %47, %cst_59 {dimension_numbers = #tpu.dot_dimension_numbers<[1], [0], [0], [1], [0, 0, 1, 1], [], []>} : vector<256x128xbf16>, vector<128x128xbf16>, vector<256x128xf32> -> vector<256x128xf32>
    %49 = arith.addf %43, %48 : vector<256x128xf32>
    %c0_60 = arith.constant 0 : index
    %c2_61 = arith.constant 2 : index
    %c0_62 = arith.constant 0 : index
    %c0_63 = arith.constant 0 : index
    %50 = vector.load %arg9[%c0_60, %c2_61, %c0_62, %c0_63] : memref<1x18x18x128xbf16, #tpu.memory_space<vmem>>, vector<1x16x16x128xbf16>
    %51 = vector.shape_cast %50 : vector<1x16x16x128xbf16> to vector<256x128xbf16>
    %c6 = arith.constant 6 : index
    %c0_64 = arith.constant 0 : index
    %c0_65 = arith.constant 0 : index
    %52 = vector.load %arg4[%c6, %c0_64, %c0_65] : memref<9x128x128xbf16, #tpu.memory_space<vmem>>, vector<1x128x128xbf16>
    %53 = vector.shape_cast %52 : vector<1x128x128xbf16> to vector<128x128xbf16>
    %cst_66 = arith.constant dense<0.000000e+00> : vector<256x128xf32>
    %54 = tpu.matmul %51, %53, %cst_66 {dimension_numbers = #tpu.dot_dimension_numbers<[1], [0], [0], [1], [0, 0, 1, 1], [], []>} : vector<256x128xbf16>, vector<128x128xbf16>, vector<256x128xf32> -> vector<256x128xf32>
    %55 = arith.addf %49, %54 : vector<256x128xf32>
    %c0_67 = arith.constant 0 : index
    %c2_68 = arith.constant 2 : index
    %c1_69 = arith.constant 1 : index
    %c0_70 = arith.constant 0 : index
    %56 = vector.load %arg9[%c0_67, %c2_68, %c1_69, %c0_70] : memref<1x18x18x128xbf16, #tpu.memory_space<vmem>>, vector<1x16x16x128xbf16>
    %57 = vector.shape_cast %56 : vector<1x16x16x128xbf16> to vector<256x128xbf16>
    %c7 = arith.constant 7 : index
    %c0_71 = arith.constant 0 : index
    %c0_72 = arith.constant 0 : index
    %58 = vector.load %arg4[%c7, %c0_71, %c0_72] : memref<9x128x128xbf16, #tpu.memory_space<vmem>>, vector<1x128x128xbf16>
    %59 = vector.shape_cast %58 : vector<1x128x128xbf16> to vector<128x128xbf16>
    %cst_73 = arith.constant dense<0.000000e+00> : vector<256x128xf32>
    %60 = tpu.matmul %57, %59, %cst_73 {dimension_numbers = #tpu.dot_dimension_numbers<[1], [0], [0], [1], [0, 0, 1, 1], [], []>} : vector<256x128xbf16>, vector<128x128xbf16>, vector<256x128xf32> -> vector<256x128xf32>
    %61 = arith.addf %55, %60 : vector<256x128xf32>
    %c0_74 = arith.constant 0 : index
    %c2_75 = arith.constant 2 : index
    %c2_76 = arith.constant 2 : index
    %c0_77 = arith.constant 0 : index
    %62 = vector.load %arg9[%c0_74, %c2_75, %c2_76, %c0_77] : memref<1x18x18x128xbf16, #tpu.memory_space<vmem>>, vector<1x16x16x128xbf16>
    %63 = vector.shape_cast %62 : vector<1x16x16x128xbf16> to vector<256x128xbf16>
    %c8 = arith.constant 8 : index
    %c0_78 = arith.constant 0 : index
    %c0_79 = arith.constant 0 : index
    %64 = vector.load %arg4[%c8, %c0_78, %c0_79] : memref<9x128x128xbf16, #tpu.memory_space<vmem>>, vector<1x128x128xbf16>
    %65 = vector.shape_cast %64 : vector<1x128x128xbf16> to vector<128x128xbf16>
    %cst_80 = arith.constant dense<0.000000e+00> : vector<256x128xf32>
    %66 = tpu.matmul %63, %65, %cst_80 {dimension_numbers = #tpu.dot_dimension_numbers<[1], [0], [0], [1], [0, 0, 1, 1], [], []>} : vector<256x128xbf16>, vector<128x128xbf16>, vector<256x128xf32> -> vector<256x128xf32>
    %67 = arith.addf %61, %66 : vector<256x128xf32>
    %c0_81 = arith.constant 0 : index
    %c0_82 = arith.constant 0 : index
    %68 = vector.load %arg5[%c0_81, %c0_82] : memref<1x128xf32, #tpu.memory_space<vmem>>, vector<1x128xf32>
    %69 = vector.broadcast %68 : vector<1x128xf32> to vector<256x128xf32>
    %70 = arith.addf %67, %69 : vector<256x128xf32>
    %cst_83 = arith.constant 0.000000e+00 : f32
    %71 = vector.broadcast %cst_83 : f32 to vector<256x128xf32>
    %72 = arith.maximumf %70, %71 : vector<256x128xf32>
    %73 = arith.truncf %72 : vector<256x128xf32> to vector<256x128xbf16>
    %c0_84 = arith.constant 0 : index
    %c0_85 = arith.constant 0 : index
    %74 = vector.load %arg6[%c0_84, %c0_85] : memref<128x128xbf16, #tpu.memory_space<vmem>>, vector<128x128xbf16>
    %cst_86 = arith.constant dense<0.000000e+00> : vector<256x128xf32>
    %75 = tpu.matmul %73, %74, %cst_86 {dimension_numbers = #tpu.dot_dimension_numbers<[1], [0], [0], [1], [0, 0, 1, 1], [], []>} : vector<256x128xbf16>, vector<128x128xbf16>, vector<256x128xf32> -> vector<256x128xf32>
    %c0_87 = arith.constant 0 : index
    %c0_88 = arith.constant 0 : index
    %76 = vector.load %arg7[%c0_87, %c0_88] : memref<1x128xf32, #tpu.memory_space<vmem>>, vector<1x128xf32>
    %77 = vector.broadcast %76 : vector<1x128xf32> to vector<256x128xf32>
    %78 = arith.addf %75, %77 : vector<256x128xf32>
    %79 = arith.addf %78, %3 : vector<256x128xf32>
    %cst_89 = arith.constant 0.000000e+00 : f32
    %80 = vector.broadcast %cst_89 : f32 to vector<256x128xf32>
    %81 = arith.maximumf %79, %80 : vector<256x128xf32>
    %82 = vector.shape_cast %81 : vector<256x128xf32> to vector<1x16x16x128xf32>
    %83 = arith.truncf %82 : vector<1x16x16x128xf32> to vector<1x16x16x128xbf16>
    %c0_90 = arith.constant 0 : index
    %c0_91 = arith.constant 0 : index
    %c0_92 = arith.constant 0 : index
    %c0_93 = arith.constant 0 : index
    %84 = vector.load %arg8[%c0_90, %c0_91, %c0_92, %c0_93] : memref<1x16x16x128xbf16, #tpu.memory_space<vmem>>, vector<1x16x16x128xbf16>
    tpu.vector_store %arg8[%c0_90, %c0_91, %c0_92, %c0_93], %83 {strides = array<i32>} : memref<1x16x16x128xbf16, #tpu.memory_space<vmem>>, vector<1x16x16x128xbf16>,
    return
  }
  func.func @transform_0(%arg0: i32) -> (i32, i32, i32, i32) {
    %c0_i32 = arith.constant 0 : i32
    %c0_i32_0 = arith.constant 0 : i32
    %c0_i32_1 = arith.constant 0 : i32
    %c0_i32_2 = arith.constant 0 : i32
    return %arg0, %c0_i32, %c0_i32_0, %c0_i32_1 : i32, i32, i32, i32
  }
  func.func @transform_1(%arg0: i32) -> (i32, i32) {
    %c0_i32 = arith.constant 0 : i32
    %c0_i32_0 = arith.constant 0 : i32
    %c0_i32_1 = arith.constant 0 : i32
    return %c0_i32, %c0_i32_0 : i32, i32
  }
  func.func @transform_2(%arg0: i32) -> (i32, i32) {
    %c0_i32 = arith.constant 0 : i32
    %c0_i32_0 = arith.constant 0 : i32
    %c0_i32_1 = arith.constant 0 : i32
    return %c0_i32, %c0_i32_0 : i32, i32
  }
  func.func @transform_3(%arg0: i32) -> (i32, i32, i32) {
    %c0_i32 = arith.constant 0 : i32
    %c0_i32_0 = arith.constant 0 : i32
    %c0_i32_1 = arith.constant 0 : i32
    %c0_i32_2 = arith.constant 0 : i32
    return %c0_i32, %c0_i32_0, %c0_i32_1 : i32, i32, i32
  }
  func.func @transform_4(%arg0: i32) -> (i32, i32) {
    %c0_i32 = arith.constant 0 : i32
    %c0_i32_0 = arith.constant 0 : i32
    %c0_i32_1 = arith.constant 0 : i32
    return %c0_i32, %c0_i32_0 : i32, i32
  }
  func.func @transform_5(%arg0: i32) -> (i32, i32) {
    %c0_i32 = arith.constant 0 : i32
    %c0_i32_0 = arith.constant 0 : i32
    %c0_i32_1 = arith.constant 0 : i32
    return %c0_i32, %c0_i32_0 : i32, i32
  }
  func.func @transform_6(%arg0: i32) -> (i32, i32) {
    %c0_i32 = arith.constant 0 : i32
    %c0_i32_0 = arith.constant 0 : i32
    %c0_i32_1 = arith.constant 0 : i32
    return %c0_i32, %c0_i32_0 : i32, i32
  }
  func.func @transform_7(%arg0: i32) -> (i32, i32, i32, i32) {
    %c0_i32 = arith.constant 0 : i32
    %c0_i32_0 = arith.constant 0 : i32
    %c0_i32_1 = arith.constant 0 : i32
    %c0_i32_2 = arith.constant 0 : i32
    return %arg0, %c0_i32, %c0_i32_0, %c0_i32_1 : i32, i32, i32, i32
  }
}

</mosaic_0001>

<llo_original>
// kernel: tpu_custom_call.1
$region0: #{tpu_custom_call.1}
  #allocation0 [shape = 'u32[]', space=smem, size = 0x4, offset = 0x4, fixed_abs, tag = 'smem constant byte address 0x4 - core index']
  #allocation1 [shape = 'u32[144,128]{1,0:T(1,128)}', space=vmem, size = 0x12000, scoped, tag = 'internal scratch']
  #allocation2 [shape = 'bf16[1,18,18,128]{3,2,1,0:T(8,128)(2,1)}', space=vmem, size = 0x1b000, scoped, tag = 'scratch operand']
  %s0 = inlined_call_operand.hbm [shape: f32[2,16,16,128], index: 0, kind: input, shape index: {}]
  %s1 = inlined_call_operand.hbm [shape: bf16[128,128], index: 1, kind: input, shape index: {}]
  %s2 = inlined_call_operand.vmem [shape: f32[1,128], index: 2, kind: input, shape index: {}]
  %s3 = inlined_call_operand.hbm [shape: bf16[9,128,128], index: 3, kind: input, shape index: {}]
  %s4 = inlined_call_operand.vmem [shape: f32[1,128], index: 4, kind: input, shape index: {}]
  %s5 = inlined_call_operand.hbm [shape: bf16[128,128], index: 5, kind: input, shape index: {}]
  %s6 = inlined_call_operand.vmem [shape: f32[1,128], index: 6, kind: input, shape index: {}]
  %s7 = inlined_call_operand.hbm [shape: bf16[2,16,16,128], index: 7, kind: output, shape index: {}]
  %s8 = sld [smem:[#allocation0]]
  $region77: #{tpu_custom_call.1} parent=0
    _
  %s10 = ssub.s32 1, %s8
  %s11 = scalar_select 0, %s10, %s8
  $region1: #{tpu_custom_call.1} parent=0
    #allocation3 [shape = 'u8[262144]{0}', space=vmem, size = 0x40000, scoped, tag = 'input window, operand 0']
    #allocation4 [shape = 's32[2]{0}', space=sflag, size = 0x8, scoped, tag = 'scoped memory for tpu_custom_call.1']
    #allocation5 [shape = 's32[2]{0}', space=sflag, size = 0x8, scoped, tag = 'scoped memory for tpu_custom_call.1']
    #allocation6 [shape = 'u8[32768]{0}', space=vmem, size = 0x8000, scoped, tag = 'input window, operand 1, single buffered']
    #allocation7 [shape = 's32[1]{0}', space=sflag, size = 0x4, scoped, tag = 'scoped memory for tpu_custom_call.1']
    #allocation8 [shape = 'u8[294912]{0}', space=vmem, size = 0x48000, scoped, tag = 'input window, operand 3, single buffered']
    #allocation9 [shape = 'u8[32768]{0}', space=vmem, size = 0x8000, scoped, tag = 'input window, operand 5, single buffered']
    #allocation10 [shape = 's32[1]{0}', space=sflag, size = 0x4, scoped, tag = 'scoped memory for tpu_custom_call.1']
    #allocation11 [shape = 'u8[131072]{0}', space=vmem, size = 0x20000, scoped, tag = 'output window, operand 0']
    %12 = vsyncpa [#allocation4], 0
    %s13 = scalar_lea.sflag [#allocation4], 1
    %14 = vsyncpa %s13, 0
    %15 = vsyncpa [#allocation7], 0
    %16 = vsyncpa [#allocation10], 0
    %17 = vsyncpa [#allocation5], 0
    %s18 = scalar_lea.sflag [#allocation5], 1
    %19 = vsyncpa %s18, 0
    loop: start=0, step=1, limit=4
    $region2: #{tpu_custom_call.1} parent=1 // loop_pre_header
      _
    $region3: #{tpu_custom_call.1} parent=1 // loop_header
      %s21 = sphi 0, %s25
      %p22 = scmp.ge.s32.totalorder %s21, 4
      %s31 = sphi 0, %s33
      %s34 = sphi 0, %s31
      %s35 = sphi 0, %s34
      %s51 = sphi 0, %s35
      %s55 = sphi 0, %s55
      %s57 = sphi 0, %s55
      %s58 = sphi 0, %s57
      %s72 = sphi 0, %s58
      %s76 = sphi 0, %s76
      %s78 = sphi 0, %s76
      %s79 = sphi 0, %s78
      %s93 = sphi 0, %s79
      %s97 = sphi 0, %s97
      %s99 = sphi 0, %s97
      %s100 = sphi 0, %s99
      %s114 = sphi 0, %s100
      %s118 = sphi 0, %s118
      %s120 = sphi 0, %s118
      %s121 = sphi 0, %s120
      %s135 = sphi 0, %s121
      %s139 = sphi 0, %s139
      %s141 = sphi 0, %s139
      %s142 = sphi 0, %s141
      %s156 = sphi 0, %s142
      %s160 = sphi 0, %s160
      %s162 = sphi 0, %s160
      %s163 = sphi 0, %s162
      %s177 = sphi 0, %s163
      %s183 = sphi 0, %s185
      %s186 = sphi 0, %s183
      %s187 = sphi 0, %s186
      %s203 = sphi 0, %s187
    $region4: #{tpu_custom_call.1} parent=1 // loop_header_branch
      %24 = sbr.rel (%p22) target = $region8
    $region5: #{tpu_custom_call.1} parent=1 // loop_body
      %s26 = ssub.s32 %s21, 1
      %s27 = ssub.s32 %s21, 2
      %s28 = sadd.s32 %s21, 1
      %s29 = ssub.s32 %s21, %s28
      %p30 = scmp.eq.s32.totalorder %s29, 0
      %s32 = sadd.s32 %s31, 1
      %s33 = scalar_select %p30, %s31, %s32
      %p36 = pneg %p30
      %p37 = scmp.eq.s32.totalorder %s21, 1
      %p38 = por %p36, %p37
      %p39 = scmp.ne.s32.totalorder %s31, %s34
      %p40 = scmp.eq.s32.totalorder %s21, 0
      %p41 = por %p39, %p40
      %p42 = scmp.ne.s32.totalorder %s31, %s34
      %p43 = scmp.eq.s32.totalorder %s26, 1
      %p44 = por %p42, %p43
      %p45 = scmp.ne.s32.totalorder %s34, %s35
      %p46 = scmp.eq.s32.totalorder %s26, 0
      %p47 = por %p45, %p46
      %p48 = scmp.ne.s32.totalorder %s34, %s35
      %p49 = scmp.eq.s32.totalorder %s27, 1
      %p50 = por %p48, %p49
      %p52 = scmp.ne.s32.totalorder %s35, %s51
      %p53 = scmp.eq.s32.totalorder %s27, 0
      %p54 = por %p52, %p53
      %s56 = sadd.s32 %s55, 1
      %p59 = scmp.eq.s32.totalorder %s21, 1
      %p60 = scmp.ne.s32.totalorder %s55, %s57
      %p61 = scmp.eq.s32.totalorder %s21, 0
      %p62 = por %p60, %p61
      %p63 = scmp.ne.s32.totalorder %s55, %s57
      %p64 = scmp.eq.s32.totalorder %s26, 1
      %p65 = por %p63, %p64
      %p66 = scmp.ne.s32.totalorder %s57, %s58
      %p67 = scmp.eq.s32.totalorder %s26, 0
      %p68 = por %p66, %p67
      %p69 = scmp.ne.s32.totalorder %s57, %s58
      %p70 = scmp.eq.s32.totalorder %s27, 1
      %p71 = por %p69, %p70
      %p73 = scmp.ne.s32.totalorder %s58, %s72
      %p74 = scmp.eq.s32.totalorder %s27, 0
      %p75 = por %p73, %p74
      %s77 = sadd.s32 %s76, 1
      %p80 = scmp.eq.s32.totalorder %s21, 1
      %p81 = scmp.ne.s32.totalorder %s76, %s78
      %p82 = scmp.eq.s32.totalorder %s21, 0
      %p83 = por %p81, %p82
      %p84 = scmp.ne.s32.totalorder %s76, %s78
      %p85 = scmp.eq.s32.totalorder %s26, 1
      %p86 = por %p84, %p85
      %p87 = scmp.ne.s32.totalorder %s78, %s79
      %p88 = scmp.eq.s32.totalorder %s26, 0
      %p89 = por %p87, %p88
      %p90 = scmp.ne.s32.totalorder %s78, %s79
      %p91 = scmp.eq.s32.totalorder %s27, 1
      %p92 = por %p90, %p91
      %p94 = scmp.ne.s32.totalorder %s79, %s93
      %p95 = scmp.eq.s32.totalorder %s27, 0
      %p96 = por %p94, %p95
      %s98 = sadd.s32 %s97, 1
      %p101 = scmp.eq.s32.totalorder %s21, 1
      %p102 = scmp.ne.s32.totalorder %s97, %s99
      %p103 = scmp.eq.s32.totalorder %s21, 0
      %p104 = por %p102, %p103
      %p105 = scmp.ne.s32.totalorder %s97, %s99
      %p106 = scmp.eq.s32.totalorder %s26, 1
      %p107 = por %p105, %p106
      %p108 = scmp.ne.s32.totalorder %s99, %s100
      %p109 = scmp.eq.s32.totalorder %s26, 0
      %p110 = por %p108, %p109
      %p111 = scmp.ne.s32.totalorder %s99, %s100
      %p112 = scmp.eq.s32.totalorder %s27, 1
      %p113 = por %p111, %p112
      %p115 = scmp.ne.s32.totalorder %s100, %s114
      %p116 = scmp.eq.s32.totalorder %s27, 0
      %p117 = por %p115, %p116
      %s119 = sadd.s32 %s118, 1
      %p122 = scmp.eq.s32.totalorder %s21, 1
      %p123 = scmp.ne.s32.totalorder %s118, %s120
      %p124 = scmp.eq.s32.totalorder %s21, 0
      %p125 = por %p123, %p124
      %p126 = scmp.ne.s32.totalorder %s118, %s120
      %p127 = scmp.eq.s32.totalorder %s26, 1
      %p128 = por %p126, %p127
      %p129 = scmp.ne.s32.totalorder %s120, %s121
      %p130 = scmp.eq.s32.totalorder %s26, 0
      %p131 = por %p129, %p130
      %p132 = scmp.ne.s32.totalorder %s120, %s121
      %p133 = scmp.eq.s32.totalorder %s27, 1
      %p134 = por %p132, %p133
      %p136 = scmp.ne.s32.totalorder %s121, %s135
      %p137 = scmp.eq.s32.totalorder %s27, 0
      %p138 = por %p136, %p137
      %s140 = sadd.s32 %s139, 1
      %p143 = scmp.eq.s32.totalorder %s21, 1
      %p144 = scmp.ne.s32.totalorder %s139, %s141
      %p145 = scmp.eq.s32.totalorder %s21, 0
      %p146 = por %p144, %p145
      %p147 = scmp.ne.s32.totalorder %s139, %s141
      %p148 = scmp.eq.s32.totalorder %s26, 1
      %p149 = por %p147, %p148
      %p150 = scmp.ne.s32.totalorder %s141, %s142
      %p151 = scmp.eq.s32.totalorder %s26, 0
      %p152 = por %p150, %p151
      %p153 = scmp.ne.s32.totalorder %s141, %s142
      %p154 = scmp.eq.s32.totalorder %s27, 1
      %p155 = por %p153, %p154
      %p157 = scmp.ne.s32.totalorder %s142, %s156
      %p158 = scmp.eq.s32.totalorder %s27, 0
      %p159 = por %p157, %p158
      %s161 = sadd.s32 %s160, 1
      %p164 = scmp.eq.s32.totalorder %s21, 1
      %p165 = scmp.ne.s32.totalorder %s160, %s162
      %p166 = scmp.eq.s32.totalorder %s21, 0
      %p167 = por %p165, %p166
      %p168 = scmp.ne.s32.totalorder %s160, %s162
      %p169 = scmp.eq.s32.totalorder %s26, 1
      %p170 = por %p168, %p169
      %p171 = scmp.ne.s32.totalorder %s162, %s163
      %p172 = scmp.eq.s32.totalorder %s26, 0
      %p173 = por %p171, %p172
      %p174 = scmp.ne.s32.totalorder %s162, %s163
      %p175 = scmp.eq.s32.totalorder %s27, 1
      %p176 = por %p174, %p175
      %p178 = scmp.ne.s32.totalorder %s163, %s177
      %p179 = scmp.eq.s32.totalorder %s27, 0
      %p180 = por %p178, %p179
      %s181 = ssub.s32 %s21, %s28
      %p182 = scmp.eq.s32.totalorder %s181, 0
      %s184 = sadd.s32 %s183, 1
      %s185 = scalar_select %p182, %s183, %s184
      %p188 = pneg %p182
      %p189 = scmp.eq.s32.totalorder %s21, 1
      %p190 = por %p188, %p189
      %p191 = scmp.ne.s32.totalorder %s183, %s186
      %p192 = scmp.eq.s32.totalorder %s21, 0
      %p193 = por %p191, %p192
      %p194 = scmp.ne.s32.totalorder %s183, %s186
      %p195 = scmp.eq.s32.totalorder %s26, 1
      %p196 = por %p194, %p195
      %p197 = scmp.ne.s32.totalorder %s186, %s187
      %p198 = scmp.eq.s32.totalorder %s26, 0
      %p199 = por %p197, %p198
      %p200 = scmp.ne.s32.totalorder %s186, %s187
      %p201 = scmp.eq.s32.totalorder %s27, 1
      %p202 = por %p200, %p201
      %p204 = scmp.ne.s32.totalorder %s187, %s203
      %p205 = scmp.eq.s32.totalorder %s27, 0
      %p206 = por %p204, %p205
      %p207 = scmp.le.s32.totalorder 1, %s21
      %p208 = scmp.lt.s32.totalorder %s21, 3
      %p209 = pnand %p207, %p208
      %p210 = pneg %p209
      // Predicated region
      $region9: #{tpu_custom_call.1} parent=5 // pred_check
        _
      $region10: #{tpu_custom_call.1} parent=5 // pred_check_branch
        %212 = sbr.rel (%p209) target = $region12
      $region11: #{tpu_custom_call.1} parent=5 // pred_region
        %s213 = ssub.s32 %s21, 1
        // Predicated region
        $region13: #{tpu_custom_call.1} parent=11 // pred_check
          %p214 = pneg %p68
        $region14: #{tpu_custom_call.1} parent=11 // pred_check_branch
          %216 = sbr.rel (%p214) target = $region16
        $region15: #{tpu_custom_call.1} parent=11 // pred_region
          %s218 = ssub.s32 1024, 1024
          %219 = vsyncadd [#allocation7], %s218
          %s220 = sshll.u32 [#allocation6], 4
          %s221 = int_to_ptr.vmem [resolvable:$true] %s220
          %226 = dma.hbm_to_vmem [thread:$0]  %s1, 1024, %s221, [#allocation7], 64, 64, 4
        $region16: #{tpu_custom_call.1} parent=11 // pred_fallthru
          _
        // Predicated region
        $region17: #{tpu_custom_call.1} parent=11 // pred_check
          %p227 = pneg %p89
        $region18: #{tpu_custom_call.1} parent=11 // pred_check_branch
          %229 = sbr.rel (%p227) target = $region20
        $region19: #{tpu_custom_call.1} parent=11 // pred_region
          _
        $region20: #{tpu_custom_call.1} parent=11 // pred_fallthru
          _
        // Predicated region
        $region21: #{tpu_custom_call.1} parent=11 // pred_check
          %p230 = pneg %p110
        $region22: #{tpu_custom_call.1} parent=11 // pred_check_branch
          %232 = sbr.rel (%p230) target = $region24
        $region23: #{tpu_custom_call.1} parent=11 // pred_region
          %s234 = ssub.s32 9216, 9216
          %235 = vsyncadd [#allocation7], %s234
          %s236 = sshll.u32 [#allocation8], 4
          %s237 = int_to_ptr.vmem [resolvable:$true] %s236
          %242 = dma.hbm_to_vmem [thread:$0]  %s3, 9216, %s237, [#allocation7], 64, 64, 4
        $region24: #{tpu_custom_call.1} parent=11 // pred_fallthru
          _
        // Predicated region
        $region25: #{tpu_custom_call.1} parent=11 // pred_check
          %p243 = pneg %p131
        $region26: #{tpu_custom_call.1} parent=11 // pred_check_branch
          %245 = sbr.rel (%p243) target = $region28
        $region27: #{tpu_custom_call.1} parent=11 // pred_region
          _
        $region28: #{tpu_custom_call.1} parent=11 // pred_fallthru
          _
        // Predicated region
        $region29: #{tpu_custom_call.1} parent=11 // pred_check
          %p246 = pneg %p152
        $region30: #{tpu_custom_call.1} parent=11 // pred_check_branch
          %248 = sbr.rel (%p246) target = $region32
        $region31: #{tpu_custom_call.1} parent=11 // pred_region
          %s250 = ssub.s32 1024, 1024
          %251 = vsyncadd [#allocation10], %s250
          %s252 = sshll.u32 [#allocation9], 4
          %s253 = int_to_ptr.vmem [resolvable:$true] %s252
          %258 = dma.hbm_to_vmem [thread:$0]  %s5, 1024, %s253, [#allocation10], 64, 64, 4
        $region32: #{tpu_custom_call.1} parent=11 // pred_fallthru
          _
        // Predicated region
        $region33: #{tpu_custom_call.1} parent=11 // pred_check
          %p259 = pneg %p173
        $region34: #{tpu_custom_call.1} parent=11 // pred_check_branch
          %261 = sbr.rel (%p259) target = $region36
        $region35: #{tpu_custom_call.1} parent=11 // pred_region
          _
        $region36: #{tpu_custom_call.1} parent=11 // pred_fallthru
          _
      $region12: #{tpu_custom_call.1} parent=5 // pred_fallthru
        _
      %p262 = scmp.lt.s32.totalorder %s21, 2
      // Predicated region
      $region37: #{tpu_custom_call.1} parent=5 // pred_check
        %p263 = pneg %p262
      $region38: #{tpu_custom_call.1} parent=5 // pred_check_branch
        %265 = sbr.rel (%p263) target = $region40
      $region39: #{tpu_custom_call.1} parent=5 // pred_region
        // Predicated region
        $region41: #{tpu_custom_call.1} parent=39 // pred_check
          %p266 = pneg %p41
        $region42: #{tpu_custom_call.1} parent=39 // pred_check_branch
          %268 = sbr.rel (%p266) target = $region44
        $region43: #{tpu_custom_call.1} parent=39 // pred_region
          %s269 = sand.u32 %s31, 1
          %s270 = scalar_lea.sflag [#allocation4], %s269
          %s271 = sand.u32 %s31, 1
          %s272 = smul.addr %s271, 256
          %s273 = scalar_lea.vmem [#allocation3], %s272
          %s275 = ssub.s32 4096, 4096
          %276 = vsyncadd %s270, %s275
          %s277 = smul.addr %s21, 32
          %s278 = smul.addr %s277, 128
          %s279 = scalar_lea.hbm %s0, %s278
          %s280 = sshll.u32 %s273, 4
          %s281 = int_to_ptr.vmem [resolvable:$true] %s280
          %286 = dma.hbm_to_vmem [thread:$0]  %s279, 4096, %s281, %s270, 128, 128, 8
        $region44: #{tpu_custom_call.1} parent=39 // pred_fallthru
          _
      $region40: #{tpu_custom_call.1} parent=5 // pred_fallthru
        _
      %p287 = scmp.le.s32.totalorder 1, %s21
      %p288 = scmp.lt.s32.totalorder %s21, 3
      %p289 = pnand %p287, %p288
      %p290 = pneg %p289
      // Predicated region
      $region45: #{tpu_custom_call.1} parent=5 // pred_check
        _
      $region46: #{tpu_custom_call.1} parent=5 // pred_check_branch
        %292 = sbr.rel (%p289) target = $region48
      $region47: #{tpu_custom_call.1} parent=5 // pred_region
        %s293 = ssub.s32 %s21, 1
        %s294 = sand.u32 %s34, 1
        %s295 = scalar_lea.sflag [#allocation4], %s294
        %s296 = sand.u32 %s34, 1
        %s297 = smul.addr %s296, 256
        %s298 = scalar_lea.vmem [#allocation3], %s297
        // Predicated region
        $region49: #{tpu_custom_call.1} parent=47 // pred_check
          %p299 = pneg %p47
        $region50: #{tpu_custom_call.1} parent=47 // pred_check_branch
          %301 = sbr.rel (%p299) target = $region52
        $region51: #{tpu_custom_call.1} parent=47 // pred_region
          %302 = dma.done %s295, 4096
        $region52: #{tpu_custom_call.1} parent=47 // pred_fallthru
          _
        // Predicated region
        $region53: #{tpu_custom_call.1} parent=47 // pred_check
          %p303 = pneg %p68
        $region54: #{tpu_custom_call.1} parent=47 // pred_check_branch
          %305 = sbr.rel (%p303) target = $region56
        $region55: #{tpu_custom_call.1} parent=47 // pred_region
          %306 = dma.done [#allocation7], 1024
        $region56: #{tpu_custom_call.1} parent=47 // pred_fallthru
          _
        // Predicated region
        $region57: #{tpu_custom_call.1} parent=47 // pred_check
          %p307 = pneg %p110
        $region58: #{tpu_custom_call.1} parent=47 // pred_check_branch
          %309 = sbr.rel (%p307) target = $region60
        $region59: #{tpu_custom_call.1} parent=47 // pred_region
          %310 = dma.done [#allocation7], 9216
        $region60: #{tpu_custom_call.1} parent=47 // pred_fallthru
          _
        // Predicated region
        $region61: #{tpu_custom_call.1} parent=47 // pred_check
          %p311 = pneg %p152
        $region62: #{tpu_custom_call.1} parent=47 // pred_check_branch
          %313 = sbr.rel (%p311) target = $region64
        $region63: #{tpu_custom_call.1} parent=47 // pred_region
          %314 = dma.done [#allocation10], 1024
        $region64: #{tpu_custom_call.1} parent=47 // pred_fallthru
          _
        %s315 = sand.u32 %s34, 1
        %s316 = scalar_lea.sflag [#allocation4], %s315
        %s317 = sand.u32 %s34, 1
        %s318 = smul.addr %s317, 256
        %s319 = scalar_lea.vmem [#allocation3], %s318
        %p320 = pneg %p47
        %p321 = pneg %p44
        %p322 = pneg %p68
        %p323 = pneg %p65
        %p324 = pneg %p89
        %p325 = pneg %p86
        %p326 = pneg %p110
        %p327 = pneg %p107
        %p328 = pneg %p131
        %p329 = pneg %p128
        %p330 = pneg %p152
        %p331 = pneg %p149
        %p332 = pneg %p173
        %p333 = pneg %p170
        %p334 = pneg %p199
        %p335 = pneg %p196
        %s336 = sand.u32 %s186, 1
        %s337 = scalar_lea.sflag [#allocation5], %s336
        %s338 = sand.u32 %s186, 1
        %s339 = smul.addr %s338, 128
        %s340 = scalar_lea.vmem [#allocation11], %s339
        %342 = vst [vmem:[#allocation2] sm:$0xf] 0
        %343 = vst [vmem:[#allocation2 + $0x4] sm:$0xf] 0
        %344 = vst [vmem:[#allocation2 + $0x8] sm:$0x1] 0
        %345 = vst [vmem:[#allocation2 + $0xc] sm:$0xf] 0
        %346 = vst [vmem:[#allocation2 + $0x10] sm:$0xf] 0
        %347 = vst [vmem:[#allocation2 + $0x14] sm:$0x1] 0
        %348 = vst [vmem:[#allocation2 + $0x18] sm:$0xf] 0
        %349 = vst [vmem:[#allocation2 + $0x1c] sm:$0xf] 0
        %350 = vst [vmem:[#allocation2 + $0x20] sm:$0x1] 0
        %351 = vst [vmem:[#allocation2 + $0x24] sm:$0xf] 0
        %352 = vst [vmem:[#allocation2 + $0x28] sm:$0xf] 0
        %353 = vst [vmem:[#allocation2 + $0x2c] sm:$0x1] 0
        %354 = vst [vmem:[#allocation2 + $0x30] sm:$0xf] 0
        %355 = vst [vmem:[#allocation2 + $0x34] sm:$0xf] 0
        %356 = vst [vmem:[#allocation2 + $0x38] sm:$0x1] 0
        %357 = vst [vmem:[#allocation2 + $0x3c] sm:$0xf] 0
        %358 = vst [vmem:[#allocation2 + $0x40] sm:$0xf] 0
        %359 = vst [vmem:[#allocation2 + $0x44] sm:$0x1] 0
        %360 = vst [vmem:[#allocation2 + $0x48] sm:$0xf] 0
        %361 = vst [vmem:[#allocation2 + $0x4c] sm:$0xf] 0
        %362 = vst [vmem:[#allocation2 + $0x50] sm:$0x1] 0
        %363 = vst [vmem:[#allocation2 + $0x54] sm:$0xf] 0
        %364 = vst [vmem:[#allocation2 + $0x58] sm:$0xf] 0
        %365 = vst [vmem:[#allocation2 + $0x5c] sm:$0x1] 0
        %366 = vst [vmem:[#allocation2 + $0x60] sm:$0xf] 0
        %367 = vst [vmem:[#allocation2 + $0x64] sm:$0xf] 0
        %368 = vst [vmem:[#allocation2 + $0x68] sm:$0x1] 0
        %369 = vst [vmem:[#allocation2 + $0x6c] sm:$0xf] 0
        %370 = vst [vmem:[#allocation2 + $0x70] sm:$0xf] 0
        %371 = vst [vmem:[#allocation2 + $0x74] sm:$0x1] 0
        %372 = vst [vmem:[#allocation2 + $0x78] sm:$0xf] 0
        %373 = vst [vmem:[#allocation2 + $0x7c] sm:$0xf] 0
        %374 = vst [vmem:[#allocation2 + $0x80] sm:$0x1] 0
        %375 = vst [vmem:[#allocation2 + $0x84] sm:$0xf] 0
        %376 = vst [vmem:[#allocation2 + $0x88] sm:$0xf] 0
        %377 = vst [vmem:[#allocation2 + $0x8c] sm:$0x1] 0
        %378 = vst [vmem:[#allocation2 + $0x90] sm:$0xf] 0
        %379 = vst [vmem:[#allocation2 + $0x94] sm:$0xf] 0
        %380 = vst [vmem:[#allocation2 + $0x98] sm:$0x1] 0
        %381 = vst [vmem:[#allocation2 + $0x9c] sm:$0xf] 0
        %382 = vst [vmem:[#allocation2 + $0xa0] sm:$0xf] 0
        %383 = vst [vmem:[#allocation2 + $0xa4] sm:$0x1] 0
        %384 = vst [vmem:[#allocation2 + $0xa8] sm:$0xf] 0
        %385 = vst [vmem:[#allocation2 + $0xac] sm:$0xf] 0
        %386 = vst [vmem:[#allocation2 + $0xb0] sm:$0x1] 0
        %387 = vst [vmem:[#allocation2 + $0xb4] sm:$0xf] 0
        %388 = vst [vmem:[#allocation2 + $0xb8] sm:$0xf] 0
        %389 = vst [vmem:[#allocation2 + $0xbc] sm:$0x1] 0
        %390 = vst [vmem:[#allocation2 + $0xc0] sm:$0xf] 0
        %391 = vst [vmem:[#allocation2 + $0xc4] sm:$0xf] 0
        %392 = vst [vmem:[#allocation2 + $0xc8] sm:$0x1] 0
        %393 = vst [vmem:[#allocation2 + $0xcc] sm:$0xf] 0
        %394 = vst [vmem:[#allocation2 + $0xd0] sm:$0xf] 0
        %395 = vst [vmem:[#allocation2 + $0xd4] sm:$0x1] 0
        %v396 = vld [vmem:[%s298] sm:$0xff]
        %v397 = vld [vmem:[%s298 + $0x8] sm:$0xff]
        %v398 = vld [vmem:[%s298 + $0x10] sm:$0xff]
        %v399 = vld [vmem:[%s298 + $0x18] sm:$0xff]
        %v400 = vld [vmem:[%s298 + $0x20] sm:$0xff]
        %v401 = vld [vmem:[%s298 + $0x28] sm:$0xff]
        %v402 = vld [vmem:[%s298 + $0x30] sm:$0xff]
        %v403 = vld [vmem:[%s298 + $0x38] sm:$0xff]
        %v404 = vld [vmem:[%s298 + $0x40] sm:$0xff]
        %v405 = vld [vmem:[%s298 + $0x48] sm:$0xff]
        %v406 = vld [vmem:[%s298 + $0x50] sm:$0xff]
        %v407 = vld [vmem:[%s298 + $0x58] sm:$0xff]
        %v408 = vld [vmem:[%s298 + $0x60] sm:$0xff]
        %v409 = vld [vmem:[%s298 + $0x68] sm:$0xff]
        %v410 = vld [vmem:[%s298 + $0x70] sm:$0xff]
        %v411 = vld [vmem:[%s298 + $0x78] sm:$0xff]
        %v412 = vld [vmem:[%s298 + $0x80] sm:$0xff]
        %v413 = vld [vmem:[%s298 + $0x88] sm:$0xff]
        %v414 = vld [vmem:[%s298 + $0x90] sm:$0xff]
        %v415 = vld [vmem:[%s298 + $0x98] sm:$0xff]
        %v416 = vld [vmem:[%s298 + $0xa0] sm:$0xff]
        %v417 = vld [vmem:[%s298 + $0xa8] sm:$0xff]
        %v418 = vld [vmem:[%s298 + $0xb0] sm:$0xff]
        %v419 = vld [vmem:[%s298 + $0xb8] sm:$0xff]
        %v420 = vld [vmem:[%s298 + $0xc0] sm:$0xff]
        %v421 = vld [vmem:[%s298 + $0xc8] sm:$0xff]
        %v422 = vld [vmem:[%s298 + $0xd0] sm:$0xff]
        %v423 = vld [vmem:[%s298 + $0xd8] sm:$0xff]
        %v424 = vld [vmem:[%s298 + $0xe0] sm:$0xff]
        %v425 = vld [vmem:[%s298 + $0xe8] sm:$0xff]
        %v426 = vld [vmem:[%s298 + $0xf0] sm:$0xff]
        %v427 = vld [vmem:[%s298 + $0xf8] sm:$0xff]
        %v428 = vpack.c.bf16 %v397, %v396
        %v429 = vpack.c.bf16 %v399, %v398
        %v430 = vpack.c.bf16 %v401, %v400
        %v431 = vpack.c.bf16 %v403, %v402
        %v432 = vpack.c.bf16 %v405, %v404
        %v433 = vpack.c.bf16 %v407, %v406
        %v434 = vpack.c.bf16 %v409, %v408
        %v435 = vpack.c.bf16 %v411, %v410
        %v436 = vpack.c.bf16 %v413, %v412
        %v437 = vpack.c.bf16 %v415, %v414
        %v438 = vpack.c.bf16 %v417, %v416
        %v439 = vpack.c.bf16 %v419, %v418
        %v440 = vpack.c.bf16 %v421, %v420
        %v441 = vpack.c.bf16 %v423, %v422
        %v442 = vpack.c.bf16 %v425, %v424
        %v443 = vpack.c.bf16 %v427, %v426
        %v444 = vld [vmem:[#allocation6] sm:$0xf]
        %v445 = vld [vmem:[#allocation6 + $0x4] sm:$0xf]
        %v446 = vld [vmem:[#allocation6 + $0x8] sm:$0xf]
        %v447 = vld [vmem:[#allocation6 + $0xc] sm:$0xf]
        %v448 = vld [vmem:[#allocation6 + $0x10] sm:$0xf]
        %v449 = vld [vmem:[#allocation6 + $0x14] sm:$0xf]
        %v450 = vld [vmem:[#allocation6 + $0x18] sm:$0xf]
        %v451 = vld [vmem:[#allocation6 + $0x1c] sm:$0xf]
        %v452 = vld [vmem:[#allocation6 + $0x20] sm:$0xf]
        %v453 = vld [vmem:[#allocation6 + $0x24] sm:$0xf]
        %v454 = vld [vmem:[#allocation6 + $0x28] sm:$0xf]
        %v455 = vld [vmem:[#allocation6 + $0x2c] sm:$0xf]
        %v456 = vld [vmem:[#allocation6 + $0x30] sm:$0xf]
        %v457 = vld [vmem:[#allocation6 + $0x34] sm:$0xf]
        %v458 = vld [vmem:[#allocation6 + $0x38] sm:$0xf]
        %v459 = vld [vmem:[#allocation6 + $0x3c] sm:$0xf]
        %v460 = vld [vmem:[%s2] sm:$0x1]
        %v462 = vlaneseq
        %v463 = vshrl.u32 %v462, 7
        %v464 = vsub.s32 0, %v463
        %v465 = vrot.slane %v460, %v464
        %v483 = vunpack.c.l.b16 %v444
        %v484 = vunpack.c.l.b16 %v445
        %v485 = vunpack.c.l.b16 %v446
        %v486 = vunpack.c.l.b16 %v447
        %v487 = vunpack.c.l.b16 %v448
        %v488 = vunpack.c.l.b16 %v449
        %v489 = vunpack.c.l.b16 %v450
        %v490 = vunpack.c.l.b16 %v451
        %v491 = vunpack.c.l.b16 %v452
        %v492 = vunpack.c.l.b16 %v453
        %v493 = vunpack.c.l.b16 %v454
        %v494 = vunpack.c.l.b16 %v455
        %v495 = vunpack.c.l.b16 %v456
        %v496 = vunpack.c.l.b16 %v457
        %v497 = vunpack.c.l.b16 %v458
        %v498 = vunpack.c.l.b16 %v459
        %v499 = vpack.c.b16 %v484, %v483
        %v500 = vpack.c.b16 %v486, %v485
        %v501 = vpack.c.b16 %v488, %v487
        %v502 = vpack.c.b16 %v490, %v489
        %v503 = vpack.c.b16 %v492, %v491
        %v504 = vpack.c.b16 %v494, %v493
        %v505 = vpack.c.b16 %v496, %v495
        %v506 = vpack.c.b16 %v498, %v497
        %515 = vmatprep.subr.bf16.mxu0 0
        %516 = vmatpush1.bf16.msra.mxu0 %v499
        %517 = vmatprep.subr.bf16.mxu0 0
        %518 = vmatpush1.bf16.msra.mxu0 %v500
        %519 = vmatprep.subr.bf16.mxu0 0
        %520 = vmatpush1.bf16.msra.mxu0 %v501
        %521 = vmatprep.subr.bf16.mxu0 0
        %522 = vmatpush1.bf16.msra.mxu0 %v502
        %523 = vmatprep.subr.bf16.mxu0 0
        %524 = vmatpush1.bf16.msra.mxu0 %v503
        %525 = vmatprep.subr.bf16.mxu0 0
        %526 = vmatpush1.bf16.msra.mxu0 %v504
        %527 = vmatprep.subr.bf16.mxu0 0
        %528 = vmatpush1.bf16.msra.mxu0 %v505
        %529 = vmatprep.subr.bf16.mxu0 0
        %530 = vmatpush1.bf16.msra.mxu0 %v506
        %531 = vmatprep.subr.bf16.mxu0 0
        %532 = vmatpush1.bf16.msra.mxu0 0
        %533 = vmatprep.subr.bf16.mxu0 0
        %534 = vmatpush1.bf16.msra.mxu0 0
        %535 = vmatprep.subr.bf16.mxu0 0
        %536 = vmatpush1.bf16.msra.mxu0 0
        %537 = vmatprep.subr.bf16.mxu0 0
        %538 = vmatpush1.bf16.msra.mxu0 0
        %539 = vmatprep.subr.bf16.mxu0 0
        %540 = vmatpush1.bf16.msra.mxu0 0
        %541 = vmatprep.subr.bf16.mxu0 0
        %542 = vmatpush1.bf16.msra.mxu0 0
        %543 = vmatprep.subr.bf16.mxu0 0
        %544 = vmatpush1.bf16.msra.mxu0 0
        %545 = vmatprep.subr.bf16.mxu0 0
        %546 = vmatpush1.bf16.msra.mxu0 0
        %547 = vmatprep.mubr.bf16.mxu0 0
        %548 = vmatmul.mubr.bf16.gmra.mrb[0].mxu0 %v428
        %v549 = vpop.f32.mrb[0].mxu0
        %v550 = vadd.f32 %v465, %v549
        %v551 = vpop.f32.mrb[0].mxu0
        %v552 = vpop.f32.mrb[0].mxu0
        %v553 = vadd.f32 %v465, %v552
        %v554 = vpop.f32.mrb[0].mxu0
        %555 = vmatprep.mubr.bf16.mxu0 0
        %556 = vmatmul.mubr.bf16.gmra.mrb[0].mxu0 %v429
        %v557 = vpop.f32.mrb[0].mxu0
        %v558 = vadd.f32 %v465, %v557
        %v559 = vpop.f32.mrb[0].mxu0
        %v560 = vpop.f32.mrb[0].mxu0
        %v561 = vadd.f32 %v465, %v560
        %v562 = vpop.f32.mrb[0].mxu0
        %563 = vmatprep.mubr.bf16.mxu0 0
        %564 = vmatmul.mubr.bf16.gmra.mrb[0].mxu0 %v430
        %v565 = vpop.f32.mrb[0].mxu0
        %v566 = vadd.f32 %v465, %v565
        %v567 = vpop.f32.mrb[0].mxu0
        %v568 = vpop.f32.mrb[0].mxu0
        %v569 = vadd.f32 %v465, %v568
        %v570 = vpop.f32.mrb[0].mxu0
        %571 = vmatprep.mubr.bf16.mxu0 0
        %572 = vmatmul.mubr.bf16.gmra.mrb[0].mxu0 %v431
        %v573 = vpop.f32.mrb[0].mxu0
        %v574 = vadd.f32 %v465, %v573
        %v575 = vpop.f32.mrb[0].mxu0
        %v576 = vpop.f32.mrb[0].mxu0
        %v577 = vadd.f32 %v465, %v576
        %v578 = vpop.f32.mrb[0].mxu0
        %579 = vmatprep.mubr.bf16.mxu0 0
        %580 = vmatmul.mubr.bf16.gmra.mrb[0].mxu0 %v432
        %v581 = vpop.f32.mrb[0].mxu0
        %v582 = vadd.f32 %v465, %v581
        %v583 = vpop.f32.mrb[0].mxu0
        %v584 = vpop.f32.mrb[0].mxu0
        %v585 = vadd.f32 %v465, %v584
        %v586 = vpop.f32.mrb[0].mxu0
        %587 = vmatprep.mubr.bf16.mxu0 0
        %588 = vmatmul.mubr.bf16.gmra.mrb[0].mxu0 %v433
        %v589 = vpop.f32.mrb[0].mxu0
        %v590 = vadd.f32 %v465, %v589
        %v591 = vpop.f32.mrb[0].mxu0
        %v592 = vpop.f32.mrb[0].mxu0
        %v593 = vadd.f32 %v465, %v592
        %v594 = vpop.f32.mrb[0].mxu0
        %595 = vmatprep.mubr.bf16.mxu0 0
        %596 = vmatmul.mubr.bf16.gmra.mrb[0].mxu0 %v434
        %v597 = vpop.f32.mrb[0].mxu0
        %v598 = vadd.f32 %v465, %v597
        %v599 = vpop.f32.mrb[0].mxu0
        %v600 = vpop.f32.mrb[0].mxu0
        %v601 = vadd.f32 %v465, %v600
        %v602 = vpop.f32.mrb[0].mxu0
        %603 = vmatprep.mubr.bf16.mxu0 0
        %604 = vmatmul.mubr.bf16.gmra.mrb[0].mxu0 %v435
        %v605 = vpop.f32.mrb[0].mxu0
        %v606 = vadd.f32 %v465, %v605
        %v607 = vpop.f32.mrb[0].mxu0
        %v608 = vpop.f32.mrb[0].mxu0
        %v609 = vadd.f32 %v465, %v608
        %v610 = vpop.f32.mrb[0].mxu0
        %611 = vmatprep.mubr.bf16.mxu0 0
        %612 = vmatmul.mubr.bf16.gmra.mrb[0].mxu0 %v436
        %v613 = vpop.f32.mrb[0].mxu0
        %v614 = vadd.f32 %v465, %v613
        %v615 = vpop.f32.mrb[0].mxu0
        %v616 = vpop.f32.mrb[0].mxu0
        %v617 = vadd.f32 %v465, %v616
        %v618 = vpop.f32.mrb[0].mxu0
        %619 = vmatprep.mubr.bf16.mxu0 0
        %620 = vmatmul.mubr.bf16.gmra.mrb[0].mxu0 %v437
        %v621 = vpop.f32.mrb[0].mxu0
        %v622 = vadd.f32 %v465, %v621
        %v623 = vpop.f32.mrb[0].mxu0
        %v624 = vpop.f32.mrb[0].mxu0
        %v625 = vadd.f32 %v465, %v624
        %v626 = vpop.f32.mrb[0].mxu0
        %627 = vmatprep.mubr.bf16.mxu0 0
        %628 = vmatmul.mubr.bf16.gmra.mrb[0].mxu0 %v438
        %v629 = vpop.f32.mrb[0].mxu0
        %v630 = vadd.f32 %v465, %v629
        %v631 = vpop.f32.mrb[0].mxu0
        %v632 = vpop.f32.mrb[0].mxu0
        %v633 = vadd.f32 %v465, %v632
        %v634 = vpop.f32.mrb[0].mxu0
        %635 = vmatprep.mubr.bf16.mxu0 0
        %636 = vmatmul.mubr.bf16.gmra.mrb[0].mxu0 %v439
        %v637 = vpop.f32.mrb[0].mxu0
        %v638 = vadd.f32 %v465, %v637
        %v639 = vpop.f32.mrb[0].mxu0
        %v640 = vpop.f32.mrb[0].mxu0
        %v641 = vadd.f32 %v465, %v640
        %v642 = vpop.f32.mrb[0].mxu0
        %643 = vmatprep.mubr.bf16.mxu0 0
        %644 = vmatmul.mubr.bf16.gmra.mrb[0].mxu0 %v440
        %v645 = vpop.f32.mrb[0].mxu0
        %v646 = vadd.f32 %v465, %v645
        %v647 = vpop.f32.mrb[0].mxu0
        %v648 = vpop.f32.mrb[0].mxu0
        %v649 = vadd.f32 %v465, %v648
        %v650 = vpop.f32.mrb[0].mxu0
        %651 = vmatprep.mubr.bf16.mxu0 0
        %652 = vmatmul.mubr.bf16.gmra.mrb[0].mxu0 %v441
        %v653 = vpop.f32.mrb[0].mxu0
        %v654 = vadd.f32 %v465, %v653
        %v655 = vpop.f32.mrb[0].mxu0
        %v656 = vpop.f32.mrb[0].mxu0
        %v657 = vadd.f32 %v465, %v656
        %v658 = vpop.f32.mrb[0].mxu0
        %659 = vmatprep.mubr.bf16.mxu0 0
        %660 = vmatmul.mubr.bf16.gmra.mrb[0].mxu0 %v442
        %v661 = vpop.f32.mrb[0].mxu0
        %v662 = vadd.f32 %v465, %v661
        %v663 = vpop.f32.mrb[0].mxu0
        %v664 = vpop.f32.mrb[0].mxu0
        %v665 = vadd.f32 %v465, %v664
        %v666 = vpop.f32.mrb[0].mxu0
        %667 = vmatprep.mubr.bf16.mxu0 0
        %668 = vmatmul.mubr.bf16.gmra.mrb[0].mxu0 %v443
        %v669 = vpop.f32.mrb[0].mxu0
        %v670 = vadd.f32 %v465, %v669
        %v671 = vpop.f32.mrb[0].mxu0
        %v672 = vpop.f32.mrb[0].mxu0
        %v673 = vadd.f32 %v465, %v672
        %v674 = vpop.f32.mrb[0].mxu0
        %675 = vdwg.mxu0
        %v676 = vmax.f32 %v550, 0.0
        %v677 = vmax.f32 %v553, 0.0
        %v678 = vmax.f32 %v558, 0.0
        %v679 = vmax.f32 %v561, 0.0
        %v680 = vmax.f32 %v566, 0.0
        %v681 = vmax.f32 %v569, 0.0
        %v682 = vmax.f32 %v574, 0.0
        %v683 = vmax.f32 %v577, 0.0
        %v684 = vmax.f32 %v582, 0.0
        %v685 = vmax.f32 %v585, 0.0
        %v686 = vmax.f32 %v590, 0.0
        %v687 = vmax.f32 %v593, 0.0
        %v688 = vmax.f32 %v598, 0.0
        %v689 = vmax.f32 %v601, 0.0
        %v690 = vmax.f32 %v606, 0.0
        %v691 = vmax.f32 %v609, 0.0
        %v692 = vmax.f32 %v614, 0.0
        %v693 = vmax.f32 %v617, 0.0
        %v694 = vmax.f32 %v622, 0.0
        %v695 = vmax.f32 %v625, 0.0
        %v696 = vmax.f32 %v630, 0.0
        %v697 = vmax.f32 %v633, 0.0
        %v698 = vmax.f32 %v638, 0.0
        %v699 = vmax.f32 %v641, 0.0
        %v700 = vmax.f32 %v646, 0.0
        %v701 = vmax.f32 %v649, 0.0
        %v702 = vmax.f32 %v654, 0.0
        %v703 = vmax.f32 %v657, 0.0
        %v704 = vmax.f32 %v662, 0.0
        %v705 = vmax.f32 %v665, 0.0
        %v706 = vmax.f32 %v670, 0.0
        %v707 = vmax.f32 %v673, 0.0
        %v708 = vpack.c.bf16 %v677, %v676
        %v709 = vpack.c.bf16 %v679, %v678
        %v710 = vpack.c.bf16 %v681, %v680
        %v711 = vpack.c.bf16 %v683, %v682
        %v712 = vpack.c.bf16 %v685, %v684
        %v713 = vpack.c.bf16 %v687, %v686
        %v714 = vpack.c.bf16 %v689, %v688
        %v715 = vpack.c.bf16 %v691, %v690
        %v716 = vpack.c.bf16 %v693, %v692
        %v717 = vpack.c.bf16 %v695, %v694
        %v718 = vpack.c.bf16 %v697, %v696
        %v719 = vpack.c.bf16 %v699, %v698
        %v720 = vpack.c.bf16 %v701, %v700
        %v721 = vpack.c.bf16 %v703, %v702
        %v722 = vpack.c.bf16 %v705, %v704
        %v723 = vpack.c.bf16 %v707, %v706
        %v740 = vunpack.c.l.b16 %v708
        %v741 = vunpack.c.h.b16 %v708
        %v742 = vunpack.c.l.b16 %v709
        %v743 = vunpack.c.h.b16 %v709
        %v744 = vunpack.c.l.b16 %v710
        %v745 = vunpack.c.h.b16 %v710
        %v746 = vunpack.c.l.b16 %v711
        %v747 = vunpack.c.h.b16 %v711
        %v748 = vunpack.c.l.b16 %v712
        %v749 = vunpack.c.h.b16 %v712
        %v750 = vunpack.c.l.b16 %v713
        %v751 = vunpack.c.h.b16 %v713
        %v752 = vunpack.c.l.b16 %v714
        %v753 = vunpack.c.h.b16 %v714
        %v754 = vunpack.c.l.b16 %v715
        %v755 = vunpack.c.h.b16 %v715
        %v756 = vunpack.c.l.b16 %v716
        %v757 = vunpack.c.h.b16 %v716
        %v758 = vunpack.c.l.b16 %v717
        %v759 = vunpack.c.h.b16 %v717
        %v760 = vunpack.c.l.b16 %v718
        %v761 = vunpack.c.h.b16 %v718
        %v762 = vunpack.c.l.b16 %v719
        %v763 = vunpack.c.h.b16 %v719
        %v764 = vunpack.c.l.b16 %v720
        %v765 = vunpack.c.h.b16 %v720
        %v766 = vunpack.c.l.b16 %v721
        %v767 = vunpack.c.h.b16 %v721
        %v768 = vunpack.c.l.b16 %v722
        %v769 = vunpack.c.h.b16 %v722
        %v770 = vunpack.c.l.b16 %v723
        %v771 = vunpack.c.h.b16 %v723
        %v772 = vpack.c.b16 %v740, %v740
        %v773 = vpack.c.b16 %v741, %v741
        %v774 = vpack.c.b16 %v742, %v742
        %v775 = vpack.c.b16 %v743, %v743
        %v776 = vpack.c.b16 %v744, %v744
        %v777 = vpack.c.b16 %v745, %v745
        %v778 = vpack.c.b16 %v746, %v746
        %v779 = vpack.c.b16 %v747, %v747
        %v780 = vpack.c.b16 %v748, %v748
        %v781 = vpack.c.b16 %v749, %v749
        %v782 = vpack.c.b16 %v750, %v750
        %v783 = vpack.c.b16 %v751, %v751
        %v784 = vpack.c.b16 %v752, %v752
        %v785 = vpack.c.b16 %v753, %v753
        %v786 = vpack.c.b16 %v754, %v754
        %v787 = vpack.c.b16 %v755, %v755
        %v788 = vpack.c.b16 %v756, %v756
        %v789 = vpack.c.b16 %v757, %v757
        %v790 = vpack.c.b16 %v758, %v758
        %v791 = vpack.c.b16 %v759, %v759
        %v792 = vpack.c.b16 %v760, %v760
        %v793 = vpack.c.b16 %v761, %v761
        %v794 = vpack.c.b16 %v762, %v762
        %v795 = vpack.c.b16 %v763, %v763
        %v796 = vpack.c.b16 %v764, %v764
        %v797 = vpack.c.b16 %v765, %v765
        %v798 = vpack.c.b16 %v766, %v766
        %v799 = vpack.c.b16 %v767, %v767
        %v800 = vpack.c.b16 %v768, %v768
        %v801 = vpack.c.b16 %v769, %v769
        %v802 = vpack.c.b16 %v770, %v770
        %v803 = vpack.c.b16 %v771, %v771
        %vm804 = vsmask.f32 256
        %vm805 = vsmask.f32 4368
        %vm806 = vmor %vm804, %vm805
        %v808 = vshrl.u32 %v772, 16
        %v810 = vrot.slane %v808, 7
        %v811 = vshll.u32 %v772, 16
        %v813 = vor.u32 %v810, %v811
        %v814 = vrot.slane %v810, 4
        %v816 = vshrl.u32 %v773, 16
        %v818 = vrot.slane %v816, 7
        %v819 = vshll.u32 %v773, 16
        %v821 = vor.u32 %v818, %v819
        %v822 = vsel %vm806, %v814, %v821
        %v823 = vrot.slane %v818, 4
        %v825 = vshrl.u32 %v774, 16
        %v827 = vrot.slane %v825, 7
        %v828 = vshll.u32 %v774, 16
        %v830 = vor.u32 %v827, %v828
        %v831 = vrot.slane %v827, 4
        %v833 = vshrl.u32 %v775, 16
        %v835 = vrot.slane %v833, 7
        %v836 = vshll.u32 %v775, 16
        %v838 = vor.u32 %v835, %v836
        %v839 = vsel %vm806, %v831, %v838
        %v840 = vrot.slane %v835, 4
        %v842 = vshrl.u32 %v776, 16
        %v844 = vrot.slane %v842, 7
        %v845 = vshll.u32 %v776, 16
        %v847 = vor.u32 %v844, %v845
        %v848 = vrot.slane %v844, 4
        %v850 = vshrl.u32 %v777, 16
        %v852 = vrot.slane %v850, 7
        %v853 = vshll.u32 %v777, 16
        %v855 = vor.u32 %v852, %v853
        %v856 = vsel %vm806, %v848, %v855
        %v857 = vrot.slane %v852, 4
        %v859 = vshrl.u32 %v778, 16
        %v861 = vrot.slane %v859, 7
        %v862 = vshll.u32 %v778, 16
        %v864 = vor.u32 %v861, %v862
        %v865 = vrot.slane %v861, 4
        %v867 = vshrl.u32 %v779, 16
        %v869 = vrot.slane %v867, 7
        %v870 = vshll.u32 %v779, 16
        %v872 = vor.u32 %v869, %v870
        %v873 = vsel %vm806, %v865, %v872
        %v874 = vrot.slane %v869, 4
        %v876 = vshrl.u32 %v780, 16
        %v878 = vrot.slane %v876, 7
        %v879 = vshll.u32 %v780, 16
        %v881 = vor.u32 %v878, %v879
        %v882 = vrot.slane %v878, 4
        %v884 = vshrl.u32 %v781, 16
        %v886 = vrot.slane %v884, 7
        %v887 = vshll.u32 %v781, 16
        %v889 = vor.u32 %v886, %v887
        %v890 = vsel %vm806, %v882, %v889
        %v891 = vrot.slane %v886, 4
        %v893 = vshrl.u32 %v782, 16
        %v895 = vrot.slane %v893, 7
        %v896 = vshll.u32 %v782, 16
        %v898 = vor.u32 %v895, %v896
        %v899 = vrot.slane %v895, 4
        %v901 = vshrl.u32 %v783, 16
        %v903 = vrot.slane %v901, 7
        %v904 = vshll.u32 %v783, 16
        %v906 = vor.u32 %v903, %v904
        %v907 = vsel %vm806, %v899, %v906
        %v908 = vrot.slane %v903, 4
        %v910 = vshrl.u32 %v784, 16
        %v912 = vrot.slane %v910, 7
        %v913 = vshll.u32 %v784, 16
        %v915 = vor.u32 %v912, %v913
        %v916 = vrot.slane %v912, 4
        %v918 = vshrl.u32 %v785, 16
        %v920 = vrot.slane %v918, 7
        %v921 = vshll.u32 %v785, 16
        %v923 = vor.u32 %v920, %v921
        %v924 = vsel %vm806, %v916, %v923
        %v925 = vrot.slane %v920, 4
        %v927 = vshrl.u32 %v786, 16
        %v929 = vrot.slane %v927, 7
        %v930 = vshll.u32 %v786, 16
        %v932 = vor.u32 %v929, %v930
        %v933 = vrot.slane %v929, 4
        %v935 = vshrl.u32 %v787, 16
        %v937 = vrot.slane %v935, 7
        %v938 = vshll.u32 %v787, 16
        %v940 = vor.u32 %v937, %v938
        %v941 = vsel %vm806, %v933, %v940
        %v942 = vrot.slane %v937, 4
        %v944 = vshrl.u32 %v788, 16
        %v946 = vrot.slane %v944, 7
        %v947 = vshll.u32 %v788, 16
        %v949 = vor.u32 %v946, %v947
        %v950 = vrot.slane %v946, 4
        %v952 = vshrl.u32 %v789, 16
        %v954 = vrot.slane %v952, 7
        %v955 = vshll.u32 %v789, 16
        %v957 = vor.u32 %v954, %v955
        %v958 = vsel %vm806, %v950, %v957
        %v959 = vrot.slane %v954, 4
        %v961 = vshrl.u32 %v790, 16
        %v963 = vrot.slane %v961, 7
        %v964 = vshll.u32 %v790, 16
        %v966 = vor.u32 %v963, %v964
        %v967 = vrot.slane %v963, 4
        %v969 = vshrl.u32 %v791, 16
        %v971 = vrot.slane %v969, 7
        %v972 = vshll.u32 %v791, 16
        %v974 = vor.u32 %v971, %v972
        %v975 = vsel %vm806, %v967, %v974
        %v976 = vrot.slane %v971, 4
        %v978 = vshrl.u32 %v792, 16
        %v980 = vrot.slane %v978, 7
        %v981 = vshll.u32 %v792, 16
        %v983 = vor.u32 %v980, %v981
        %v984 = vrot.slane %v980, 4
        %v986 = vshrl.u32 %v793, 16
        %v988 = vrot.slane %v986, 7
        %v989 = vshll.u32 %v793, 16
        %v991 = vor.u32 %v988, %v989
        %v992 = vsel %vm806, %v984, %v991
        %v993 = vrot.slane %v988, 4
        %v995 = vshrl.u32 %v794, 16
        %v997 = vrot.slane %v995, 7
        %v998 = vshll.u32 %v794, 16
        %v1000 = vor.u32 %v997, %v998
        %v1001 = vrot.slane %v997, 4
        %v1003 = vshrl.u32 %v795, 16
        %v1005 = vrot.slane %v1003, 7
        %v1006 = vshll.u32 %v795, 16
        %v1008 = vor.u32 %v1005, %v1006
        %v1009 = vsel %vm806, %v1001, %v1008
        %v1010 = vrot.slane %v1005, 4
        %v1012 = vshrl.u32 %v796, 16
        %v1014 = vrot.slane %v1012, 7
        %v1015 = vshll.u32 %v796, 16
        %v1017 = vor.u32 %v1014, %v1015
        %v1018 = vrot.slane %v1014, 4
        %v1020 = vshrl.u32 %v797, 16
        %v1022 = vrot.slane %v1020, 7
        %v1023 = vshll.u32 %v797, 16
        %v1025 = vor.u32 %v1022, %v1023
        %v1026 = vsel %vm806, %v1018, %v1025
        %v1027 = vrot.slane %v1022, 4
        %v1029 = vshrl.u32 %v798, 16
        %v1031 = vrot.slane %v1029, 7
        %v1032 = vshll.u32 %v798, 16
        %v1034 = vor.u32 %v1031, %v1032
        %v1035 = vrot.slane %v1031, 4
        %v1037 = vshrl.u32 %v799, 16
        %v1039 = vrot.slane %v1037, 7
        %v1040 = vshll.u32 %v799, 16
        %v1042 = vor.u32 %v1039, %v1040
        %v1043 = vsel %vm806, %v1035, %v1042
        %v1044 = vrot.slane %v1039, 4
        %v1046 = vshrl.u32 %v800, 16
        %v1048 = vrot.slane %v1046, 7
        %v1049 = vshll.u32 %v800, 16
        %v1051 = vor.u32 %v1048, %v1049
        %v1052 = vrot.slane %v1048, 4
        %v1054 = vshrl.u32 %v801, 16
        %v1056 = vrot.slane %v1054, 7
        %v1057 = vshll.u32 %v801, 16
        %v1059 = vor.u32 %v1056, %v1057
        %v1060 = vsel %vm806, %v1052, %v1059
        %v1061 = vrot.slane %v1056, 4
        %v1063 = vshrl.u32 %v802, 16
        %v1065 = vrot.slane %v1063, 7
        %v1066 = vshll.u32 %v802, 16
        %v1068 = vor.u32 %v1065, %v1066
        %v1069 = vrot.slane %v1065, 4
        %v1071 = vshrl.u32 %v803, 16
        %v1073 = vrot.slane %v1071, 7
        %v1074 = vshll.u32 %v803, 16
        %v1076 = vor.u32 %v1073, %v1074
        %v1077 = vsel %vm806, %v1069, %v1076
        %v1078 = vrot.slane %v1073, 4
        %s1127 = scalar_lea.vmem [#allocation2], 12
        %vm1128 = vcmask 1043456
        %vm1129 = vsmask.f32 7938
        %vm1130 = vmand %vm1128, %vm1129
        %v1131 = vld [vmem:[%s1127] sm:$0xf]
        %v1132 = vsel %vm1130, %v813, %v1131
        %1133 = vst [vmem:[%s1127] sm:$0xf] %v1132
        %1134 = vst [vmem:[%s1127 + $0x4] sm:$0xf] %v822
        %vm1135 = vcmask 1040384
        %vm1136 = vmand %vm1135, %vm804
        %v1137 = vld [vmem:[%s1127 + $0x8] sm:$0x1]
        %v1138 = vsel %vm1136, %v823, %v1137
        %1139 = vst [vmem:[%s1127 + $0x8] sm:$0x1] %v1138
        %v1140 = vld [vmem:[%s1127 + $0xc] sm:$0xf]
        %v1141 = vsel %vm1130, %v830, %v1140
        %1142 = vst [vmem:[%s1127 + $0xc] sm:$0xf] %v1141
        %1143 = vst [vmem:[%s1127 + $0x10] sm:$0xf] %v839
        %v1144 = vld [vmem:[%s1127 + $0x14] sm:$0x1]
        %v1145 = vsel %vm1136, %v840, %v1144
        %1146 = vst [vmem:[%s1127 + $0x14] sm:$0x1] %v1145
        %v1147 = vld [vmem:[%s1127 + $0x18] sm:$0xf]
        %v1148 = vsel %vm1130, %v847, %v1147
        %1149 = vst [vmem:[%s1127 + $0x18] sm:$0xf] %v1148
        %1150 = vst [vmem:[%s1127 + $0x1c] sm:$0xf] %v856
        %v1151 = vld [vmem:[%s1127 + $0x20] sm:$0x1]
        %v1152 = vsel %vm1136, %v857, %v1151
        %1153 = vst [vmem:[%s1127 + $0x20] sm:$0x1] %v1152
        %v1154 = vld [vmem:[%s1127 + $0x24] sm:$0xf]
        %v1155 = vsel %vm1130, %v864, %v1154
        %1156 = vst [vmem:[%s1127 + $0x24] sm:$0xf] %v1155
        %1157 = vst [vmem:[%s1127 + $0x28] sm:$0xf] %v873
        %v1158 = vld [vmem:[%s1127 + $0x2c] sm:$0x1]
        %v1159 = vsel %vm1136, %v874, %v1158
        %1160 = vst [vmem:[%s1127 + $0x2c] sm:$0x1] %v1159
        %v1161 = vld [vmem:[%s1127 + $0x30] sm:$0xf]
        %v1162 = vsel %vm1130, %v881, %v1161
        %1163 = vst [vmem:[%s1127 + $0x30] sm:$0xf] %v1162
        %1164 = vst [vmem:[%s1127 + $0x34] sm:$0xf] %v890
        %v1165 = vld [vmem:[%s1127 + $0x38] sm:$0x1]
        %v1166 = vsel %vm1136, %v891, %v1165
        %1167 = vst [vmem:[%s1127 + $0x38] sm:$0x1] %v1166
        %v1168 = vld [vmem:[%s1127 + $0x3c] sm:$0xf]
        %v1169 = vsel %vm1130, %v898, %v1168
        %1170 = vst [vmem:[%s1127 + $0x3c] sm:$0xf] %v1169
        %1171 = vst [vmem:[%s1127 + $0x40] sm:$0xf] %v907
        %v1172 = vld [vmem:[%s1127 + $0x44] sm:$0x1]
        %v1173 = vsel %vm1136, %v908, %v1172
        %1174 = vst [vmem:[%s1127 + $0x44] sm:$0x1] %v1173
        %v1175 = vld [vmem:[%s1127 + $0x48] sm:$0xf]
        %v1176 = vsel %vm1130, %v915, %v1175
        %1177 = vst [vmem:[%s1127 + $0x48] sm:$0xf] %v1176
        %1178 = vst [vmem:[%s1127 + $0x4c] sm:$0xf] %v924
        %v1179 = vld [vmem:[%s1127 + $0x50] sm:$0x1]
        %v1180 = vsel %vm1136, %v925, %v1179
        %1181 = vst [vmem:[%s1127 + $0x50] sm:$0x1] %v1180
        %v1182 = vld [vmem:[%s1127 + $0x54] sm:$0xf]
        %v1183 = vsel %vm1130, %v932, %v1182
        %1184 = vst [vmem:[%s1127 + $0x54] sm:$0xf] %v1183
        %1185 = vst [vmem:[%s1127 + $0x58] sm:$0xf] %v941
        %v1186 = vld [vmem:[%s1127 + $0x5c] sm:$0x1]
        %v1187 = vsel %vm1136, %v942, %v1186
        %1188 = vst [vmem:[%s1127 + $0x5c] sm:$0x1] %v1187
        %v1189 = vld [vmem:[%s1127 + $0x60] sm:$0xf]
        %v1190 = vsel %vm1130, %v949, %v1189
        %1191 = vst [vmem:[%s1127 + $0x60] sm:$0xf] %v1190
        %1192 = vst [vmem:[%s1127 + $0x64] sm:$0xf] %v958
        %v1193 = vld [vmem:[%s1127 + $0x68] sm:$0x1]
        %v1194 = vsel %vm1136, %v959, %v1193
        %1195 = vst [vmem:[%s1127 + $0x68] sm:$0x1] %v1194
        %v1196 = vld [vmem:[%s1127 + $0x6c] sm:$0xf]
        %v1197 = vsel %vm1130, %v966, %v1196
        %1198 = vst [vmem:[%s1127 + $0x6c] sm:$0xf] %v1197
        %1199 = vst [vmem:[%s1127 + $0x70] sm:$0xf] %v975
        %v1200 = vld [vmem:[%s1127 + $0x74] sm:$0x1]
        %v1201 = vsel %vm1136, %v976, %v1200
        %1202 = vst [vmem:[%s1127 + $0x74] sm:$0x1] %v1201
        %v1203 = vld [vmem:[%s1127 + $0x78] sm:$0xf]
        %v1204 = vsel %vm1130, %v983, %v1203
        %1205 = vst [vmem:[%s1127 + $0x78] sm:$0xf] %v1204
        %1206 = vst [vmem:[%s1127 + $0x7c] sm:$0xf] %v992
        %v1207 = vld [vmem:[%s1127 + $0x80] sm:$0x1]
        %v1208 = vsel %vm1136, %v993, %v1207
        %1209 = vst [vmem:[%s1127 + $0x80] sm:$0x1] %v1208
        %v1210 = vld [vmem:[%s1127 + $0x84] sm:$0xf]
        %v1211 = vsel %vm1130, %v1000, %v1210
        %1212 = vst [vmem:[%s1127 + $0x84] sm:$0xf] %v1211
        %1213 = vst [vmem:[%s1127 + $0x88] sm:$0xf] %v1009
        %v1214 = vld [vmem:[%s1127 + $0x8c] sm:$0x1]
        %v1215 = vsel %vm1136, %v1010, %v1214
        %1216 = vst [vmem:[%s1127 + $0x8c] sm:$0x1] %v1215
        %v1217 = vld [vmem:[%s1127 + $0x90] sm:$0xf]
        %v1218 = vsel %vm1130, %v1017, %v1217
        %1219 = vst [vmem:[%s1127 + $0x90] sm:$0xf] %v1218
        %1220 = vst [vmem:[%s1127 + $0x94] sm:$0xf] %v1026
        %v1221 = vld [vmem:[%s1127 + $0x98] sm:$0x1]
        %v1222 = vsel %vm1136, %v1027, %v1221
        %1223 = vst [vmem:[%s1127 + $0x98] sm:$0x1] %v1222
        %v1224 = vld [vmem:[%s1127 + $0x9c] sm:$0xf]
        %v1225 = vsel %vm1130, %v1034, %v1224
        %1226 = vst [vmem:[%s1127 + $0x9c] sm:$0xf] %v1225
        %1227 = vst [vmem:[%s1127 + $0xa0] sm:$0xf] %v1043
        %v1228 = vld [vmem:[%s1127 + $0xa4] sm:$0x1]
        %v1229 = vsel %vm1136, %v1044, %v1228
        %1230 = vst [vmem:[%s1127 + $0xa4] sm:$0x1] %v1229
        %v1231 = vld [vmem:[%s1127 + $0xa8] sm:$0xf]
        %v1232 = vsel %vm1130, %v1051, %v1231
        %1233 = vst [vmem:[%s1127 + $0xa8] sm:$0xf] %v1232
        %1234 = vst [vmem:[%s1127 + $0xac] sm:$0xf] %v1060
        %v1235 = vld [vmem:[%s1127 + $0xb0] sm:$0x1]
        %v1236 = vsel %vm1136, %v1061, %v1235
        %1237 = vst [vmem:[%s1127 + $0xb0] sm:$0x1] %v1236
        %v1238 = vld [vmem:[%s1127 + $0xb4] sm:$0xf]
        %v1239 = vsel %vm1130, %v1068, %v1238
        %1240 = vst [vmem:[%s1127 + $0xb4] sm:$0xf] %v1239
        %1241 = vst [vmem:[%s1127 + $0xb8] sm:$0xf] %v1077
        %v1242 = vld [vmem:[%s1127 + $0xbc] sm:$0x1]
        %v1243 = vsel %vm1136, %v1078, %v1242
        %1244 = vst [vmem:[%s1127 + $0xbc] sm:$0x1] %v1243
        %v1245 = vld [vmem:[#allocation2] sm:$0xf]
        %v1246 = vld [vmem:[#allocation2 + $0x4] sm:$0xf]
        %v1247 = vld [vmem:[#allocation2 + $0xc] sm:$0xf]
        %v1248 = vld [vmem:[#allocation2 + $0x10] sm:$0xf]
        %v1249 = vld [vmem:[#allocation2 + $0x18] sm:$0xf]
        %v1250 = vld [vmem:[#allocation2 + $0x1c] sm:$0xf]
        %v1251 = vld [vmem:[#allocation2 + $0x24] sm:$0xf]
        %v1252 = vld [vmem:[#allocation2 + $0x28] sm:$0xf]
        %v1253 = vld [vmem:[#allocation2 + $0x30] sm:$0xf]
        %v1254 = vld [vmem:[#allocation2 + $0x34] sm:$0xf]
        %v1255 = vld [vmem:[#allocation2 + $0x3c] sm:$0xf]
        %v1256 = vld [vmem:[#allocation2 + $0x40] sm:$0xf]
        %v1257 = vld [vmem:[#allocation2 + $0x48] sm:$0xf]
        %v1258 = vld [vmem:[#allocation2 + $0x4c] sm:$0xf]
        %v1259 = vld [vmem:[#allocation2 + $0x54] sm:$0xf]
        %v1260 = vld [vmem:[#allocation2 + $0x58] sm:$0xf]
        %v1261 = vld [vmem:[#allocation2 + $0x60] sm:$0xf]
        %v1262 = vld [vmem:[#allocation2 + $0x64] sm:$0xf]
        %v1263 = vld [vmem:[#allocation2 + $0x6c] sm:$0xf]
        %v1264 = vld [vmem:[#allocation2 + $0x70] sm:$0xf]
        %v1265 = vld [vmem:[#allocation2 + $0x78] sm:$0xf]
        %v1266 = vld [vmem:[#allocation2 + $0x7c] sm:$0xf]
        %v1267 = vld [vmem:[#allocation2 + $0x84] sm:$0xf]
        %v1268 = vld [vmem:[#allocation2 + $0x88] sm:$0xf]
        %v1269 = vld [vmem:[#allocation2 + $0x90] sm:$0xf]
        %v1270 = vld [vmem:[#allocation2 + $0x94] sm:$0xf]
        %v1271 = vld [vmem:[#allocation2 + $0x9c] sm:$0xf]
        %v1272 = vld [vmem:[#allocation2 + $0xa0] sm:$0xf]
        %v1273 = vld [vmem:[#allocation2 + $0xa8] sm:$0xf]
        %v1274 = vld [vmem:[#allocation2 + $0xac] sm:$0xf]
        %v1275 = vld [vmem:[#allocation2 + $0xb4] sm:$0xf]
        %v1276 = vld [vmem:[#allocation2 + $0xb8] sm:$0xf]
        %v1277 = vld [vmem:[#allocation8] sm:$0xf]
        %v1278 = vld [vmem:[#allocation8 + $0x4] sm:$0xf]
        %v1279 = vld [vmem:[#allocation8 + $0x8] sm:$0xf]
        %v1280 = vld [vmem:[#allocation8 + $0xc] sm:$0xf]
        %v1281 = vld [vmem:[#allocation8 + $0x10] sm:$0xf]
        %v1282 = vld [vmem:[#allocation8 + $0x14] sm:$0xf]
        %v1283 = vld [vmem:[#allocation8 + $0x18] sm:$0xf]
        %v1284 = vld [vmem:[#allocation8 + $0x1c] sm:$0xf]
        %v1285 = vld [vmem:[#allocation8 + $0x20] sm:$0xf]
        %v1286 = vld [vmem:[#allocation8 + $0x24] sm:$0xf]
        %v1287 = vld [vmem:[#allocation8 + $0x28] sm:$0xf]
        %v1288 = vld [vmem:[#allocation8 + $0x2c] sm:$0xf]
        %v1289 = vld [vmem:[#allocation8 + $0x30] sm:$0xf]
        %v1290 = vld [vmem:[#allocation8 + $0x34] sm:$0xf]
        %v1291 = vld [vmem:[#allocation8 + $0x38] sm:$0xf]
        %v1292 = vld [vmem:[#allocation8 + $0x3c] sm:$0xf]
        %v1293 = vld [vmem:[#allocation2 + $0x8] sm:$0x1]
        %v1294 = vld [vmem:[#allocation2 + $0x14] sm:$0x1]
        %v1295 = vld [vmem:[#allocation2 + $0x20] sm:$0x1]
        %v1296 = vld [vmem:[#allocation2 + $0x2c] sm:$0x1]
        %v1297 = vld [vmem:[#allocation2 + $0x38] sm:$0x1]
        %v1298 = vld [vmem:[#allocation2 + $0x44] sm:$0x1]
        %v1299 = vld [vmem:[#allocation2 + $0x50] sm:$0x1]
        %v1300 = vld [vmem:[#allocation2 + $0x5c] sm:$0x1]
        %v1301 = vld [vmem:[#allocation2 + $0x68] sm:$0x1]
        %v1302 = vld [vmem:[#allocation2 + $0x74] sm:$0x1]
        %v1303 = vld [vmem:[#allocation2 + $0x80] sm:$0x1]
        %v1304 = vld [vmem:[#allocation2 + $0x8c] sm:$0x1]
        %v1305 = vld [vmem:[#allocation2 + $0x98] sm:$0x1]
        %v1306 = vld [vmem:[#allocation2 + $0xa4] sm:$0x1]
        %v1307 = vld [vmem:[#allocation2 + $0xb0] sm:$0x1]
        %v1308 = vld [vmem:[#allocation2 + $0xbc] sm:$0x1]
        %vm1309 = vsmask.f32 3328
        %vm1310 = vsmask.f32 7440
        %vm1311 = vmor %vm1309, %vm1310
        %v1313 = vshrl.u32 %v1245, 16
        %v1315 = vrot.slane %v1313, 4
        %v1316 = vshll.u32 %v1245, 16
        %v1318 = vrot.slane %v1316, 5
        %v1319 = vor.u32 %v1315, %v1318
        %v1320 = vrot.slane %v1319, 4
        %v1322 = vshll.u32 %v1246, 16
        %v1324 = vrot.slane %v1322, 5
        %v1325 = vsel %vm1311, %v1320, %v1324
        %v1326 = vshrl.u32 %v1246, 16
        %v1328 = vrot.slane %v1326, 4
        %v1329 = vor.u32 %v1328, %v1324
        %v1330 = vrot.slane %v1329, 4
        %v1332 = vshll.u32 %v1293, 16
        %v1334 = vrot.slane %v1332, 5
        %v1335 = vsel %vm1311, %v1330, %v1334
        %v1337 = vshrl.u32 %v1247, 16
        %v1339 = vrot.slane %v1337, 4
        %v1340 = vshll.u32 %v1247, 16
        %v1342 = vrot.slane %v1340, 5
        %v1343 = vor.u32 %v1339, %v1342
        %v1344 = vrot.slane %v1343, 4
        %v1346 = vshll.u32 %v1248, 16
        %v1348 = vrot.slane %v1346, 5
        %v1349 = vsel %vm1311, %v1344, %v1348
        %v1350 = vshrl.u32 %v1248, 16
        %v1352 = vrot.slane %v1350, 4
        %v1353 = vor.u32 %v1352, %v1348
        %v1354 = vrot.slane %v1353, 4
        %v1356 = vshll.u32 %v1294, 16
        %v1358 = vrot.slane %v1356, 5
        %v1359 = vsel %vm1311, %v1354, %v1358
        %v1361 = vshrl.u32 %v1249, 16
        %v1363 = vrot.slane %v1361, 4
        %v1364 = vshll.u32 %v1249, 16
        %v1366 = vrot.slane %v1364, 5
        %v1367 = vor.u32 %v1363, %v1366
        %v1368 = vrot.slane %v1367, 4
        %v1370 = vshll.u32 %v1250, 16
        %v1372 = vrot.slane %v1370, 5
        %v1373 = vsel %vm1311, %v1368, %v1372
        %v1374 = vshrl.u32 %v1250, 16
        %v1376 = vrot.slane %v1374, 4
        %v1377 = vor.u32 %v1376, %v1372
        %v1378 = vrot.slane %v1377, 4
        %v1380 = vshll.u32 %v1295, 16
        %v1382 = vrot.slane %v1380, 5
        %v1383 = vsel %vm1311, %v1378, %v1382
        %v1385 = vshrl.u32 %v1251, 16
        %v1387 = vrot.slane %v1385, 4
        %v1388 = vshll.u32 %v1251, 16
        %v1390 = vrot.slane %v1388, 5
        %v1391 = vor.u32 %v1387, %v1390
        %v1392 = vrot.slane %v1391, 4
        %v1394 = vshll.u32 %v1252, 16
        %v1396 = vrot.slane %v1394, 5
        %v1397 = vsel %vm1311, %v1392, %v1396
        %v1398 = vshrl.u32 %v1252, 16
        %v1400 = vrot.slane %v1398, 4
        %v1401 = vor.u32 %v1400, %v1396
        %v1402 = vrot.slane %v1401, 4
        %v1404 = vshll.u32 %v1296, 16
        %v1406 = vrot.slane %v1404, 5
        %v1407 = vsel %vm1311, %v1402, %v1406
        %v1409 = vshrl.u32 %v1253, 16
        %v1411 = vrot.slane %v1409, 4
        %v1412 = vshll.u32 %v1253, 16
        %v1414 = vrot.slane %v1412, 5
        %v1415 = vor.u32 %v1411, %v1414
        %v1416 = vrot.slane %v1415, 4
        %v1418 = vshll.u32 %v1254, 16
        %v1420 = vrot.slane %v1418, 5
        %v1421 = vsel %vm1311, %v1416, %v1420
        %v1422 = vshrl.u32 %v1254, 16
        %v1424 = vrot.slane %v1422, 4
        %v1425 = vor.u32 %v1424, %v1420
        %v1426 = vrot.slane %v1425, 4
        %v1428 = vshll.u32 %v1297, 16
        %v1430 = vrot.slane %v1428, 5
        %v1431 = vsel %vm1311, %v1426, %v1430
        %v1433 = vshrl.u32 %v1255, 16
        %v1435 = vrot.slane %v1433, 4
        %v1436 = vshll.u32 %v1255, 16
        %v1438 = vrot.slane %v1436, 5
        %v1439 = vor.u32 %v1435, %v1438
        %v1440 = vrot.slane %v1439, 4
        %v1442 = vshll.u32 %v1256, 16
        %v1444 = vrot.slane %v1442, 5
        %v1445 = vsel %vm1311, %v1440, %v1444
        %v1446 = vshrl.u32 %v1256, 16
        %v1448 = vrot.slane %v1446, 4
        %v1449 = vor.u32 %v1448, %v1444
        %v1450 = vrot.slane %v1449, 4
        %v1452 = vshll.u32 %v1298, 16
        %v1454 = vrot.slane %v1452, 5
        %v1455 = vsel %vm1311, %v1450, %v1454
        %v1457 = vshrl.u32 %v1257, 16
        %v1459 = vrot.slane %v1457, 4
        %v1460 = vshll.u32 %v1257, 16
        %v1462 = vrot.slane %v1460, 5
        %v1463 = vor.u32 %v1459, %v1462
        %v1464 = vrot.slane %v1463, 4
        %v1466 = vshll.u32 %v1258, 16
        %v1468 = vrot.slane %v1466, 5
        %v1469 = vsel %vm1311, %v1464, %v1468
        %v1470 = vshrl.u32 %v1258, 16
        %v1472 = vrot.slane %v1470, 4
        %v1473 = vor.u32 %v1472, %v1468
        %v1474 = vrot.slane %v1473, 4
        %v1476 = vshll.u32 %v1299, 16
        %v1478 = vrot.slane %v1476, 5
        %v1479 = vsel %vm1311, %v1474, %v1478
        %v1481 = vshrl.u32 %v1259, 16
        %v1483 = vrot.slane %v1481, 4
        %v1484 = vshll.u32 %v1259, 16
        %v1486 = vrot.slane %v1484, 5
        %v1487 = vor.u32 %v1483, %v1486
        %v1488 = vrot.slane %v1487, 4
        %v1490 = vshll.u32 %v1260, 16
        %v1492 = vrot.slane %v1490, 5
        %v1493 = vsel %vm1311, %v1488, %v1492
        %v1494 = vshrl.u32 %v1260, 16
        %v1496 = vrot.slane %v1494, 4
        %v1497 = vor.u32 %v1496, %v1492
        %v1498 = vrot.slane %v1497, 4
        %v1500 = vshll.u32 %v1300, 16
        %v1502 = vrot.slane %v1500, 5
        %v1503 = vsel %vm1311, %v1498, %v1502
        %v1505 = vshrl.u32 %v1261, 16
        %v1507 = vrot.slane %v1505, 4
        %v1508 = vshll.u32 %v1261, 16
        %v1510 = vrot.slane %v1508, 5
        %v1511 = vor.u32 %v1507, %v1510
        %v1512 = vrot.slane %v1511, 4
        %v1514 = vshll.u32 %v1262, 16
        %v1516 = vrot.slane %v1514, 5
        %v1517 = vsel %vm1311, %v1512, %v1516
        %v1518 = vshrl.u32 %v1262, 16
        %v1520 = vrot.slane %v1518, 4
        %v1521 = vor.u32 %v1520, %v1516
        %v1522 = vrot.slane %v1521, 4
        %v1524 = vshll.u32 %v1301, 16
        %v1526 = vrot.slane %v1524, 5
        %v1527 = vsel %vm1311, %v1522, %v1526
        %v1529 = vshrl.u32 %v1263, 16
        %v1531 = vrot.slane %v1529, 4
        %v1532 = vshll.u32 %v1263, 16
        %v1534 = vrot.slane %v1532, 5
        %v1535 = vor.u32 %v1531, %v1534
        %v1536 = vrot.slane %v1535, 4
        %v1538 = vshll.u32 %v1264, 16
        %v1540 = vrot.slane %v1538, 5
        %v1541 = vsel %vm1311, %v1536, %v1540
        %v1542 = vshrl.u32 %v1264, 16
        %v1544 = vrot.slane %v1542, 4
        %v1545 = vor.u32 %v1544, %v1540
        %v1546 = vrot.slane %v1545, 4
        %v1548 = vshll.u32 %v1302, 16
        %v1550 = vrot.slane %v1548, 5
        %v1551 = vsel %vm1311, %v1546, %v1550
        %v1553 = vshrl.u32 %v1265, 16
        %v1555 = vrot.slane %v1553, 4
        %v1556 = vshll.u32 %v1265, 16
        %v1558 = vrot.slane %v1556, 5
        %v1559 = vor.u32 %v1555, %v1558
        %v1560 = vrot.slane %v1559, 4
        %v1562 = vshll.u32 %v1266, 16
        %v1564 = vrot.slane %v1562, 5
        %v1565 = vsel %vm1311, %v1560, %v1564
        %v1566 = vshrl.u32 %v1266, 16
        %v1568 = vrot.slane %v1566, 4
        %v1569 = vor.u32 %v1568, %v1564
        %v1570 = vrot.slane %v1569, 4
        %v1572 = vshll.u32 %v1303, 16
        %v1574 = vrot.slane %v1572, 5
        %v1575 = vsel %vm1311, %v1570, %v1574
        %v1577 = vshrl.u32 %v1267, 16
        %v1579 = vrot.slane %v1577, 4
        %v1580 = vshll.u32 %v1267, 16
        %v1582 = vrot.slane %v1580, 5
        %v1583 = vor.u32 %v1579, %v1582
        %v1584 = vrot.slane %v1583, 4
        %v1586 = vshll.u32 %v1268, 16
        %v1588 = vrot.slane %v1586, 5
        %v1589 = vsel %vm1311, %v1584, %v1588
        %v1590 = vshrl.u32 %v1268, 16
        %v1592 = vrot.slane %v1590, 4
        %v1593 = vor.u32 %v1592, %v1588
        %v1594 = vrot.slane %v1593, 4
        %v1596 = vshll.u32 %v1304, 16
        %v1598 = vrot.slane %v1596, 5
        %v1599 = vsel %vm1311, %v1594, %v1598
        %v1601 = vshrl.u32 %v1269, 16
        %v1603 = vrot.slane %v1601, 4
        %v1604 = vshll.u32 %v1269, 16
        %v1606 = vrot.slane %v1604, 5
        %v1607 = vor.u32 %v1603, %v1606
        %v1608 = vrot.slane %v1607, 4
        %v1610 = vshll.u32 %v1270, 16
        %v1612 = vrot.slane %v1610, 5
        %v1613 = vsel %vm1311, %v1608, %v1612
        %v1614 = vshrl.u32 %v1270, 16
        %v1616 = vrot.slane %v1614, 4
        %v1617 = vor.u32 %v1616, %v1612
        %v1618 = vrot.slane %v1617, 4
        %v1620 = vshll.u32 %v1305, 16
        %v1622 = vrot.slane %v1620, 5
        %v1623 = vsel %vm1311, %v1618, %v1622
        %v1625 = vshrl.u32 %v1271, 16
        %v1627 = vrot.slane %v1625, 4
        %v1628 = vshll.u32 %v1271, 16
        %v1630 = vrot.slane %v1628, 5
        %v1631 = vor.u32 %v1627, %v1630
        %v1632 = vrot.slane %v1631, 4
        %v1634 = vshll.u32 %v1272, 16
        %v1636 = vrot.slane %v1634, 5
        %v1637 = vsel %vm1311, %v1632, %v1636
        %v1638 = vshrl.u32 %v1272, 16
        %v1640 = vrot.slane %v1638, 4
        %v1641 = vor.u32 %v1640, %v1636
        %v1642 = vrot.slane %v1641, 4
        %v1644 = vshll.u32 %v1306, 16
        %v1646 = vrot.slane %v1644, 5
        %v1647 = vsel %vm1311, %v1642, %v1646
        %v1649 = vshrl.u32 %v1273, 16
        %v1651 = vrot.slane %v1649, 4
        %v1652 = vshll.u32 %v1273, 16
        %v1654 = vrot.slane %v1652, 5
        %v1655 = vor.u32 %v1651, %v1654
        %v1656 = vrot.slane %v1655, 4
        %v1658 = vshll.u32 %v1274, 16
        %v1660 = vrot.slane %v1658, 5
        %v1661 = vsel %vm1311, %v1656, %v1660
        %v1662 = vshrl.u32 %v1274, 16
        %v1664 = vrot.slane %v1662, 4
        %v1665 = vor.u32 %v1664, %v1660
        %v1666 = vrot.slane %v1665, 4
        %v1668 = vshll.u32 %v1307, 16
        %v1670 = vrot.slane %v1668, 5
        %v1671 = vsel %vm1311, %v1666, %v1670
        %v1673 = vshrl.u32 %v1275, 16
        %v1675 = vrot.slane %v1673, 4
        %v1676 = vshll.u32 %v1275, 16
        %v1678 = vrot.slane %v1676, 5
        %v1679 = vor.u32 %v1675, %v1678
        %v1680 = vrot.slane %v1679, 4
        %v1682 = vshll.u32 %v1276, 16
        %v1684 = vrot.slane %v1682, 5
        %v1685 = vsel %vm1311, %v1680, %v1684
        %v1686 = vshrl.u32 %v1276, 16
        %v1688 = vrot.slane %v1686, 4
        %v1689 = vor.u32 %v1688, %v1684
        %v1690 = vrot.slane %v1689, 4
        %v1692 = vshll.u32 %v1308, 16
        %v1694 = vrot.slane %v1692, 5
        %v1695 = vsel %vm1311, %v1690, %v1694
        %s1696 = scalar_lea.vmem [#allocation8], 64
        %v1697 = vld [vmem:[%s1696] sm:$0xf]
        %v1698 = vld [vmem:[%s1696 + $0x4] sm:$0xf]
        %v1699 = vld [vmem:[%s1696 + $0x8] sm:$0xf]
        %v1700 = vld [vmem:[%s1696 + $0xc] sm:$0xf]
        %v1701 = vld [vmem:[%s1696 + $0x10] sm:$0xf]
        %v1702 = vld [vmem:[%s1696 + $0x14] sm:$0xf]
        %v1703 = vld [vmem:[%s1696 + $0x18] sm:$0xf]
        %v1704 = vld [vmem:[%s1696 + $0x1c] sm:$0xf]
        %v1705 = vld [vmem:[%s1696 + $0x20] sm:$0xf]
        %v1706 = vld [vmem:[%s1696 + $0x24] sm:$0xf]
        %v1707 = vld [vmem:[%s1696 + $0x28] sm:$0xf]
        %v1708 = vld [vmem:[%s1696 + $0x2c] sm:$0xf]
        %v1709 = vld [vmem:[%s1696 + $0x30] sm:$0xf]
        %v1710 = vld [vmem:[%s1696 + $0x34] sm:$0xf]
        %v1711 = vld [vmem:[%s1696 + $0x38] sm:$0xf]
        %v1712 = vld [vmem:[%s1696 + $0x3c] sm:$0xf]
        %v1713 = vunpack.c.l.b16 %v1325
        %v1714 = vunpack.c.l.b16 %v1335
        %v1715 = vunpack.c.l.b16 %v1349
        %v1716 = vunpack.c.l.b16 %v1359
        %v1717 = vunpack.c.l.b16 %v1373
        %v1718 = vunpack.c.l.b16 %v1383
        %v1719 = vunpack.c.l.b16 %v1397
        %v1720 = vunpack.c.l.b16 %v1407
        %v1721 = vunpack.c.l.b16 %v1421
        %v1722 = vunpack.c.l.b16 %v1431
        %v1723 = vunpack.c.l.b16 %v1445
        %v1724 = vunpack.c.l.b16 %v1455
        %v1725 = vunpack.c.l.b16 %v1469
        %v1726 = vunpack.c.l.b16 %v1479
        %v1727 = vunpack.c.l.b16 %v1493
        %v1728 = vunpack.c.l.b16 %v1503
        %v1729 = vunpack.c.l.b16 %v1517
        %v1730 = vunpack.c.l.b16 %v1527
        %v1731 = vunpack.c.l.b16 %v1541
        %v1732 = vunpack.c.l.b16 %v1551
        %v1733 = vunpack.c.l.b16 %v1565
        %v1734 = vunpack.c.l.b16 %v1575
        %v1735 = vunpack.c.l.b16 %v1589
        %v1736 = vunpack.c.l.b16 %v1599
        %v1737 = vunpack.c.l.b16 %v1613
        %v1738 = vunpack.c.l.b16 %v1623
        %v1739 = vunpack.c.l.b16 %v1637
        %v1740 = vunpack.c.l.b16 %v1647
        %v1741 = vunpack.c.l.b16 %v1661
        %v1742 = vunpack.c.l.b16 %v1671
        %v1743 = vunpack.c.l.b16 %v1685
        %v1744 = vunpack.c.l.b16 %v1695
        %v1745 = vpack.c.b16 %v1714, %v1713
        %v1746 = vpack.c.b16 %v1716, %v1715
        %v1747 = vpack.c.b16 %v1718, %v1717
        %v1748 = vpack.c.b16 %v1720, %v1719
        %v1749 = vpack.c.b16 %v1722, %v1721
        %v1750 = vpack.c.b16 %v1724, %v1723
        %v1751 = vpack.c.b16 %v1726, %v1725
        %v1752 = vpack.c.b16 %v1728, %v1727
        %v1753 = vpack.c.b16 %v1730, %v1729
        %v1754 = vpack.c.b16 %v1732, %v1731
        %v1755 = vpack.c.b16 %v1734, %v1733
        %v1756 = vpack.c.b16 %v1736, %v1735
        %v1757 = vpack.c.b16 %v1738, %v1737
        %v1758 = vpack.c.b16 %v1740, %v1739
        %v1759 = vpack.c.b16 %v1742, %v1741
        %v1760 = vpack.c.b16 %v1744, %v1743
        %v1793 = vunpack.c.l.b16 %v1697
        %v1794 = vunpack.c.l.b16 %v1698
        %v1795 = vunpack.c.l.b16 %v1699
        %v1796 = vunpack.c.l.b16 %v1700
        %v1797 = vunpack.c.l.b16 %v1701
        %v1798 = vunpack.c.l.b16 %v1702
        %v1799 = vunpack.c.l.b16 %v1703
        %v1800 = vunpack.c.l.b16 %v1704
        %v1801 = vunpack.c.l.b16 %v1705
        %v1802 = vunpack.c.l.b16 %v1706
        %v1803 = vunpack.c.l.b16 %v1707
        %v1804 = vunpack.c.l.b16 %v1708
        %v1805 = vunpack.c.l.b16 %v1709
        %v1806 = vunpack.c.l.b16 %v1710
        %v1807 = vunpack.c.l.b16 %v1711
        %v1808 = vunpack.c.l.b16 %v1712
        %v1809 = vpack.c.b16 %v1794, %v1793
        %v1810 = vpack.c.b16 %v1796, %v1795
        %v1811 = vpack.c.b16 %v1798, %v1797
        %v1812 = vpack.c.b16 %v1800, %v1799
        %v1813 = vpack.c.b16 %v1802, %v1801
        %v1814 = vpack.c.b16 %v1804, %v1803
        %v1815 = vpack.c.b16 %v1806, %v1805
        %v1816 = vpack.c.b16 %v1808, %v1807
        %1825 = vmatprep.subr.bf16.mxu0 0
        %1826 = vmatpush1.bf16.msra.mxu0 %v1809
        %1827 = vmatprep.subr.bf16.mxu0 0
        %1828 = vmatpush1.bf16.msra.mxu0 %v1810
        %1829 = vmatprep.subr.bf16.mxu0 0
        %1830 = vmatpush1.bf16.msra.mxu0 %v1811
        %1831 = vmatprep.subr.bf16.mxu0 0
        %1832 = vmatpush1.bf16.msra.mxu0 %v1812
        %1833 = vmatprep.subr.bf16.mxu0 0
        %1834 = vmatpush1.bf16.msra.mxu0 %v1813
        %1835 = vmatprep.subr.bf16.mxu0 0
        %1836 = vmatpush1.bf16.msra.mxu0 %v1814
        %1837 = vmatprep.subr.bf16.mxu0 0
        %1838 = vmatpush1.bf16.msra.mxu0 %v1815
        %1839 = vmatprep.subr.bf16.mxu0 0
        %1840 = vmatpush1.bf16.msra.mxu0 %v1816
        %1841 = vmatprep.subr.bf16.mxu0 0
        %1842 = vmatpush1.bf16.msra.mxu0 0
        %1843 = vmatprep.subr.bf16.mxu0 0
        %1844 = vmatpush1.bf16.msra.mxu0 0
        %1845 = vmatprep.subr.bf16.mxu0 0
        %1846 = vmatpush1.bf16.msra.mxu0 0
        %1847 = vmatprep.subr.bf16.mxu0 0
        %1848 = vmatpush1.bf16.msra.mxu0 0
        %1849 = vmatprep.subr.bf16.mxu0 0
        %1850 = vmatpush1.bf16.msra.mxu0 0
        %1851 = vmatprep.subr.bf16.mxu0 0
        %1852 = vmatpush1.bf16.msra.mxu0 0
        %1853 = vmatprep.subr.bf16.mxu0 0
        %1854 = vmatpush1.bf16.msra.mxu0 0
        %1855 = vmatprep.subr.bf16.mxu0 0
        %1856 = vmatpush1.bf16.msra.mxu0 0
        %1857 = vmatprep.mubr.bf16.mxu0 0
        %1858 = vmatmul.mubr.bf16.gmra.mrb[0].mxu0 %v1745
        %v1859 = vpop.f32.mrb[0].mxu0
        %v1860 = vadd.f32 0.0, %v1859
        %v1861 = vpop.f32.mrb[0].mxu0
        %v1862 = vpop.f32.mrb[0].mxu0
        %v1863 = vadd.f32 0.0, %v1862
        %v1864 = vpop.f32.mrb[0].mxu0
        %1865 = vmatprep.mubr.bf16.mxu0 0
        %1866 = vmatmul.mubr.bf16.gmra.mrb[0].mxu0 %v1746
        %v1867 = vpop.f32.mrb[0].mxu0
        %v1868 = vadd.f32 0.0, %v1867
        %v1869 = vpop.f32.mrb[0].mxu0
        %v1870 = vpop.f32.mrb[0].mxu0
        %v1871 = vadd.f32 0.0, %v1870
        %v1872 = vpop.f32.mrb[0].mxu0
        %1873 = vmatprep.mubr.bf16.mxu0 0
        %1874 = vmatmul.mubr.bf16.gmra.mrb[0].mxu0 %v1747
        %v1875 = vpop.f32.mrb[0].mxu0
        %v1876 = vadd.f32 0.0, %v1875
        %v1877 = vpop.f32.mrb[0].mxu0
        %v1878 = vpop.f32.mrb[0].mxu0
        %v1879 = vadd.f32 0.0, %v1878
        %v1880 = vpop.f32.mrb[0].mxu0
        %1881 = vmatprep.mubr.bf16.mxu0 0
        %1882 = vmatmul.mubr.bf16.gmra.mrb[0].mxu0 %v1748
        %v1883 = vpop.f32.mrb[0].mxu0
        %v1884 = vadd.f32 0.0, %v1883
        %v1885 = vpop.f32.mrb[0].mxu0
        %v1886 = vpop.f32.mrb[0].mxu0
        %v1887 = vadd.f32 0.0, %v1886
        %v1888 = vpop.f32.mrb[0].mxu0
        %1889 = vmatprep.mubr.bf16.mxu0 0
        %1890 = vmatmul.mubr.bf16.gmra.mrb[0].mxu0 %v1749
        %v1891 = vpop.f32.mrb[0].mxu0
        %v1892 = vadd.f32 0.0, %v1891
        %v1893 = vpop.f32.mrb[0].mxu0
        %v1894 = vpop.f32.mrb[0].mxu0
        %v1895 = vadd.f32 0.0, %v1894
        %v1896 = vpop.f32.mrb[0].mxu0
        %1897 = vmatprep.mubr.bf16.mxu0 0
        %1898 = vmatmul.mubr.bf16.gmra.mrb[0].mxu0 %v1750
        %v1899 = vpop.f32.mrb[0].mxu0
        %v1900 = vadd.f32 0.0, %v1899
        %v1901 = vpop.f32.mrb[0].mxu0
        %v1902 = vpop.f32.mrb[0].mxu0
        %v1903 = vadd.f32 0.0, %v1902
        %v1904 = vpop.f32.mrb[0].mxu0
        %1905 = vmatprep.mubr.bf16.mxu0 0
        %1906 = vmatmul.mubr.bf16.gmra.mrb[0].mxu0 %v1751
        %v1907 = vpop.f32.mrb[0].mxu0
        %v1908 = vadd.f32 0.0, %v1907
        %v1909 = vpop.f32.mrb[0].mxu0
        %v1910 = vpop.f32.mrb[0].mxu0
        %v1911 = vadd.f32 0.0, %v1910
        %v1912 = vpop.f32.mrb[0].mxu0
        %1913 = vmatprep.mubr.bf16.mxu0 0
        %1914 = vmatmul.mubr.bf16.gmra.mrb[0].mxu0 %v1752
        %v1915 = vpop.f32.mrb[0].mxu0
        %v1916 = vadd.f32 0.0, %v1915
        %v1917 = vpop.f32.mrb[0].mxu0
        %v1918 = vpop.f32.mrb[0].mxu0
        %v1919 = vadd.f32 0.0, %v1918
        %v1920 = vpop.f32.mrb[0].mxu0
        %1921 = vmatprep.mubr.bf16.mxu0 0
        %1922 = vmatmul.mubr.bf16.gmra.mrb[0].mxu0 %v1753
        %v1923 = vpop.f32.mrb[0].mxu0
        %v1924 = vadd.f32 0.0, %v1923
        %v1925 = vpop.f32.mrb[0].mxu0
        %v1926 = vpop.f32.mrb[0].mxu0
        %v1927 = vadd.f32 0.0, %v1926
        %v1928 = vpop.f32.mrb[0].mxu0
        %1929 = vmatprep.mubr.bf16.mxu0 0
        %1930 = vmatmul.mubr.bf16.gmra.mrb[0].mxu0 %v1754
        %v1931 = vpop.f32.mrb[0].mxu0
        %v1932 = vadd.f32 0.0, %v1931
        %v1933 = vpop.f32.mrb[0].mxu0
        %v1934 = vpop.f32.mrb[0].mxu0
        %v1935 = vadd.f32 0.0, %v1934
        %v1936 = vpop.f32.mrb[0].mxu0
        %1937 = vmatprep.mubr.bf16.mxu0 0
        %1938 = vmatmul.mubr.bf16.gmra.mrb[0].mxu0 %v1755
        %v1939 = vpop.f32.mrb[0].mxu0
        %v1940 = vadd.f32 0.0, %v1939
        %v1941 = vpop.f32.mrb[0].mxu0
        %v1942 = vpop.f32.mrb[0].mxu0
        %v1943 = vadd.f32 0.0, %v1942
        %v1944 = vpop.f32.mrb[0].mxu0
        %1945 = vmatprep.mubr.bf16.mxu0 0
        %1946 = vmatmul.mubr.bf16.gmra.mrb[0].mxu0 %v1756
        %v1947 = vpop.f32.mrb[0].mxu0
        %v1948 = vadd.f32 0.0, %v1947
        %v1949 = vpop.f32.mrb[0].mxu0
        %v1950 = vpop.f32.mrb[0].mxu0
        %v1951 = vadd.f32 0.0, %v1950
        %v1952 = vpop.f32.mrb[0].mxu0
        %1953 = vmatprep.mubr.bf16.mxu0 0
        %1954 = vmatmul.mubr.bf16.gmra.mrb[0].mxu0 %v1757
        %v1955 = vpop.f32.mrb[0].mxu0
        %v1956 = vadd.f32 0.0, %v1955
        %v1957 = vpop.f32.mrb[0].mxu0
        %v1958 = vpop.f32.mrb[0].mxu0
        %v1959 = vadd.f32 0.0, %v1958
        %v1960 = vpop.f32.mrb[0].mxu0
        %1961 = vmatprep.mubr.bf16.mxu0 0
        %1962 = vmatmul.mubr.bf16.gmra.mrb[0].mxu0 %v1758
        %v1963 = vpop.f32.mrb[0].mxu0
        %v1964 = vadd.f32 0.0, %v1963
        %v1965 = vpop.f32.mrb[0].mxu0
        %v1966 = vpop.f32.mrb[0].mxu0
        %v1967 = vadd.f32 0.0, %v1966
        %v1968 = vpop.f32.mrb[0].mxu0
        %1969 = vmatprep.mubr.bf16.mxu0 0
        %1970 = vmatmul.mubr.bf16.gmra.mrb[0].mxu0 %v1759
        %v1971 = vpop.f32.mrb[0].mxu0
        %v1972 = vadd.f32 0.0, %v1971
        %v1973 = vpop.f32.mrb[0].mxu0
        %v1974 = vpop.f32.mrb[0].mxu0
        %v1975 = vadd.f32 0.0, %v1974
        %v1976 = vpop.f32.mrb[0].mxu0
        %1977 = vmatprep.mubr.bf16.mxu0 0
        %1978 = vmatmul.mubr.bf16.gmra.mrb[0].mxu0 %v1760
        %v1979 = vpop.f32.mrb[0].mxu0
        %v1980 = vadd.f32 0.0, %v1979
        %v1981 = vpop.f32.mrb[0].mxu0
        %v1982 = vpop.f32.mrb[0].mxu0
        %v1983 = vadd.f32 0.0, %v1982
        %v1984 = vpop.f32.mrb[0].mxu0
        %1985 = vdwg.mxu0
        %v2018 = vunpack.c.l.b16 %v1245
        %v2019 = vunpack.c.l.b16 %v1246
        %v2020 = vunpack.c.l.b16 %v1247
        %v2021 = vunpack.c.l.b16 %v1248
        %v2022 = vunpack.c.l.b16 %v1249
        %v2023 = vunpack.c.l.b16 %v1250
        %v2024 = vunpack.c.l.b16 %v1251
        %v2025 = vunpack.c.l.b16 %v1252
        %v2026 = vunpack.c.l.b16 %v1253
        %v2027 = vunpack.c.l.b16 %v1254
        %v2028 = vunpack.c.l.b16 %v1255
        %v2029 = vunpack.c.l.b16 %v1256
        %v2030 = vunpack.c.l.b16 %v1257
        %v2031 = vunpack.c.l.b16 %v1258
        %v2032 = vunpack.c.l.b16 %v1259
        %v2033 = vunpack.c.l.b16 %v1260
        %v2034 = vunpack.c.l.b16 %v1261
        %v2035 = vunpack.c.l.b16 %v1262
        %v2036 = vunpack.c.l.b16 %v1263
        %v2037 = vunpack.c.l.b16 %v1264
        %v2038 = vunpack.c.l.b16 %v1265
        %v2039 = vunpack.c.l.b16 %v1266
        %v2040 = vunpack.c.l.b16 %v1267
        %v2041 = vunpack.c.l.b16 %v1268
        %v2042 = vunpack.c.l.b16 %v1269
        %v2043 = vunpack.c.l.b16 %v1270
        %v2044 = vunpack.c.l.b16 %v1271
        %v2045 = vunpack.c.l.b16 %v1272
        %v2046 = vunpack.c.l.b16 %v1273
        %v2047 = vunpack.c.l.b16 %v1274
        %v2048 = vunpack.c.l.b16 %v1275
        %v2049 = vunpack.c.l.b16 %v1276
        %v2050 = vpack.c.b16 %v2019, %v2018
        %v2051 = vpack.c.b16 %v2021, %v2020
        %v2052 = vpack.c.b16 %v2023, %v2022
        %v2053 = vpack.c.b16 %v2025, %v2024
        %v2054 = vpack.c.b16 %v2027, %v2026
        %v2055 = vpack.c.b16 %v2029, %v2028
        %v2056 = vpack.c.b16 %v2031, %v2030
        %v2057 = vpack.c.b16 %v2033, %v2032
        %v2058 = vpack.c.b16 %v2035, %v2034
        %v2059 = vpack.c.b16 %v2037, %v2036
        %v2060 = vpack.c.b16 %v2039, %v2038
        %v2061 = vpack.c.b16 %v2041, %v2040
        %v2062 = vpack.c.b16 %v2043, %v2042
        %v2063 = vpack.c.b16 %v2045, %v2044
        %v2064 = vpack.c.b16 %v2047, %v2046
        %v2065 = vpack.c.b16 %v2049, %v2048
        %v2098 = vunpack.c.l.b16 %v1277
        %v2099 = vunpack.c.l.b16 %v1278
        %v2100 = vunpack.c.l.b16 %v1279
        %v2101 = vunpack.c.l.b16 %v1280
        %v2102 = vunpack.c.l.b16 %v1281
        %v2103 = vunpack.c.l.b16 %v1282
        %v2104 = vunpack.c.l.b16 %v1283
        %v2105 = vunpack.c.l.b16 %v1284
        %v2106 = vunpack.c.l.b16 %v1285
        %v2107 = vunpack.c.l.b16 %v1286
        %v2108 = vunpack.c.l.b16 %v1287
        %v2109 = vunpack.c.l.b16 %v1288
        %v2110 = vunpack.c.l.b16 %v1289
        %v2111 = vunpack.c.l.b16 %v1290
        %v2112 = vunpack.c.l.b16 %v1291
        %v2113 = vunpack.c.l.b16 %v1292
        %v2114 = vpack.c.b16 %v2099, %v2098
        %v2115 = vpack.c.b16 %v2101, %v2100
        %v2116 = vpack.c.b16 %v2103, %v2102
        %v2117 = vpack.c.b16 %v2105, %v2104
        %v2118 = vpack.c.b16 %v2107, %v2106
        %v2119 = vpack.c.b16 %v2109, %v2108
        %v2120 = vpack.c.b16 %v2111, %v2110
        %v2121 = vpack.c.b16 %v2113, %v2112
        %2130 = vmatprep.subr.bf16.mxu0 0
        %2131 = vmatpush1.bf16.msra.mxu0 %v2114
        %2132 = vmatprep.subr.bf16.mxu0 0
        %2133 = vmatpush1.bf16.msra.mxu0 %v2115
        %2134 = vmatprep.subr.bf16.mxu0 0
        %2135 = vmatpush1.bf16.msra.mxu0 %v2116
        %2136 = vmatprep.subr.bf16.mxu0 0
        %2137 = vmatpush1.bf16.msra.mxu0 %v2117
        %2138 = vmatprep.subr.bf16.mxu0 0
        %2139 = vmatpush1.bf16.msra.mxu0 %v2118
        %2140 = vmatprep.subr.bf16.mxu0 0
        %2141 = vmatpush1.bf16.msra.mxu0 %v2119
        %2142 = vmatprep.subr.bf16.mxu0 0
        %2143 = vmatpush1.bf16.msra.mxu0 %v2120
        %2144 = vmatprep.subr.bf16.mxu0 0
        %2145 = vmatpush1.bf16.msra.mxu0 %v2121
        %2146 = vmatprep.subr.bf16.mxu0 0
        %2147 = vmatpush1.bf16.msra.mxu0 0
        %2148 = vmatprep.subr.bf16.mxu0 0
        %2149 = vmatpush1.bf16.msra.mxu0 0
        %2150 = vmatprep.subr.bf16.mxu0 0
        %2151 = vmatpush1.bf16.msra.mxu0 0
        %2152 = vmatprep.subr.bf16.mxu0 0
        %2153 = vmatpush1.bf16.msra.mxu0 0
        %2154 = vmatprep.subr.bf16.mxu0 0
        %2155 = vmatpush1.bf16.msra.mxu0 0
        %2156 = vmatprep.subr.bf16.mxu0 0
        %2157 = vmatpush1.bf16.msra.mxu0 0
        %2158 = vmatprep.subr.bf16.mxu0 0
        %2159 = vmatpush1.bf16.msra.mxu0 0
        %2160 = vmatprep.subr.bf16.mxu0 0
        %2161 = vmatpush1.bf16.msra.mxu0 0
        %2162 = vmatprep.mubr.bf16.mxu0 0
        %2163 = vmatmul.mubr.bf16.gmra.mrb[0].mxu0 %v2050
        %v2164 = vpop.f32.mrb[0].mxu0
        %v2165 = vadd.f32 %v1860, %v2164
        %v2166 = vpop.f32.mrb[0].mxu0
        %v2167 = vpop.f32.mrb[0].mxu0
        %v2168 = vadd.f32 %v1863, %v2167
        %v2169 = vpop.f32.mrb[0].mxu0
        %2170 = vmatprep.mubr.bf16.mxu0 0
        %2171 = vmatmul.mubr.bf16.gmra.mrb[0].mxu0 %v2051
        %v2172 = vpop.f32.mrb[0].mxu0
        %v2173 = vadd.f32 %v1868, %v2172
        %v2174 = vpop.f32.mrb[0].mxu0
        %v2175 = vpop.f32.mrb[0].mxu0
        %v2176 = vadd.f32 %v1871, %v2175
        %v2177 = vpop.f32.mrb[0].mxu0
        %2178 = vmatprep.mubr.bf16.mxu0 0
        %2179 = vmatmul.mubr.bf16.gmra.mrb[0].mxu0 %v2052
        %v2180 = vpop.f32.mrb[0].mxu0
        %v2181 = vadd.f32 %v1876, %v2180
        %v2182 = vpop.f32.mrb[0].mxu0
        %v2183 = vpop.f32.mrb[0].mxu0
        %v2184 = vadd.f32 %v1879, %v2183
        %v2185 = vpop.f32.mrb[0].mxu0
        %2186 = vmatprep.mubr.bf16.mxu0 0
        %2187 = vmatmul.mubr.bf16.gmra.mrb[0].mxu0 %v2053
        %v2188 = vpop.f32.mrb[0].mxu0
        %v2189 = vadd.f32 %v1884, %v2188
        %v2190 = vpop.f32.mrb[0].mxu0
        %v2191 = vpop.f32.mrb[0].mxu0
        %v2192 = vadd.f32 %v1887, %v2191
        %v2193 = vpop.f32.mrb[0].mxu0
        %2194 = vmatprep.mubr.bf16.mxu0 0
        %2195 = vmatmul.mubr.bf16.gmra.mrb[0].mxu0 %v2054
        %v2196 = vpop.f32.mrb[0].mxu0
        %v2197 = vadd.f32 %v1892, %v2196
        %v2198 = vpop.f32.mrb[0].mxu0
        %v2199 = vpop.f32.mrb[0].mxu0
        %v2200 = vadd.f32 %v1895, %v2199
        %v2201 = vpop.f32.mrb[0].mxu0
        %2202 = vmatprep.mubr.bf16.mxu0 0
        %2203 = vmatmul.mubr.bf16.gmra.mrb[0].mxu0 %v2055
        %v2204 = vpop.f32.mrb[0].mxu0
        %v2205 = vadd.f32 %v1900, %v2204
        %v2206 = vpop.f32.mrb[0].mxu0
        %v2207 = vpop.f32.mrb[0].mxu0
        %v2208 = vadd.f32 %v1903, %v2207
        %v2209 = vpop.f32.mrb[0].mxu0
        %2210 = vmatprep.mubr.bf16.mxu0 0
        %2211 = vmatmul.mubr.bf16.gmra.mrb[0].mxu0 %v2056
        %v2212 = vpop.f32.mrb[0].mxu0
        %v2213 = vadd.f32 %v1908, %v2212
        %v2214 = vpop.f32.mrb[0].mxu0
        %v2215 = vpop.f32.mrb[0].mxu0
        %v2216 = vadd.f32 %v1911, %v2215
        %v2217 = vpop.f32.mrb[0].mxu0
        %2218 = vmatprep.mubr.bf16.mxu0 0
        %2219 = vmatmul.mubr.bf16.gmra.mrb[0].mxu0 %v2057
        %v2220 = vpop.f32.mrb[0].mxu0
        %v2221 = vadd.f32 %v1916, %v2220
        %v2222 = vpop.f32.mrb[0].mxu0
        %v2223 = vpop.f32.mrb[0].mxu0
        %v2224 = vadd.f32 %v1919, %v2223
        %v2225 = vpop.f32.mrb[0].mxu0
        %2226 = vmatprep.mubr.bf16.mxu0 0
        %2227 = vmatmul.mubr.bf16.gmra.mrb[0].mxu0 %v2058
        %v2228 = vpop.f32.mrb[0].mxu0
        %v2229 = vadd.f32 %v1924, %v2228
        %v2230 = vpop.f32.mrb[0].mxu0
        %v2231 = vpop.f32.mrb[0].mxu0
        %v2232 = vadd.f32 %v1927, %v2231
        %v2233 = vpop.f32.mrb[0].mxu0
        %2234 = vmatprep.mubr.bf16.mxu0 0
        %2235 = vmatmul.mubr.bf16.gmra.mrb[0].mxu0 %v2059
        %v2236 = vpop.f32.mrb[0].mxu0
        %v2237 = vadd.f32 %v1932, %v2236
        %v2238 = vpop.f32.mrb[0].mxu0
        %v2239 = vpop.f32.mrb[0].mxu0
        %v2240 = vadd.f32 %v1935, %v2239
        %v2241 = vpop.f32.mrb[0].mxu0
        %2242 = vmatprep.mubr.bf16.mxu0 0
        %2243 = vmatmul.mubr.bf16.gmra.mrb[0].mxu0 %v2060
        %v2244 = vpop.f32.mrb[0].mxu0
        %v2245 = vadd.f32 %v1940, %v2244
        %v2246 = vpop.f32.mrb[0].mxu0
        %v2247 = vpop.f32.mrb[0].mxu0
        %v2248 = vadd.f32 %v1943, %v2247
        %v2249 = vpop.f32.mrb[0].mxu0
        %2250 = vmatprep.mubr.bf16.mxu0 0
        %2251 = vmatmul.mubr.bf16.gmra.mrb[0].mxu0 %v2061
        %v2252 = vpop.f32.mrb[0].mxu0
        %v2253 = vadd.f32 %v1948, %v2252
        %v2254 = vpop.f32.mrb[0].mxu0
        %v2255 = vpop.f32.mrb[0].mxu0
        %v2256 = vadd.f32 %v1951, %v2255
        %v2257 = vpop.f32.mrb[0].mxu0
        %2258 = vmatprep.mubr.bf16.mxu0 0
        %2259 = vmatmul.mubr.bf16.gmra.mrb[0].mxu0 %v2062
        %v2260 = vpop.f32.mrb[0].mxu0
        %v2261 = vadd.f32 %v1956, %v2260
        %v2262 = vpop.f32.mrb[0].mxu0
        %v2263 = vpop.f32.mrb[0].mxu0
        %v2264 = vadd.f32 %v1959, %v2263
        %v2265 = vpop.f32.mrb[0].mxu0
        %2266 = vmatprep.mubr.bf16.mxu0 0
        %2267 = vmatmul.mubr.bf16.gmra.mrb[0].mxu0 %v2063
        %v2268 = vpop.f32.mrb[0].mxu0
        %v2269 = vadd.f32 %v1964, %v2268
        %v2270 = vpop.f32.mrb[0].mxu0
        %v2271 = vpop.f32.mrb[0].mxu0
        %v2272 = vadd.f32 %v1967, %v2271
        %v2273 = vpop.f32.mrb[0].mxu0
        %2274 = vmatprep.mubr.bf16.mxu0 0
        %2275 = vmatmul.mubr.bf16.gmra.mrb[0].mxu0 %v2064
        %v2276 = vpop.f32.mrb[0].mxu0
        %v2277 = vadd.f32 %v1972, %v2276
        %v2278 = vpop.f32.mrb[0].mxu0
        %v2279 = vpop.f32.mrb[0].mxu0
        %v2280 = vadd.f32 %v1975, %v2279
        %v2281 = vpop.f32.mrb[0].mxu0
        %2282 = vmatprep.mubr.bf16.mxu0 0
        %2283 = vmatmul.mubr.bf16.gmra.mrb[0].mxu0 %v2065
        %v2284 = vpop.f32.mrb[0].mxu0
        %v2285 = vadd.f32 %v1980, %v2284
        %v2286 = vpop.f32.mrb[0].mxu0
        %v2287 = vpop.f32.mrb[0].mxu0
        %v2288 = vadd.f32 %v1983, %v2287
        %v2289 = vpop.f32.mrb[0].mxu0
        %2290 = vdwg.mxu0
        %v2291 = vld [vmem:[#allocation2] sm:$0xe]
        %v2292 = vld [vmem:[#allocation2 + $0xc] sm:$0xe]
        %v2293 = vld [vmem:[#allocation2 + $0x18] sm:$0xe]
        %v2294 = vld [vmem:[#allocation2 + $0x24] sm:$0xe]
        %v2295 = vld [vmem:[#allocation2 + $0x30] sm:$0xe]
        %v2296 = vld [vmem:[#allocation2 + $0x3c] sm:$0xe]
        %v2297 = vld [vmem:[#allocation2 + $0x48] sm:$0xe]
        %v2298 = vld [vmem:[#allocation2 + $0x54] sm:$0xe]
        %v2299 = vld [vmem:[#allocation2 + $0x60] sm:$0xe]
        %v2300 = vld [vmem:[#allocation2 + $0x6c] sm:$0xe]
        %v2301 = vld [vmem:[#allocation2 + $0x78] sm:$0xe]
        %v2302 = vld [vmem:[#allocation2 + $0x84] sm:$0xe]
        %v2303 = vld [vmem:[#allocation2 + $0x90] sm:$0xe]
        %v2304 = vld [vmem:[#allocation2 + $0x9c] sm:$0xe]
        %v2305 = vld [vmem:[#allocation2 + $0xa8] sm:$0xe]
        %v2306 = vld [vmem:[#allocation2 + $0xb4] sm:$0xe]
        %vm2339 = vcmask 1042432
        %vm2340 = vcmask 1046532
        %vm2341 = vmor %vm2339, %vm2340
        %v2342 = vrot.slane %v2291, 5
        %v2343 = vrot.slane %v2342, 4
        %v2344 = vrot.slane %v1246, 5
        %v2345 = vsel %vm2341, %v2343, %v2344
        %v2346 = vrot.slane %v2344, 4
        %v2347 = vrot.slane %v1293, 5
        %v2348 = vsel %vm2341, %v2346, %v2347
        %v2349 = vrot.slane %v2292, 5
        %v2350 = vrot.slane %v2349, 4
        %v2351 = vrot.slane %v1248, 5
        %v2352 = vsel %vm2341, %v2350, %v2351
        %v2353 = vrot.slane %v2351, 4
        %v2354 = vrot.slane %v1294, 5
        %v2355 = vsel %vm2341, %v2353, %v2354
        %v2356 = vrot.slane %v2293, 5
        %v2357 = vrot.slane %v2356, 4
        %v2358 = vrot.slane %v1250, 5
        %v2359 = vsel %vm2341, %v2357, %v2358
        %v2360 = vrot.slane %v2358, 4
        %v2361 = vrot.slane %v1295, 5
        %v2362 = vsel %vm2341, %v2360, %v2361
        %v2363 = vrot.slane %v2294, 5
        %v2364 = vrot.slane %v2363, 4
        %v2365 = vrot.slane %v1252, 5
        %v2366 = vsel %vm2341, %v2364, %v2365
        %v2367 = vrot.slane %v2365, 4
        %v2368 = vrot.slane %v1296, 5
        %v2369 = vsel %vm2341, %v2367, %v2368
        %v2370 = vrot.slane %v2295, 5
        %v2371 = vrot.slane %v2370, 4
        %v2372 = vrot.slane %v1254, 5
        %v2373 = vsel %vm2341, %v2371, %v2372
        %v2374 = vrot.slane %v2372, 4
        %v2375 = vrot.slane %v1297, 5
        %v2376 = vsel %vm2341, %v2374, %v2375
        %v2377 = vrot.slane %v2296, 5
        %v2378 = vrot.slane %v2377, 4
        %v2379 = vrot.slane %v1256, 5
        %v2380 = vsel %vm2341, %v2378, %v2379
        %v2381 = vrot.slane %v2379, 4
        %v2382 = vrot.slane %v1298, 5
        %v2383 = vsel %vm2341, %v2381, %v2382
        %v2384 = vrot.slane %v2297, 5
        %v2385 = vrot.slane %v2384, 4
        %v2386 = vrot.slane %v1258, 5
        %v2387 = vsel %vm2341, %v2385, %v2386
        %v2388 = vrot.slane %v2386, 4
        %v2389 = vrot.slane %v1299, 5
        %v2390 = vsel %vm2341, %v2388, %v2389
        %v2391 = vrot.slane %v2298, 5
        %v2392 = vrot.slane %v2391, 4
        %v2393 = vrot.slane %v1260, 5
        %v2394 = vsel %vm2341, %v2392, %v2393
        %v2395 = vrot.slane %v2393, 4
        %v2396 = vrot.slane %v1300, 5
        %v2397 = vsel %vm2341, %v2395, %v2396
        %v2398 = vrot.slane %v2299, 5
        %v2399 = vrot.slane %v2398, 4
        %v2400 = vrot.slane %v1262, 5
        %v2401 = vsel %vm2341, %v2399, %v2400
        %v2402 = vrot.slane %v2400, 4
        %v2403 = vrot.slane %v1301, 5
        %v2404 = vsel %vm2341, %v2402, %v2403
        %v2405 = vrot.slane %v2300, 5
        %v2406 = vrot.slane %v2405, 4
        %v2407 = vrot.slane %v1264, 5
        %v2408 = vsel %vm2341, %v2406, %v2407
        %v2409 = vrot.slane %v2407, 4
        %v2410 = vrot.slane %v1302, 5
        %v2411 = vsel %vm2341, %v2409, %v2410
        %v2412 = vrot.slane %v2301, 5
        %v2413 = vrot.slane %v2412, 4
        %v2414 = vrot.slane %v1266, 5
        %v2415 = vsel %vm2341, %v2413, %v2414
        %v2416 = vrot.slane %v2414, 4
        %v2417 = vrot.slane %v1303, 5
        %v2418 = vsel %vm2341, %v2416, %v2417
        %v2419 = vrot.slane %v2302, 5
        %v2420 = vrot.slane %v2419, 4
        %v2421 = vrot.slane %v1268, 5
        %v2422 = vsel %vm2341, %v2420, %v2421
        %v2423 = vrot.slane %v2421, 4
        %v2424 = vrot.slane %v1304, 5
        %v2425 = vsel %vm2341, %v2423, %v2424
        %v2426 = vrot.slane %v2303, 5
        %v2427 = vrot.slane %v2426, 4
        %v2428 = vrot.slane %v1270, 5
        %v2429 = vsel %vm2341, %v2427, %v2428
        %v2430 = vrot.slane %v2428, 4
        %v2431 = vrot.slane %v1305, 5
        %v2432 = vsel %vm2341, %v2430, %v2431
        %v2433 = vrot.slane %v2304, 5
        %v2434 = vrot.slane %v2433, 4
        %v2435 = vrot.slane %v1272, 5
        %v2436 = vsel %vm2341, %v2434, %v2435
        %v2437 = vrot.slane %v2435, 4
        %v2438 = vrot.slane %v1306, 5
        %v2439 = vsel %vm2341, %v2437, %v2438
        %v2440 = vrot.slane %v2305, 5
        %v2441 = vrot.slane %v2440, 4
        %v2442 = vrot.slane %v1274, 5
        %v2443 = vsel %vm2341, %v2441, %v2442
        %v2444 = vrot.slane %v2442, 4
        %v2445 = vrot.slane %v1307, 5
        %v2446 = vsel %vm2341, %v2444, %v2445
        %v2447 = vrot.slane %v2306, 5
        %v2448 = vrot.slane %v2447, 4
        %v2449 = vrot.slane %v1276, 5
        %v2450 = vsel %vm2341, %v2448, %v2449
        %v2451 = vrot.slane %v2449, 4
        %v2452 = vrot.slane %v1308, 5
        %v2453 = vsel %vm2341, %v2451, %v2452
        %s2454 = scalar_lea.vmem [#allocation8], 128
        %v2455 = vld [vmem:[%s2454] sm:$0xf]
        %v2456 = vld [vmem:[%s2454 + $0x4] sm:$0xf]
        %v2457 = vld [vmem:[%s2454 + $0x8] sm:$0xf]
        %v2458 = vld [vmem:[%s2454 + $0xc] sm:$0xf]
        %v2459 = vld [vmem:[%s2454 + $0x10] sm:$0xf]
        %v2460 = vld [vmem:[%s2454 + $0x14] sm:$0xf]
        %v2461 = vld [vmem:[%s2454 + $0x18] sm:$0xf]
        %v2462 = vld [vmem:[%s2454 + $0x1c] sm:$0xf]
        %v2463 = vld [vmem:[%s2454 + $0x20] sm:$0xf]
        %v2464 = vld [vmem:[%s2454 + $0x24] sm:$0xf]
        %v2465 = vld [vmem:[%s2454 + $0x28] sm:$0xf]
        %v2466 = vld [vmem:[%s2454 + $0x2c] sm:$0xf]
        %v2467 = vld [vmem:[%s2454 + $0x30] sm:$0xf]
        %v2468 = vld [vmem:[%s2454 + $0x34] sm:$0xf]
        %v2469 = vld [vmem:[%s2454 + $0x38] sm:$0xf]
        %v2470 = vld [vmem:[%s2454 + $0x3c] sm:$0xf]
        %v2471 = vunpack.c.l.b16 %v2345
        %v2472 = vunpack.c.l.b16 %v2348
        %v2473 = vunpack.c.l.b16 %v2352
        %v2474 = vunpack.c.l.b16 %v2355
        %v2475 = vunpack.c.l.b16 %v2359
        %v2476 = vunpack.c.l.b16 %v2362
        %v2477 = vunpack.c.l.b16 %v2366
        %v2478 = vunpack.c.l.b16 %v2369
        %v2479 = vunpack.c.l.b16 %v2373
        %v2480 = vunpack.c.l.b16 %v2376
        %v2481 = vunpack.c.l.b16 %v2380
        %v2482 = vunpack.c.l.b16 %v2383
        %v2483 = vunpack.c.l.b16 %v2387
        %v2484 = vunpack.c.l.b16 %v2390
        %v2485 = vunpack.c.l.b16 %v2394
        %v2486 = vunpack.c.l.b16 %v2397
        %v2487 = vunpack.c.l.b16 %v2401
        %v2488 = vunpack.c.l.b16 %v2404
        %v2489 = vunpack.c.l.b16 %v2408
        %v2490 = vunpack.c.l.b16 %v2411
        %v2491 = vunpack.c.l.b16 %v2415
        %v2492 = vunpack.c.l.b16 %v2418
        %v2493 = vunpack.c.l.b16 %v2422
        %v2494 = vunpack.c.l.b16 %v2425
        %v2495 = vunpack.c.l.b16 %v2429
        %v2496 = vunpack.c.l.b16 %v2432
        %v2497 = vunpack.c.l.b16 %v2436
        %v2498 = vunpack.c.l.b16 %v2439
        %v2499 = vunpack.c.l.b16 %v2443
        %v2500 = vunpack.c.l.b16 %v2446
        %v2501 = vunpack.c.l.b16 %v2450
        %v2502 = vunpack.c.l.b16 %v2453
        %v2503 = vpack.c.b16 %v2472, %v2471
        %v2504 = vpack.c.b16 %v2474, %v2473
        %v2505 = vpack.c.b16 %v2476, %v2475
        %v2506 = vpack.c.b16 %v2478, %v2477
        %v2507 = vpack.c.b16 %v2480, %v2479
        %v2508 = vpack.c.b16 %v2482, %v2481
        %v2509 = vpack.c.b16 %v2484, %v2483
        %v2510 = vpack.c.b16 %v2486, %v2485
        %v2511 = vpack.c.b16 %v2488, %v2487
        %v2512 = vpack.c.b16 %v2490, %v2489
        %v2513 = vpack.c.b16 %v2492, %v2491
        %v2514 = vpack.c.b16 %v2494, %v2493
        %v2515 = vpack.c.b16 %v2496, %v2495
        %v2516 = vpack.c.b16 %v2498, %v2497
        %v2517 = vpack.c.b16 %v2500, %v2499
        %v2518 = vpack.c.b16 %v2502, %v2501
        %v2551 = vunpack.c.l.b16 %v2455
        %v2552 = vunpack.c.l.b16 %v2456
        %v2553 = vunpack.c.l.b16 %v2457
        %v2554 = vunpack.c.l.b16 %v2458
        %v2555 = vunpack.c.l.b16 %v2459
        %v2556 = vunpack.c.l.b16 %v2460
        %v2557 = vunpack.c.l.b16 %v2461
        %v2558 = vunpack.c.l.b16 %v2462
        %v2559 = vunpack.c.l.b16 %v2463
        %v2560 = vunpack.c.l.b16 %v2464
        %v2561 = vunpack.c.l.b16 %v2465
        %v2562 = vunpack.c.l.b16 %v2466
        %v2563 = vunpack.c.l.b16 %v2467
        %v2564 = vunpack.c.l.b16 %v2468
        %v2565 = vunpack.c.l.b16 %v2469
        %v2566 = vunpack.c.l.b16 %v2470
        %v2567 = vpack.c.b16 %v2552, %v2551
        %v2568 = vpack.c.b16 %v2554, %v2553
        %v2569 = vpack.c.b16 %v2556, %v2555
        %v2570 = vpack.c.b16 %v2558, %v2557
        %v2571 = vpack.c.b16 %v2560, %v2559
        %v2572 = vpack.c.b16 %v2562, %v2561
        %v2573 = vpack.c.b16 %v2564, %v2563
        %v2574 = vpack.c.b16 %v2566, %v2565
        %2583 = vmatprep.subr.bf16.mxu0 0
        %2584 = vmatpush1.bf16.msra.mxu0 %v2567
        %2585 = vmatprep.subr.bf16.mxu0 0
        %2586 = vmatpush1.bf16.msra.mxu0 %v2568
        %2587 = vmatprep.subr.bf16.mxu0 0
        %2588 = vmatpush1.bf16.msra.mxu0 %v2569
        %2589 = vmatprep.subr.bf16.mxu0 0
        %2590 = vmatpush1.bf16.msra.mxu0 %v2570
        %2591 = vmatprep.subr.bf16.mxu0 0
        %2592 = vmatpush1.bf16.msra.mxu0 %v2571
        %2593 = vmatprep.subr.bf16.mxu0 0
        %2594 = vmatpush1.bf16.msra.mxu0 %v2572
        %2595 = vmatprep.subr.bf16.mxu0 0
        %2596 = vmatpush1.bf16.msra.mxu0 %v2573
        %2597 = vmatprep.subr.bf16.mxu0 0
        %2598 = vmatpush1.bf16.msra.mxu0 %v2574
        %2599 = vmatprep.subr.bf16.mxu0 0
        %2600 = vmatpush1.bf16.msra.mxu0 0
        %2601 = vmatprep.subr.bf16.mxu0 0
        %2602 = vmatpush1.bf16.msra.mxu0 0
        %2603 = vmatprep.subr.bf16.mxu0 0
        %2604 = vmatpush1.bf16.msra.mxu0 0
        %2605 = vmatprep.subr.bf16.mxu0 0
        %2606 = vmatpush1.bf16.msra.mxu0 0
        %2607 = vmatprep.subr.bf16.mxu0 0
        %2608 = vmatpush1.bf16.msra.mxu0 0
        %2609 = vmatprep.subr.bf16.mxu0 0
        %2610 = vmatpush1.bf16.msra.mxu0 0
        %2611 = vmatprep.subr.bf16.mxu0 0
        %2612 = vmatpush1.bf16.msra.mxu0 0
        %2613 = vmatprep.subr.bf16.mxu0 0
        %2614 = vmatpush1.bf16.msra.mxu0 0
        %2615 = vmatprep.mubr.bf16.mxu0 0
        %2616 = vmatmul.mubr.bf16.gmra.mrb[0].mxu0 %v2503
        %v2617 = vpop.f32.mrb[0].mxu0
        %v2618 = vadd.f32 0.0, %v2617
        %v2619 = vpop.f32.mrb[0].mxu0
        %v2620 = vpop.f32.mrb[0].mxu0
        %v2621 = vadd.f32 0.0, %v2620
        %v2622 = vpop.f32.mrb[0].mxu0
        %2623 = vmatprep.mubr.bf16.mxu0 0
        %2624 = vmatmul.mubr.bf16.gmra.mrb[0].mxu0 %v2504
        %v2625 = vpop.f32.mrb[0].mxu0
        %v2626 = vadd.f32 0.0, %v2625
        %v2627 = vpop.f32.mrb[0].mxu0
        %v2628 = vpop.f32.mrb[0].mxu0
        %v2629 = vadd.f32 0.0, %v2628
        %v2630 = vpop.f32.mrb[0].mxu0
        %2631 = vmatprep.mubr.bf16.mxu0 0
        %2632 = vmatmul.mubr.bf16.gmra.mrb[0].mxu0 %v2505
        %v2633 = vpop.f32.mrb[0].mxu0
        %v2634 = vadd.f32 0.0, %v2633
        %v2635 = vpop.f32.mrb[0].mxu0
        %v2636 = vpop.f32.mrb[0].mxu0
        %v2637 = vadd.f32 0.0, %v2636
        %v2638 = vpop.f32.mrb[0].mxu0
        %2639 = vmatprep.mubr.bf16.mxu0 0
        %2640 = vmatmul.mubr.bf16.gmra.mrb[0].mxu0 %v2506
        %v2641 = vpop.f32.mrb[0].mxu0
        %v2642 = vadd.f32 0.0, %v2641
        %v2643 = vpop.f32.mrb[0].mxu0
        %v2644 = vpop.f32.mrb[0].mxu0
        %v2645 = vadd.f32 0.0, %v2644
        %v2646 = vpop.f32.mrb[0].mxu0
        %2647 = vmatprep.mubr.bf16.mxu0 0
        %2648 = vmatmul.mubr.bf16.gmra.mrb[0].mxu0 %v2507
        %v2649 = vpop.f32.mrb[0].mxu0
        %v2650 = vadd.f32 0.0, %v2649
        %v2651 = vpop.f32.mrb[0].mxu0
        %v2652 = vpop.f32.mrb[0].mxu0
        %v2653 = vadd.f32 0.0, %v2652
        %v2654 = vpop.f32.mrb[0].mxu0
        %2655 = vmatprep.mubr.bf16.mxu0 0
        %2656 = vmatmul.mubr.bf16.gmra.mrb[0].mxu0 %v2508
        %v2657 = vpop.f32.mrb[0].mxu0
        %v2658 = vadd.f32 0.0, %v2657
        %v2659 = vpop.f32.mrb[0].mxu0
        %v2660 = vpop.f32.mrb[0].mxu0
        %v2661 = vadd.f32 0.0, %v2660
        %v2662 = vpop.f32.mrb[0].mxu0
        %2663 = vmatprep.mubr.bf16.mxu0 0
        %2664 = vmatmul.mubr.bf16.gmra.mrb[0].mxu0 %v2509
        %v2665 = vpop.f32.mrb[0].mxu0
        %v2666 = vadd.f32 0.0, %v2665
        %v2667 = vpop.f32.mrb[0].mxu0
        %v2668 = vpop.f32.mrb[0].mxu0
        %v2669 = vadd.f32 0.0, %v2668
        %v2670 = vpop.f32.mrb[0].mxu0
        %2671 = vmatprep.mubr.bf16.mxu0 0
        %2672 = vmatmul.mubr.bf16.gmra.mrb[0].mxu0 %v2510
        %v2673 = vpop.f32.mrb[0].mxu0
        %v2674 = vadd.f32 0.0, %v2673
        %v2675 = vpop.f32.mrb[0].mxu0
        %v2676 = vpop.f32.mrb[0].mxu0
        %v2677 = vadd.f32 0.0, %v2676
        %v2678 = vpop.f32.mrb[0].mxu0
        %2679 = vmatprep.mubr.bf16.mxu0 0
        %2680 = vmatmul.mubr.bf16.gmra.mrb[0].mxu0 %v2511
        %v2681 = vpop.f32.mrb[0].mxu0
        %v2682 = vadd.f32 0.0, %v2681
        %v2683 = vpop.f32.mrb[0].mxu0
        %v2684 = vpop.f32.mrb[0].mxu0
        %v2685 = vadd.f32 0.0, %v2684
        %v2686 = vpop.f32.mrb[0].mxu0
        %2687 = vmatprep.mubr.bf16.mxu0 0
        %2688 = vmatmul.mubr.bf16.gmra.mrb[0].mxu0 %v2512
        %v2689 = vpop.f32.mrb[0].mxu0
        %v2690 = vadd.f32 0.0, %v2689
        %v2691 = vpop.f32.mrb[0].mxu0
        %v2692 = vpop.f32.mrb[0].mxu0
        %v2693 = vadd.f32 0.0, %v2692
        %v2694 = vpop.f32.mrb[0].mxu0
        %2695 = vmatprep.mubr.bf16.mxu0 0
        %2696 = vmatmul.mubr.bf16.gmra.mrb[0].mxu0 %v2513
        %v2697 = vpop.f32.mrb[0].mxu0
        %v2698 = vadd.f32 0.0, %v2697
        %v2699 = vpop.f32.mrb[0].mxu0
        %v2700 = vpop.f32.mrb[0].mxu0
        %v2701 = vadd.f32 0.0, %v2700
        %v2702 = vpop.f32.mrb[0].mxu0
        %2703 = vmatprep.mubr.bf16.mxu0 0
        %2704 = vmatmul.mubr.bf16.gmra.mrb[0].mxu0 %v2514
        %v2705 = vpop.f32.mrb[0].mxu0
        %v2706 = vadd.f32 0.0, %v2705
        %v2707 = vpop.f32.mrb[0].mxu0
        %v2708 = vpop.f32.mrb[0].mxu0
        %v2709 = vadd.f32 0.0, %v2708
        %v2710 = vpop.f32.mrb[0].mxu0
        %2711 = vmatprep.mubr.bf16.mxu0 0
        %2712 = vmatmul.mubr.bf16.gmra.mrb[0].mxu0 %v2515
        %v2713 = vpop.f32.mrb[0].mxu0
        %v2714 = vadd.f32 0.0, %v2713
        %v2715 = vpop.f32.mrb[0].mxu0
        %v2716 = vpop.f32.mrb[0].mxu0
        %v2717 = vadd.f32 0.0, %v2716
        %v2718 = vpop.f32.mrb[0].mxu0
        %2719 = vmatprep.mubr.bf16.mxu0 0
        %2720 = vmatmul.mubr.bf16.gmra.mrb[0].mxu0 %v2516
        %v2721 = vpop.f32.mrb[0].mxu0
        %v2722 = vadd.f32 0.0, %v2721
        %v2723 = vpop.f32.mrb[0].mxu0
        %v2724 = vpop.f32.mrb[0].mxu0
        %v2725 = vadd.f32 0.0, %v2724
        %v2726 = vpop.f32.mrb[0].mxu0
        %2727 = vmatprep.mubr.bf16.mxu0 0
        %2728 = vmatmul.mubr.bf16.gmra.mrb[0].mxu0 %v2517
        %v2729 = vpop.f32.mrb[0].mxu0
        %v2730 = vadd.f32 0.0, %v2729
        %v2731 = vpop.f32.mrb[0].mxu0
        %v2732 = vpop.f32.mrb[0].mxu0
        %v2733 = vadd.f32 0.0, %v2732
        %v2734 = vpop.f32.mrb[0].mxu0
        %2735 = vmatprep.mubr.bf16.mxu0 0
        %2736 = vmatmul.mubr.bf16.gmra.mrb[0].mxu0 %v2518
        %v2737 = vpop.f32.mrb[0].mxu0
        %v2738 = vadd.f32 0.0, %v2737
        %v2739 = vpop.f32.mrb[0].mxu0
        %v2740 = vpop.f32.mrb[0].mxu0
        %v2741 = vadd.f32 0.0, %v2740
        %v2742 = vpop.f32.mrb[0].mxu0
        %2743 = vdwg.mxu0
        %v2744 = vadd.f32 %v2165, %v2618
        %v2745 = vadd.f32 %v2168, %v2621
        %v2746 = vadd.f32 %v2173, %v2626
        %v2747 = vadd.f32 %v2176, %v2629
        %v2748 = vadd.f32 %v2181, %v2634
        %v2749 = vadd.f32 %v2184, %v2637
        %v2750 = vadd.f32 %v2189, %v2642
        %v2751 = vadd.f32 %v2192, %v2645
        %v2752 = vadd.f32 %v2197, %v2650
        %v2753 = vadd.f32 %v2200, %v2653
        %v2754 = vadd.f32 %v2205, %v2658
        %v2755 = vadd.f32 %v2208, %v2661
        %v2756 = vadd.f32 %v2213, %v2666
        %v2757 = vadd.f32 %v2216, %v2669
        %v2758 = vadd.f32 %v2221, %v2674
        %v2759 = vadd.f32 %v2224, %v2677
        %v2760 = vadd.f32 %v2229, %v2682
        %v2761 = vadd.f32 %v2232, %v2685
        %v2762 = vadd.f32 %v2237, %v2690
        %v2763 = vadd.f32 %v2240, %v2693
        %v2764 = vadd.f32 %v2245, %v2698
        %v2765 = vadd.f32 %v2248, %v2701
        %v2766 = vadd.f32 %v2253, %v2706
        %v2767 = vadd.f32 %v2256, %v2709
        %v2768 = vadd.f32 %v2261, %v2714
        %v2769 = vadd.f32 %v2264, %v2717
        %v2770 = vadd.f32 %v2269, %v2722
        %v2771 = vadd.f32 %v2272, %v2725
        %v2772 = vadd.f32 %v2277, %v2730
        %v2773 = vadd.f32 %v2280, %v2733
        %v2774 = vadd.f32 %v2285, %v2738
        %v2775 = vadd.f32 %v2288, %v2741
        %v2776 = vld [vmem:[%s1127] sm:$0xf]
        %v2777 = vld [vmem:[%s1127 + $0x4] sm:$0xf]
        %v2778 = vld [vmem:[%s1127 + $0xc] sm:$0xf]
        %v2779 = vld [vmem:[%s1127 + $0x10] sm:$0xf]
        %v2780 = vld [vmem:[%s1127 + $0x18] sm:$0xf]
        %v2781 = vld [vmem:[%s1127 + $0x1c] sm:$0xf]
        %v2782 = vld [vmem:[%s1127 + $0x24] sm:$0xf]
        %v2783 = vld [vmem:[%s1127 + $0x28] sm:$0xf]
        %v2784 = vld [vmem:[%s1127 + $0x30] sm:$0xf]
        %v2785 = vld [vmem:[%s1127 + $0x34] sm:$0xf]
        %v2786 = vld [vmem:[%s1127 + $0x3c] sm:$0xf]
        %v2787 = vld [vmem:[%s1127 + $0x40] sm:$0xf]
        %v2788 = vld [vmem:[%s1127 + $0x48] sm:$0xf]
        %v2789 = vld [vmem:[%s1127 + $0x4c] sm:$0xf]
        %v2790 = vld [vmem:[%s1127 + $0x54] sm:$0xf]
        %v2791 = vld [vmem:[%s1127 + $0x58] sm:$0xf]
        %v2792 = vld [vmem:[%s1127 + $0x60] sm:$0xf]
        %v2793 = vld [vmem:[%s1127 + $0x64] sm:$0xf]
        %v2794 = vld [vmem:[%s1127 + $0x6c] sm:$0xf]
        %v2795 = vld [vmem:[%s1127 + $0x70] sm:$0xf]
        %v2796 = vld [vmem:[%s1127 + $0x78] sm:$0xf]
        %v2797 = vld [vmem:[%s1127 + $0x7c] sm:$0xf]
        %v2798 = vld [vmem:[%s1127 + $0x84] sm:$0xf]
        %v2799 = vld [vmem:[%s1127 + $0x88] sm:$0xf]
        %v2800 = vld [vmem:[%s1127 + $0x90] sm:$0xf]
        %v2801 = vld [vmem:[%s1127 + $0x94] sm:$0xf]
        %v2802 = vld [vmem:[%s1127 + $0x9c] sm:$0xf]
        %v2803 = vld [vmem:[%s1127 + $0xa0] sm:$0xf]
        %v2804 = vld [vmem:[%s1127 + $0xa8] sm:$0xf]
        %v2805 = vld [vmem:[%s1127 + $0xac] sm:$0xf]
        %v2806 = vld [vmem:[%s1127 + $0xb4] sm:$0xf]
        %v2807 = vld [vmem:[%s1127 + $0xb8] sm:$0xf]
        %s2808 = scalar_lea.vmem [#allocation8], 192
        %v2809 = vld [vmem:[%s2808] sm:$0xf]
        %v2810 = vld [vmem:[%s2808 + $0x4] sm:$0xf]
        %v2811 = vld [vmem:[%s2808 + $0x8] sm:$0xf]
        %v2812 = vld [vmem:[%s2808 + $0xc] sm:$0xf]
        %v2813 = vld [vmem:[%s2808 + $0x10] sm:$0xf]
        %v2814 = vld [vmem:[%s2808 + $0x14] sm:$0xf]
        %v2815 = vld [vmem:[%s2808 + $0x18] sm:$0xf]
        %v2816 = vld [vmem:[%s2808 + $0x1c] sm:$0xf]
        %v2817 = vld [vmem:[%s2808 + $0x20] sm:$0xf]
        %v2818 = vld [vmem:[%s2808 + $0x24] sm:$0xf]
        %v2819 = vld [vmem:[%s2808 + $0x28] sm:$0xf]
        %v2820 = vld [vmem:[%s2808 + $0x2c] sm:$0xf]
        %v2821 = vld [vmem:[%s2808 + $0x30] sm:$0xf]
        %v2822 = vld [vmem:[%s2808 + $0x34] sm:$0xf]
        %v2823 = vld [vmem:[%s2808 + $0x38] sm:$0xf]
        %v2824 = vld [vmem:[%s2808 + $0x3c] sm:$0xf]
        %v2857 = vunpack.c.l.b16 %v2776
        %v2858 = vunpack.c.l.b16 %v2777
        %v2859 = vunpack.c.l.b16 %v2778
        %v2860 = vunpack.c.l.b16 %v2779
        %v2861 = vunpack.c.l.b16 %v2780
        %v2862 = vunpack.c.l.b16 %v2781
        %v2863 = vunpack.c.l.b16 %v2782
        %v2864 = vunpack.c.l.b16 %v2783
        %v2865 = vunpack.c.l.b16 %v2784
        %v2866 = vunpack.c.l.b16 %v2785
        %v2867 = vunpack.c.l.b16 %v2786
        %v2868 = vunpack.c.l.b16 %v2787
        %v2869 = vunpack.c.l.b16 %v2788
        %v2870 = vunpack.c.l.b16 %v2789
        %v2871 = vunpack.c.l.b16 %v2790
        %v2872 = vunpack.c.l.b16 %v2791
        %v2873 = vunpack.c.l.b16 %v2792
        %v2874 = vunpack.c.l.b16 %v2793
        %v2875 = vunpack.c.l.b16 %v2794
        %v2876 = vunpack.c.l.b16 %v2795
        %v2877 = vunpack.c.l.b16 %v2796
        %v2878 = vunpack.c.l.b16 %v2797
        %v2879 = vunpack.c.l.b16 %v2798
        %v2880 = vunpack.c.l.b16 %v2799
        %v2881 = vunpack.c.l.b16 %v2800
        %v2882 = vunpack.c.l.b16 %v2801
        %v2883 = vunpack.c.l.b16 %v2802
        %v2884 = vunpack.c.l.b16 %v2803
        %v2885 = vunpack.c.l.b16 %v2804
        %v2886 = vunpack.c.l.b16 %v2805
        %v2887 = vunpack.c.l.b16 %v2806
        %v2888 = vunpack.c.l.b16 %v2807
        %v2889 = vpack.c.b16 %v2858, %v2857
        %v2890 = vpack.c.b16 %v2860, %v2859
        %v2891 = vpack.c.b16 %v2862, %v2861
        %v2892 = vpack.c.b16 %v2864, %v2863
        %v2893 = vpack.c.b16 %v2866, %v2865
        %v2894 = vpack.c.b16 %v2868, %v2867
        %v2895 = vpack.c.b16 %v2870, %v2869
        %v2896 = vpack.c.b16 %v2872, %v2871
        %v2897 = vpack.c.b16 %v2874, %v2873
        %v2898 = vpack.c.b16 %v2876, %v2875
        %v2899 = vpack.c.b16 %v2878, %v2877
        %v2900 = vpack.c.b16 %v2880, %v2879
        %v2901 = vpack.c.b16 %v2882, %v2881
        %v2902 = vpack.c.b16 %v2884, %v2883
        %v2903 = vpack.c.b16 %v2886, %v2885
        %v2904 = vpack.c.b16 %v2888, %v2887
        %v2937 = vunpack.c.l.b16 %v2809
        %v2938 = vunpack.c.l.b16 %v2810
        %v2939 = vunpack.c.l.b16 %v2811
        %v2940 = vunpack.c.l.b16 %v2812
        %v2941 = vunpack.c.l.b16 %v2813
        %v2942 = vunpack.c.l.b16 %v2814
        %v2943 = vunpack.c.l.b16 %v2815
        %v2944 = vunpack.c.l.b16 %v2816
        %v2945 = vunpack.c.l.b16 %v2817
        %v2946 = vunpack.c.l.b16 %v2818
        %v2947 = vunpack.c.l.b16 %v2819
        %v2948 = vunpack.c.l.b16 %v2820
        %v2949 = vunpack.c.l.b16 %v2821
        %v2950 = vunpack.c.l.b16 %v2822
        %v2951 = vunpack.c.l.b16 %v2823
        %v2952 = vunpack.c.l.b16 %v2824
        %v2953 = vpack.c.b16 %v2938, %v2937
        %v2954 = vpack.c.b16 %v2940, %v2939
        %v2955 = vpack.c.b16 %v2942, %v2941
        %v2956 = vpack.c.b16 %v2944, %v2943
        %v2957 = vpack.c.b16 %v2946, %v2945
        %v2958 = vpack.c.b16 %v2948, %v2947
        %v2959 = vpack.c.b16 %v2950, %v2949
        %v2960 = vpack.c.b16 %v2952, %v2951
        %2969 = vmatprep.subr.bf16.mxu0 0
        %2970 = vmatpush1.bf16.msra.mxu0 %v2953
        %2971 = vmatprep.subr.bf16.mxu0 0
        %2972 = vmatpush1.bf16.msra.mxu0 %v2954
        %2973 = vmatprep.subr.bf16.mxu0 0
        %2974 = vmatpush1.bf16.msra.mxu0 %v2955
        %2975 = vmatprep.subr.bf16.mxu0 0
        %2976 = vmatpush1.bf16.msra.mxu0 %v2956
        %2977 = vmatprep.subr.bf16.mxu0 0
        %2978 = vmatpush1.bf16.msra.mxu0 %v2957
        %2979 = vmatprep.subr.bf16.mxu0 0
        %2980 = vmatpush1.bf16.msra.mxu0 %v2958
        %2981 = vmatprep.subr.bf16.mxu0 0
        %2982 = vmatpush1.bf16.msra.mxu0 %v2959
        %2983 = vmatprep.subr.bf16.mxu0 0
        %2984 = vmatpush1.bf16.msra.mxu0 %v2960
        %2985 = vmatprep.subr.bf16.mxu0 0
        %2986 = vmatpush1.bf16.msra.mxu0 0
        %2987 = vmatprep.subr.bf16.mxu0 0
        %2988 = vmatpush1.bf16.msra.mxu0 0
        %2989 = vmatprep.subr.bf16.mxu0 0
        %2990 = vmatpush1.bf16.msra.mxu0 0
        %2991 = vmatprep.subr.bf16.mxu0 0
        %2992 = vmatpush1.bf16.msra.mxu0 0
        %2993 = vmatprep.subr.bf16.mxu0 0
        %2994 = vmatpush1.bf16.msra.mxu0 0
        %2995 = vmatprep.subr.bf16.mxu0 0
        %2996 = vmatpush1.bf16.msra.mxu0 0
        %2997 = vmatprep.subr.bf16.mxu0 0
        %2998 = vmatpush1.bf16.msra.mxu0 0
        %2999 = vmatprep.subr.bf16.mxu0 0
        %3000 = vmatpush1.bf16.msra.mxu0 0
        %3001 = vmatprep.mubr.bf16.mxu0 0
        %3002 = vmatmul.mubr.bf16.gmra.mrb[0].mxu0 %v2889
        %v3003 = vpop.f32.mrb[0].mxu0
        %v3004 = vadd.f32 0.0, %v3003
        %v3005 = vpop.f32.mrb[0].mxu0
        %v3006 = vpop.f32.mrb[0].mxu0
        %v3007 = vadd.f32 0.0, %v3006
        %v3008 = vpop.f32.mrb[0].mxu0
        %3009 = vmatprep.mubr.bf16.mxu0 0
        %3010 = vmatmul.mubr.bf16.gmra.mrb[0].mxu0 %v2890
        %v3011 = vpop.f32.mrb[0].mxu0
        %v3012 = vadd.f32 0.0, %v3011
        %v3013 = vpop.f32.mrb[0].mxu0
        %v3014 = vpop.f32.mrb[0].mxu0
        %v3015 = vadd.f32 0.0, %v3014
        %v3016 = vpop.f32.mrb[0].mxu0
        %3017 = vmatprep.mubr.bf16.mxu0 0
        %3018 = vmatmul.mubr.bf16.gmra.mrb[0].mxu0 %v2891
        %v3019 = vpop.f32.mrb[0].mxu0
        %v3020 = vadd.f32 0.0, %v3019
        %v3021 = vpop.f32.mrb[0].mxu0
        %v3022 = vpop.f32.mrb[0].mxu0
        %v3023 = vadd.f32 0.0, %v3022
        %v3024 = vpop.f32.mrb[0].mxu0
        %3025 = vmatprep.mubr.bf16.mxu0 0
        %3026 = vmatmul.mubr.bf16.gmra.mrb[0].mxu0 %v2892
        %v3027 = vpop.f32.mrb[0].mxu0
        %v3028 = vadd.f32 0.0, %v3027
        %v3029 = vpop.f32.mrb[0].mxu0
        %v3030 = vpop.f32.mrb[0].mxu0
        %v3031 = vadd.f32 0.0, %v3030
        %v3032 = vpop.f32.mrb[0].mxu0
        %3033 = vmatprep.mubr.bf16.mxu0 0
        %3034 = vmatmul.mubr.bf16.gmra.mrb[0].mxu0 %v2893
        %v3035 = vpop.f32.mrb[0].mxu0
        %v3036 = vadd.f32 0.0, %v3035
        %v3037 = vpop.f32.mrb[0].mxu0
        %v3038 = vpop.f32.mrb[0].mxu0
        %v3039 = vadd.f32 0.0, %v3038
        %v3040 = vpop.f32.mrb[0].mxu0
        %3041 = vmatprep.mubr.bf16.mxu0 0
        %3042 = vmatmul.mubr.bf16.gmra.mrb[0].mxu0 %v2894
        %v3043 = vpop.f32.mrb[0].mxu0
        %v3044 = vadd.f32 0.0, %v3043
        %v3045 = vpop.f32.mrb[0].mxu0
        %v3046 = vpop.f32.mrb[0].mxu0
        %v3047 = vadd.f32 0.0, %v3046
        %v3048 = vpop.f32.mrb[0].mxu0
        %3049 = vmatprep.mubr.bf16.mxu0 0
        %3050 = vmatmul.mubr.bf16.gmra.mrb[0].mxu0 %v2895
        %v3051 = vpop.f32.mrb[0].mxu0
        %v3052 = vadd.f32 0.0, %v3051
        %v3053 = vpop.f32.mrb[0].mxu0
        %v3054 = vpop.f32.mrb[0].mxu0
        %v3055 = vadd.f32 0.0, %v3054
        %v3056 = vpop.f32.mrb[0].mxu0
        %3057 = vmatprep.mubr.bf16.mxu0 0
        %3058 = vmatmul.mubr.bf16.gmra.mrb[0].mxu0 %v2896
        %v3059 = vpop.f32.mrb[0].mxu0
        %v3060 = vadd.f32 0.0, %v3059
        %v3061 = vpop.f32.mrb[0].mxu0
        %v3062 = vpop.f32.mrb[0].mxu0
        %v3063 = vadd.f32 0.0, %v3062
        %v3064 = vpop.f32.mrb[0].mxu0
        %3065 = vmatprep.mubr.bf16.mxu0 0
        %3066 = vmatmul.mubr.bf16.gmra.mrb[0].mxu0 %v2897
        %v3067 = vpop.f32.mrb[0].mxu0
        %v3068 = vadd.f32 0.0, %v3067
        %v3069 = vpop.f32.mrb[0].mxu0
        %v3070 = vpop.f32.mrb[0].mxu0
        %v3071 = vadd.f32 0.0, %v3070
        %v3072 = vpop.f32.mrb[0].mxu0
        %3073 = vmatprep.mubr.bf16.mxu0 0
        %3074 = vmatmul.mubr.bf16.gmra.mrb[0].mxu0 %v2898
        %v3075 = vpop.f32.mrb[0].mxu0
        %v3076 = vadd.f32 0.0, %v3075
        %v3077 = vpop.f32.mrb[0].mxu0
        %v3078 = vpop.f32.mrb[0].mxu0
        %v3079 = vadd.f32 0.0, %v3078
        %v3080 = vpop.f32.mrb[0].mxu0
        %3081 = vmatprep.mubr.bf16.mxu0 0
        %3082 = vmatmul.mubr.bf16.gmra.mrb[0].mxu0 %v2899
        %v3083 = vpop.f32.mrb[0].mxu0
        %v3084 = vadd.f32 0.0, %v3083
        %v3085 = vpop.f32.mrb[0].mxu0
        %v3086 = vpop.f32.mrb[0].mxu0
        %v3087 = vadd.f32 0.0, %v3086
        %v3088 = vpop.f32.mrb[0].mxu0
        %3089 = vmatprep.mubr.bf16.mxu0 0
        %3090 = vmatmul.mubr.bf16.gmra.mrb[0].mxu0 %v2900
        %v3091 = vpop.f32.mrb[0].mxu0
        %v3092 = vadd.f32 0.0, %v3091
        %v3093 = vpop.f32.mrb[0].mxu0
        %v3094 = vpop.f32.mrb[0].mxu0
        %v3095 = vadd.f32 0.0, %v3094
        %v3096 = vpop.f32.mrb[0].mxu0
        %3097 = vmatprep.mubr.bf16.mxu0 0
        %3098 = vmatmul.mubr.bf16.gmra.mrb[0].mxu0 %v2901
        %v3099 = vpop.f32.mrb[0].mxu0
        %v3100 = vadd.f32 0.0, %v3099
        %v3101 = vpop.f32.mrb[0].mxu0
        %v3102 = vpop.f32.mrb[0].mxu0
        %v3103 = vadd.f32 0.0, %v3102
        %v3104 = vpop.f32.mrb[0].mxu0
        %3105 = vmatprep.mubr.bf16.mxu0 0
        %3106 = vmatmul.mubr.bf16.gmra.mrb[0].mxu0 %v2902
        %v3107 = vpop.f32.mrb[0].mxu0
        %v3108 = vadd.f32 0.0, %v3107
        %v3109 = vpop.f32.mrb[0].mxu0
        %v3110 = vpop.f32.mrb[0].mxu0
        %v3111 = vadd.f32 0.0, %v3110
        %v3112 = vpop.f32.mrb[0].mxu0
        %3113 = vmatprep.mubr.bf16.mxu0 0
        %3114 = vmatmul.mubr.bf16.gmra.mrb[0].mxu0 %v2903
        %v3115 = vpop.f32.mrb[0].mxu0
        %v3116 = vadd.f32 0.0, %v3115
        %v3117 = vpop.f32.mrb[0].mxu0
        %v3118 = vpop.f32.mrb[0].mxu0
        %v3119 = vadd.f32 0.0, %v3118
        %v3120 = vpop.f32.mrb[0].mxu0
        %3121 = vmatprep.mubr.bf16.mxu0 0
        %3122 = vmatmul.mubr.bf16.gmra.mrb[0].mxu0 %v2904
        %v3123 = vpop.f32.mrb[0].mxu0
        %v3124 = vadd.f32 0.0, %v3123
        %v3125 = vpop.f32.mrb[0].mxu0
        %v3126 = vpop.f32.mrb[0].mxu0
        %v3127 = vadd.f32 0.0, %v3126
        %v3128 = vpop.f32.mrb[0].mxu0
        %3129 = vdwg.mxu0
        %v3130 = vadd.f32 %v2744, %v3004
        %v3131 = vadd.f32 %v2745, %v3007
        %v3132 = vadd.f32 %v2746, %v3012
        %v3133 = vadd.f32 %v2747, %v3015
        %v3134 = vadd.f32 %v2748, %v3020
        %v3135 = vadd.f32 %v2749, %v3023
        %v3136 = vadd.f32 %v2750, %v3028
        %v3137 = vadd.f32 %v2751, %v3031
        %v3138 = vadd.f32 %v2752, %v3036
        %v3139 = vadd.f32 %v2753, %v3039
        %v3140 = vadd.f32 %v2754, %v3044
        %v3141 = vadd.f32 %v2755, %v3047
        %v3142 = vadd.f32 %v2756, %v3052
        %v3143 = vadd.f32 %v2757, %v3055
        %v3144 = vadd.f32 %v2758, %v3060
        %v3145 = vadd.f32 %v2759, %v3063
        %v3146 = vadd.f32 %v2760, %v3068
        %v3147 = vadd.f32 %v2761, %v3071
        %v3148 = vadd.f32 %v2762, %v3076
        %v3149 = vadd.f32 %v2763, %v3079
        %v3150 = vadd.f32 %v2764, %v3084
        %v3151 = vadd.f32 %v2765, %v3087
        %v3152 = vadd.f32 %v2766, %v3092
        %v3153 = vadd.f32 %v2767, %v3095
        %v3154 = vadd.f32 %v2768, %v3100
        %v3155 = vadd.f32 %v2769, %v3103
        %v3156 = vadd.f32 %v2770, %v3108
        %v3157 = vadd.f32 %v2771, %v3111
        %v3158 = vadd.f32 %v2772, %v3116
        %v3159 = vadd.f32 %v2773, %v3119
        %v3160 = vadd.f32 %v2774, %v3124
        %v3161 = vadd.f32 %v2775, %v3127
        %v3162 = vld [vmem:[%s1127] sm:$0xf]
        %v3163 = vld [vmem:[%s1127 + $0x4] sm:$0xf]
        %v3164 = vld [vmem:[%s1127 + $0x8] sm:$0x1]
        %v3165 = vld [vmem:[%s1127 + $0xc] sm:$0xf]
        %v3166 = vld [vmem:[%s1127 + $0x10] sm:$0xf]
        %v3167 = vld [vmem:[%s1127 + $0x14] sm:$0x1]
        %v3168 = vld [vmem:[%s1127 + $0x18] sm:$0xf]
        %v3169 = vld [vmem:[%s1127 + $0x1c] sm:$0xf]
        %v3170 = vld [vmem:[%s1127 + $0x20] sm:$0x1]
        %v3171 = vld [vmem:[%s1127 + $0x24] sm:$0xf]
        %v3172 = vld [vmem:[%s1127 + $0x28] sm:$0xf]
        %v3173 = vld [vmem:[%s1127 + $0x2c] sm:$0x1]
        %v3174 = vld [vmem:[%s1127 + $0x30] sm:$0xf]
        %v3175 = vld [vmem:[%s1127 + $0x34] sm:$0xf]
        %v3176 = vld [vmem:[%s1127 + $0x38] sm:$0x1]
        %v3177 = vld [vmem:[%s1127 + $0x3c] sm:$0xf]
        %v3178 = vld [vmem:[%s1127 + $0x40] sm:$0xf]
        %v3179 = vld [vmem:[%s1127 + $0x44] sm:$0x1]
        %v3180 = vld [vmem:[%s1127 + $0x48] sm:$0xf]
        %v3181 = vld [vmem:[%s1127 + $0x4c] sm:$0xf]
        %v3182 = vld [vmem:[%s1127 + $0x50] sm:$0x1]
        %v3183 = vld [vmem:[%s1127 + $0x54] sm:$0xf]
        %v3184 = vld [vmem:[%s1127 + $0x58] sm:$0xf]
        %v3185 = vld [vmem:[%s1127 + $0x5c] sm:$0x1]
        %v3186 = vld [vmem:[%s1127 + $0x60] sm:$0xf]
        %v3187 = vld [vmem:[%s1127 + $0x64] sm:$0xf]
        %v3188 = vld [vmem:[%s1127 + $0x68] sm:$0x1]
        %v3189 = vld [vmem:[%s1127 + $0x6c] sm:$0xf]
        %v3190 = vld [vmem:[%s1127 + $0x70] sm:$0xf]
        %v3191 = vld [vmem:[%s1127 + $0x74] sm:$0x1]
        %v3192 = vld [vmem:[%s1127 + $0x78] sm:$0xf]
        %v3193 = vld [vmem:[%s1127 + $0x7c] sm:$0xf]
        %v3194 = vld [vmem:[%s1127 + $0x80] sm:$0x1]
        %v3195 = vld [vmem:[%s1127 + $0x84] sm:$0xf]
        %v3196 = vld [vmem:[%s1127 + $0x88] sm:$0xf]
        %v3197 = vld [vmem:[%s1127 + $0x8c] sm:$0x1]
        %v3198 = vld [vmem:[%s1127 + $0x90] sm:$0xf]
        %v3199 = vld [vmem:[%s1127 + $0x94] sm:$0xf]
        %v3200 = vld [vmem:[%s1127 + $0x98] sm:$0x1]
        %v3201 = vld [vmem:[%s1127 + $0x9c] sm:$0xf]
        %v3202 = vld [vmem:[%s1127 + $0xa0] sm:$0xf]
        %v3203 = vld [vmem:[%s1127 + $0xa4] sm:$0x1]
        %v3204 = vld [vmem:[%s1127 + $0xa8] sm:$0xf]
        %v3205 = vld [vmem:[%s1127 + $0xac] sm:$0xf]
        %v3206 = vld [vmem:[%s1127 + $0xb0] sm:$0x1]
        %v3207 = vld [vmem:[%s1127 + $0xb4] sm:$0xf]
        %v3208 = vld [vmem:[%s1127 + $0xb8] sm:$0xf]
        %v3209 = vld [vmem:[%s1127 + $0xbc] sm:$0x1]
        %v3211 = vshrl.u32 %v3162, 16
        %v3213 = vrot.slane %v3211, 4
        %v3214 = vshll.u32 %v3162, 16
        %v3216 = vrot.slane %v3214, 5
        %v3217 = vor.u32 %v3213, %v3216
        %v3218 = vrot.slane %v3217, 4
        %v3220 = vshll.u32 %v3163, 16
        %v3222 = vrot.slane %v3220, 5
        %v3223 = vsel %vm1311, %v3218, %v3222
        %v3224 = vshrl.u32 %v3163, 16
        %v3226 = vrot.slane %v3224, 4
        %v3227 = vor.u32 %v3226, %v3222
        %v3228 = vrot.slane %v3227, 4
        %v3230 = vshll.u32 %v3164, 16
        %v3232 = vrot.slane %v3230, 5
        %v3233 = vsel %vm1311, %v3228, %v3232
        %v3235 = vshrl.u32 %v3165, 16
        %v3237 = vrot.slane %v3235, 4
        %v3238 = vshll.u32 %v3165, 16
        %v3240 = vrot.slane %v3238, 5
        %v3241 = vor.u32 %v3237, %v3240
        %v3242 = vrot.slane %v3241, 4
        %v3244 = vshll.u32 %v3166, 16
        %v3246 = vrot.slane %v3244, 5
        %v3247 = vsel %vm1311, %v3242, %v3246
        %v3248 = vshrl.u32 %v3166, 16
        %v3250 = vrot.slane %v3248, 4
        %v3251 = vor.u32 %v3250, %v3246
        %v3252 = vrot.slane %v3251, 4
        %v3254 = vshll.u32 %v3167, 16
        %v3256 = vrot.slane %v3254, 5
        %v3257 = vsel %vm1311, %v3252, %v3256
        %v3259 = vshrl.u32 %v3168, 16
        %v3261 = vrot.slane %v3259, 4
        %v3262 = vshll.u32 %v3168, 16
        %v3264 = vrot.slane %v3262, 5
        %v3265 = vor.u32 %v3261, %v3264
        %v3266 = vrot.slane %v3265, 4
        %v3268 = vshll.u32 %v3169, 16
        %v3270 = vrot.slane %v3268, 5
        %v3271 = vsel %vm1311, %v3266, %v3270
        %v3272 = vshrl.u32 %v3169, 16
        %v3274 = vrot.slane %v3272, 4
        %v3275 = vor.u32 %v3274, %v3270
        %v3276 = vrot.slane %v3275, 4
        %v3278 = vshll.u32 %v3170, 16
        %v3280 = vrot.slane %v3278, 5
        %v3281 = vsel %vm1311, %v3276, %v3280
        %v3283 = vshrl.u32 %v3171, 16
        %v3285 = vrot.slane %v3283, 4
        %v3286 = vshll.u32 %v3171, 16
        %v3288 = vrot.slane %v3286, 5
        %v3289 = vor.u32 %v3285, %v3288
        %v3290 = vrot.slane %v3289, 4
        %v3292 = vshll.u32 %v3172, 16
        %v3294 = vrot.slane %v3292, 5
        %v3295 = vsel %vm1311, %v3290, %v3294
        %v3296 = vshrl.u32 %v3172, 16
        %v3298 = vrot.slane %v3296, 4
        %v3299 = vor.u32 %v3298, %v3294
        %v3300 = vrot.slane %v3299, 4
        %v3302 = vshll.u32 %v3173, 16
        %v3304 = vrot.slane %v3302, 5
        %v3305 = vsel %vm1311, %v3300, %v3304
        %v3307 = vshrl.u32 %v3174, 16
        %v3309 = vrot.slane %v3307, 4
        %v3310 = vshll.u32 %v3174, 16
        %v3312 = vrot.slane %v3310, 5
        %v3313 = vor.u32 %v3309, %v3312
        %v3314 = vrot.slane %v3313, 4
        %v3316 = vshll.u32 %v3175, 16
        %v3318 = vrot.slane %v3316, 5
        %v3319 = vsel %vm1311, %v3314, %v3318
        %v3320 = vshrl.u32 %v3175, 16
        %v3322 = vrot.slane %v3320, 4
        %v3323 = vor.u32 %v3322, %v3318
        %v3324 = vrot.slane %v3323, 4
        %v3326 = vshll.u32 %v3176, 16
        %v3328 = vrot.slane %v3326, 5
        %v3329 = vsel %vm1311, %v3324, %v3328
        %v3331 = vshrl.u32 %v3177, 16
        %v3333 = vrot.slane %v3331, 4
        %v3334 = vshll.u32 %v3177, 16
        %v3336 = vrot.slane %v3334, 5
        %v3337 = vor.u32 %v3333, %v3336
        %v3338 = vrot.slane %v3337, 4
        %v3340 = vshll.u32 %v3178, 16
        %v3342 = vrot.slane %v3340, 5
        %v3343 = vsel %vm1311, %v3338, %v3342
        %v3344 = vshrl.u32 %v3178, 16
        %v3346 = vrot.slane %v3344, 4
        %v3347 = vor.u32 %v3346, %v3342
        %v3348 = vrot.slane %v3347, 4
        %v3350 = vshll.u32 %v3179, 16
        %v3352 = vrot.slane %v3350, 5
        %v3353 = vsel %vm1311, %v3348, %v3352
        %v3355 = vshrl.u32 %v3180, 16
        %v3357 = vrot.slane %v3355, 4
        %v3358 = vshll.u32 %v3180, 16
        %v3360 = vrot.slane %v3358, 5
        %v3361 = vor.u32 %v3357, %v3360
        %v3362 = vrot.slane %v3361, 4
        %v3364 = vshll.u32 %v3181, 16
        %v3366 = vrot.slane %v3364, 5
        %v3367 = vsel %vm1311, %v3362, %v3366
        %v3368 = vshrl.u32 %v3181, 16
        %v3370 = vrot.slane %v3368, 4
        %v3371 = vor.u32 %v3370, %v3366
        %v3372 = vrot.slane %v3371, 4
        %v3374 = vshll.u32 %v3182, 16
        %v3376 = vrot.slane %v3374, 5
        %v3377 = vsel %vm1311, %v3372, %v3376
        %v3379 = vshrl.u32 %v3183, 16
        %v3381 = vrot.slane %v3379, 4
        %v3382 = vshll.u32 %v3183, 16
        %v3384 = vrot.slane %v3382, 5
        %v3385 = vor.u32 %v3381, %v3384
        %v3386 = vrot.slane %v3385, 4
        %v3388 = vshll.u32 %v3184, 16
        %v3390 = vrot.slane %v3388, 5
        %v3391 = vsel %vm1311, %v3386, %v3390
        %v3392 = vshrl.u32 %v3184, 16
        %v3394 = vrot.slane %v3392, 4
        %v3395 = vor.u32 %v3394, %v3390
        %v3396 = vrot.slane %v3395, 4
        %v3398 = vshll.u32 %v3185, 16
        %v3400 = vrot.slane %v3398, 5
        %v3401 = vsel %vm1311, %v3396, %v3400
        %v3403 = vshrl.u32 %v3186, 16
        %v3405 = vrot.slane %v3403, 4
        %v3406 = vshll.u32 %v3186, 16
        %v3408 = vrot.slane %v3406, 5
        %v3409 = vor.u32 %v3405, %v3408
        %v3410 = vrot.slane %v3409, 4
        %v3412 = vshll.u32 %v3187, 16
        %v3414 = vrot.slane %v3412, 5
        %v3415 = vsel %vm1311, %v3410, %v3414
        %v3416 = vshrl.u32 %v3187, 16
        %v3418 = vrot.slane %v3416, 4
        %v3419 = vor.u32 %v3418, %v3414
        %v3420 = vrot.slane %v3419, 4
        %v3422 = vshll.u32 %v3188, 16
        %v3424 = vrot.slane %v3422, 5
        %v3425 = vsel %vm1311, %v3420, %v3424
        %v3427 = vshrl.u32 %v3189, 16
        %v3429 = vrot.slane %v3427, 4
        %v3430 = vshll.u32 %v3189, 16
        %v3432 = vrot.slane %v3430, 5
        %v3433 = vor.u32 %v3429, %v3432
        %v3434 = vrot.slane %v3433, 4
        %v3436 = vshll.u32 %v3190, 16
        %v3438 = vrot.slane %v3436, 5
        %v3439 = vsel %vm1311, %v3434, %v3438
        %v3440 = vshrl.u32 %v3190, 16
        %v3442 = vrot.slane %v3440, 4
        %v3443 = vor.u32 %v3442, %v3438
        %v3444 = vrot.slane %v3443, 4
        %v3446 = vshll.u32 %v3191, 16
        %v3448 = vrot.slane %v3446, 5
        %v3449 = vsel %vm1311, %v3444, %v3448
        %v3451 = vshrl.u32 %v3192, 16
        %v3453 = vrot.slane %v3451, 4
        %v3454 = vshll.u32 %v3192, 16
        %v3456 = vrot.slane %v3454, 5
        %v3457 = vor.u32 %v3453, %v3456
        %v3458 = vrot.slane %v3457, 4
        %v3460 = vshll.u32 %v3193, 16
        %v3462 = vrot.slane %v3460, 5
        %v3463 = vsel %vm1311, %v3458, %v3462
        %v3464 = vshrl.u32 %v3193, 16
        %v3466 = vrot.slane %v3464, 4
        %v3467 = vor.u32 %v3466, %v3462
        %v3468 = vrot.slane %v3467, 4
        %v3470 = vshll.u32 %v3194, 16
        %v3472 = vrot.slane %v3470, 5
        %v3473 = vsel %vm1311, %v3468, %v3472
        %v3475 = vshrl.u32 %v3195, 16
        %v3477 = vrot.slane %v3475, 4
        %v3478 = vshll.u32 %v3195, 16
        %v3480 = vrot.slane %v3478, 5
        %v3481 = vor.u32 %v3477, %v3480
        %v3482 = vrot.slane %v3481, 4
        %v3484 = vshll.u32 %v3196, 16
        %v3486 = vrot.slane %v3484, 5
        %v3487 = vsel %vm1311, %v3482, %v3486
        %v3488 = vshrl.u32 %v3196, 16
        %v3490 = vrot.slane %v3488, 4
        %v3491 = vor.u32 %v3490, %v3486
        %v3492 = vrot.slane %v3491, 4
        %v3494 = vshll.u32 %v3197, 16
        %v3496 = vrot.slane %v3494, 5
        %v3497 = vsel %vm1311, %v3492, %v3496
        %v3499 = vshrl.u32 %v3198, 16
        %v3501 = vrot.slane %v3499, 4
        %v3502 = vshll.u32 %v3198, 16
        %v3504 = vrot.slane %v3502, 5
        %v3505 = vor.u32 %v3501, %v3504
        %v3506 = vrot.slane %v3505, 4
        %v3508 = vshll.u32 %v3199, 16
        %v3510 = vrot.slane %v3508, 5
        %v3511 = vsel %vm1311, %v3506, %v3510
        %v3512 = vshrl.u32 %v3199, 16
        %v3514 = vrot.slane %v3512, 4
        %v3515 = vor.u32 %v3514, %v3510
        %v3516 = vrot.slane %v3515, 4
        %v3518 = vshll.u32 %v3200, 16
        %v3520 = vrot.slane %v3518, 5
        %v3521 = vsel %vm1311, %v3516, %v3520
        %v3523 = vshrl.u32 %v3201, 16
        %v3525 = vrot.slane %v3523, 4
        %v3526 = vshll.u32 %v3201, 16
        %v3528 = vrot.slane %v3526, 5
        %v3529 = vor.u32 %v3525, %v3528
        %v3530 = vrot.slane %v3529, 4
        %v3532 = vshll.u32 %v3202, 16
        %v3534 = vrot.slane %v3532, 5
        %v3535 = vsel %vm1311, %v3530, %v3534
        %v3536 = vshrl.u32 %v3202, 16
        %v3538 = vrot.slane %v3536, 4
        %v3539 = vor.u32 %v3538, %v3534
        %v3540 = vrot.slane %v3539, 4
        %v3542 = vshll.u32 %v3203, 16
        %v3544 = vrot.slane %v3542, 5
        %v3545 = vsel %vm1311, %v3540, %v3544
        %v3547 = vshrl.u32 %v3204, 16
        %v3549 = vrot.slane %v3547, 4
        %v3550 = vshll.u32 %v3204, 16
        %v3552 = vrot.slane %v3550, 5
        %v3553 = vor.u32 %v3549, %v3552
        %v3554 = vrot.slane %v3553, 4
        %v3556 = vshll.u32 %v3205, 16
        %v3558 = vrot.slane %v3556, 5
        %v3559 = vsel %vm1311, %v3554, %v3558
        %v3560 = vshrl.u32 %v3205, 16
        %v3562 = vrot.slane %v3560, 4
        %v3563 = vor.u32 %v3562, %v3558
        %v3564 = vrot.slane %v3563, 4
        %v3566 = vshll.u32 %v3206, 16
        %v3568 = vrot.slane %v3566, 5
        %v3569 = vsel %vm1311, %v3564, %v3568
        %v3571 = vshrl.u32 %v3207, 16
        %v3573 = vrot.slane %v3571, 4
        %v3574 = vshll.u32 %v3207, 16
        %v3576 = vrot.slane %v3574, 5
        %v3577 = vor.u32 %v3573, %v3576
        %v3578 = vrot.slane %v3577, 4
        %v3580 = vshll.u32 %v3208, 16
        %v3582 = vrot.slane %v3580, 5
        %v3583 = vsel %vm1311, %v3578, %v3582
        %v3584 = vshrl.u32 %v3208, 16
        %v3586 = vrot.slane %v3584, 4
        %v3587 = vor.u32 %v3586, %v3582
        %v3588 = vrot.slane %v3587, 4
        %v3590 = vshll.u32 %v3209, 16
        %v3592 = vrot.slane %v3590, 5
        %v3593 = vsel %vm1311, %v3588, %v3592
        %s3594 = scalar_lea.vmem [#allocation8], 256
        %v3595 = vld [vmem:[%s3594] sm:$0xf]
        %v3596 = vld [vmem:[%s3594 + $0x4] sm:$0xf]
        %v3597 = vld [vmem:[%s3594 + $0x8] sm:$0xf]
        %v3598 = vld [vmem:[%s3594 + $0xc] sm:$0xf]
        %v3599 = vld [vmem:[%s3594 + $0x10] sm:$0xf]
        %v3600 = vld [vmem:[%s3594 + $0x14] sm:$0xf]
        %v3601 = vld [vmem:[%s3594 + $0x18] sm:$0xf]
        %v3602 = vld [vmem:[%s3594 + $0x1c] sm:$0xf]
        %v3603 = vld [vmem:[%s3594 + $0x20] sm:$0xf]
        %v3604 = vld [vmem:[%s3594 + $0x24] sm:$0xf]
        %v3605 = vld [vmem:[%s3594 + $0x28] sm:$0xf]
        %v3606 = vld [vmem:[%s3594 + $0x2c] sm:$0xf]
        %v3607 = vld [vmem:[%s3594 + $0x30] sm:$0xf]
        %v3608 = vld [vmem:[%s3594 + $0x34] sm:$0xf]
        %v3609 = vld [vmem:[%s3594 + $0x38] sm:$0xf]
        %v3610 = vld [vmem:[%s3594 + $0x3c] sm:$0xf]
        %v3611 = vunpack.c.l.b16 %v3223
        %v3612 = vunpack.c.l.b16 %v3233
        %v3613 = vunpack.c.l.b16 %v3247
        %v3614 = vunpack.c.l.b16 %v3257
        %v3615 = vunpack.c.l.b16 %v3271
        %v3616 = vunpack.c.l.b16 %v3281
        %v3617 = vunpack.c.l.b16 %v3295
        %v3618 = vunpack.c.l.b16 %v3305
        %v3619 = vunpack.c.l.b16 %v3319
        %v3620 = vunpack.c.l.b16 %v3329
        %v3621 = vunpack.c.l.b16 %v3343
        %v3622 = vunpack.c.l.b16 %v3353
        %v3623 = vunpack.c.l.b16 %v3367
        %v3624 = vunpack.c.l.b16 %v3377
        %v3625 = vunpack.c.l.b16 %v3391
        %v3626 = vunpack.c.l.b16 %v3401
        %v3627 = vunpack.c.l.b16 %v3415
        %v3628 = vunpack.c.l.b16 %v3425
        %v3629 = vunpack.c.l.b16 %v3439
        %v3630 = vunpack.c.l.b16 %v3449
        %v3631 = vunpack.c.l.b16 %v3463
        %v3632 = vunpack.c.l.b16 %v3473
        %v3633 = vunpack.c.l.b16 %v3487
        %v3634 = vunpack.c.l.b16 %v3497
        %v3635 = vunpack.c.l.b16 %v3511
        %v3636 = vunpack.c.l.b16 %v3521
        %v3637 = vunpack.c.l.b16 %v3535
        %v3638 = vunpack.c.l.b16 %v3545
        %v3639 = vunpack.c.l.b16 %v3559
        %v3640 = vunpack.c.l.b16 %v3569
        %v3641 = vunpack.c.l.b16 %v3583
        %v3642 = vunpack.c.l.b16 %v3593
        %v3643 = vpack.c.b16 %v3612, %v3611
        %v3644 = vpack.c.b16 %v3614, %v3613
        %v3645 = vpack.c.b16 %v3616, %v3615
        %v3646 = vpack.c.b16 %v3618, %v3617
        %v3647 = vpack.c.b16 %v3620, %v3619
        %v3648 = vpack.c.b16 %v3622, %v3621
        %v3649 = vpack.c.b16 %v3624, %v3623
        %v3650 = vpack.c.b16 %v3626, %v3625
        %v3651 = vpack.c.b16 %v3628, %v3627
        %v3652 = vpack.c.b16 %v3630, %v3629
        %v3653 = vpack.c.b16 %v3632, %v3631
        %v3654 = vpack.c.b16 %v3634, %v3633
        %v3655 = vpack.c.b16 %v3636, %v3635
        %v3656 = vpack.c.b16 %v3638, %v3637
        %v3657 = vpack.c.b16 %v3640, %v3639
        %v3658 = vpack.c.b16 %v3642, %v3641
        %v3691 = vunpack.c.l.b16 %v3595
        %v3692 = vunpack.c.l.b16 %v3596
        %v3693 = vunpack.c.l.b16 %v3597
        %v3694 = vunpack.c.l.b16 %v3598
        %v3695 = vunpack.c.l.b16 %v3599
        %v3696 = vunpack.c.l.b16 %v3600
        %v3697 = vunpack.c.l.b16 %v3601
        %v3698 = vunpack.c.l.b16 %v3602
        %v3699 = vunpack.c.l.b16 %v3603
        %v3700 = vunpack.c.l.b16 %v3604
        %v3701 = vunpack.c.l.b16 %v3605
        %v3702 = vunpack.c.l.b16 %v3606
        %v3703 = vunpack.c.l.b16 %v3607
        %v3704 = vunpack.c.l.b16 %v3608
        %v3705 = vunpack.c.l.b16 %v3609
        %v3706 = vunpack.c.l.b16 %v3610
        %v3707 = vpack.c.b16 %v3692, %v3691
        %v3708 = vpack.c.b16 %v3694, %v3693
        %v3709 = vpack.c.b16 %v3696, %v3695
        %v3710 = vpack.c.b16 %v3698, %v3697
        %v3711 = vpack.c.b16 %v3700, %v3699
        %v3712 = vpack.c.b16 %v3702, %v3701
        %v3713 = vpack.c.b16 %v3704, %v3703
        %v3714 = vpack.c.b16 %v3706, %v3705
        %3723 = vmatprep.subr.bf16.mxu0 0
        %3724 = vmatpush1.bf16.msra.mxu0 %v3707
        %3725 = vmatprep.subr.bf16.mxu0 0
        %3726 = vmatpush1.bf16.msra.mxu0 %v3708
        %3727 = vmatprep.subr.bf16.mxu0 0
        %3728 = vmatpush1.bf16.msra.mxu0 %v3709
        %3729 = vmatprep.subr.bf16.mxu0 0
        %3730 = vmatpush1.bf16.msra.mxu0 %v3710
        %3731 = vmatprep.subr.bf16.mxu0 0
        %3732 = vmatpush1.bf16.msra.mxu0 %v3711
        %3733 = vmatprep.subr.bf16.mxu0 0
        %3734 = vmatpush1.bf16.msra.mxu0 %v3712
        %3735 = vmatprep.subr.bf16.mxu0 0
        %3736 = vmatpush1.bf16.msra.mxu0 %v3713
        %3737 = vmatprep.subr.bf16.mxu0 0
        %3738 = vmatpush1.bf16.msra.mxu0 %v3714
        %3739 = vmatprep.subr.bf16.mxu0 0
        %3740 = vmatpush1.bf16.msra.mxu0 0
        %3741 = vmatprep.subr.bf16.mxu0 0
        %3742 = vmatpush1.bf16.msra.mxu0 0
        %3743 = vmatprep.subr.bf16.mxu0 0
        %3744 = vmatpush1.bf16.msra.mxu0 0
        %3745 = vmatprep.subr.bf16.mxu0 0
        %3746 = vmatpush1.bf16.msra.mxu0 0
        %3747 = vmatprep.subr.bf16.mxu0 0
        %3748 = vmatpush1.bf16.msra.mxu0 0
        %3749 = vmatprep.subr.bf16.mxu0 0
        %3750 = vmatpush1.bf16.msra.mxu0 0
        %3751 = vmatprep.subr.bf16.mxu0 0
        %3752 = vmatpush1.bf16.msra.mxu0 0
        %3753 = vmatprep.subr.bf16.mxu0 0
        %3754 = vmatpush1.bf16.msra.mxu0 0
        %3755 = vmatprep.mubr.bf16.mxu0 0
        %3756 = vmatmul.mubr.bf16.gmra.mrb[0].mxu0 %v3643
        %v3757 = vpop.f32.mrb[0].mxu0
        %v3758 = vadd.f32 0.0, %v3757
        %v3759 = vpop.f32.mrb[0].mxu0
        %v3760 = vpop.f32.mrb[0].mxu0
        %v3761 = vadd.f32 0.0, %v3760
        %v3762 = vpop.f32.mrb[0].mxu0
        %3763 = vmatprep.mubr.bf16.mxu0 0
        %3764 = vmatmul.mubr.bf16.gmra.mrb[0].mxu0 %v3644
        %v3765 = vpop.f32.mrb[0].mxu0
        %v3766 = vadd.f32 0.0, %v3765
        %v3767 = vpop.f32.mrb[0].mxu0
        %v3768 = vpop.f32.mrb[0].mxu0
        %v3769 = vadd.f32 0.0, %v3768
        %v3770 = vpop.f32.mrb[0].mxu0
        %3771 = vmatprep.mubr.bf16.mxu0 0
        %3772 = vmatmul.mubr.bf16.gmra.mrb[0].mxu0 %v3645
        %v3773 = vpop.f32.mrb[0].mxu0
        %v3774 = vadd.f32 0.0, %v3773
        %v3775 = vpop.f32.mrb[0].mxu0
        %v3776 = vpop.f32.mrb[0].mxu0
        %v3777 = vadd.f32 0.0, %v3776
        %v3778 = vpop.f32.mrb[0].mxu0
        %3779 = vmatprep.mubr.bf16.mxu0 0
        %3780 = vmatmul.mubr.bf16.gmra.mrb[0].mxu0 %v3646
        %v3781 = vpop.f32.mrb[0].mxu0
        %v3782 = vadd.f32 0.0, %v3781
        %v3783 = vpop.f32.mrb[0].mxu0
        %v3784 = vpop.f32.mrb[0].mxu0
        %v3785 = vadd.f32 0.0, %v3784
        %v3786 = vpop.f32.mrb[0].mxu0
        %3787 = vmatprep.mubr.bf16.mxu0 0
        %3788 = vmatmul.mubr.bf16.gmra.mrb[0].mxu0 %v3647
        %v3789 = vpop.f32.mrb[0].mxu0
        %v3790 = vadd.f32 0.0, %v3789
        %v3791 = vpop.f32.mrb[0].mxu0
        %v3792 = vpop.f32.mrb[0].mxu0
        %v3793 = vadd.f32 0.0, %v3792
        %v3794 = vpop.f32.mrb[0].mxu0
        %3795 = vmatprep.mubr.bf16.mxu0 0
        %3796 = vmatmul.mubr.bf16.gmra.mrb[0].mxu0 %v3648
        %v3797 = vpop.f32.mrb[0].mxu0
        %v3798 = vadd.f32 0.0, %v3797
        %v3799 = vpop.f32.mrb[0].mxu0
        %v3800 = vpop.f32.mrb[0].mxu0
        %v3801 = vadd.f32 0.0, %v3800
        %v3802 = vpop.f32.mrb[0].mxu0
        %3803 = vmatprep.mubr.bf16.mxu0 0
        %3804 = vmatmul.mubr.bf16.gmra.mrb[0].mxu0 %v3649
        %v3805 = vpop.f32.mrb[0].mxu0
        %v3806 = vadd.f32 0.0, %v3805
        %v3807 = vpop.f32.mrb[0].mxu0
        %v3808 = vpop.f32.mrb[0].mxu0
        %v3809 = vadd.f32 0.0, %v3808
        %v3810 = vpop.f32.mrb[0].mxu0
        %3811 = vmatprep.mubr.bf16.mxu0 0
        %3812 = vmatmul.mubr.bf16.gmra.mrb[0].mxu0 %v3650
        %v3813 = vpop.f32.mrb[0].mxu0
        %v3814 = vadd.f32 0.0, %v3813
        %v3815 = vpop.f32.mrb[0].mxu0
        %v3816 = vpop.f32.mrb[0].mxu0
        %v3817 = vadd.f32 0.0, %v3816
        %v3818 = vpop.f32.mrb[0].mxu0
        %3819 = vmatprep.mubr.bf16.mxu0 0
        %3820 = vmatmul.mubr.bf16.gmra.mrb[0].mxu0 %v3651
        %v3821 = vpop.f32.mrb[0].mxu0
        %v3822 = vadd.f32 0.0, %v3821
        %v3823 = vpop.f32.mrb[0].mxu0
        %v3824 = vpop.f32.mrb[0].mxu0
        %v3825 = vadd.f32 0.0, %v3824
        %v3826 = vpop.f32.mrb[0].mxu0
        %3827 = vmatprep.mubr.bf16.mxu0 0
        %3828 = vmatmul.mubr.bf16.gmra.mrb[0].mxu0 %v3652
        %v3829 = vpop.f32.mrb[0].mxu0
        %v3830 = vadd.f32 0.0, %v3829
        %v3831 = vpop.f32.mrb[0].mxu0
        %v3832 = vpop.f32.mrb[0].mxu0
        %v3833 = vadd.f32 0.0, %v3832
        %v3834 = vpop.f32.mrb[0].mxu0
        %3835 = vmatprep.mubr.bf16.mxu0 0
        %3836 = vmatmul.mubr.bf16.gmra.mrb[0].mxu0 %v3653
        %v3837 = vpop.f32.mrb[0].mxu0
        %v3838 = vadd.f32 0.0, %v3837
        %v3839 = vpop.f32.mrb[0].mxu0
        %v3840 = vpop.f32.mrb[0].mxu0
        %v3841 = vadd.f32 0.0, %v3840
        %v3842 = vpop.f32.mrb[0].mxu0
        %3843 = vmatprep.mubr.bf16.mxu0 0
        %3844 = vmatmul.mubr.bf16.gmra.mrb[0].mxu0 %v3654
        %v3845 = vpop.f32.mrb[0].mxu0
        %v3846 = vadd.f32 0.0, %v3845
        %v3847 = vpop.f32.mrb[0].mxu0
        %v3848 = vpop.f32.mrb[0].mxu0
        %v3849 = vadd.f32 0.0, %v3848
        %v3850 = vpop.f32.mrb[0].mxu0
        %3851 = vmatprep.mubr.bf16.mxu0 0
        %3852 = vmatmul.mubr.bf16.gmra.mrb[0].mxu0 %v3655
        %v3853 = vpop.f32.mrb[0].mxu0
        %v3854 = vadd.f32 0.0, %v3853
        %v3855 = vpop.f32.mrb[0].mxu0
        %v3856 = vpop.f32.mrb[0].mxu0
        %v3857 = vadd.f32 0.0, %v3856
        %v3858 = vpop.f32.mrb[0].mxu0
        %3859 = vmatprep.mubr.bf16.mxu0 0
        %3860 = vmatmul.mubr.bf16.gmra.mrb[0].mxu0 %v3656
        %v3861 = vpop.f32.mrb[0].mxu0
        %v3862 = vadd.f32 0.0, %v3861
        %v3863 = vpop.f32.mrb[0].mxu0
        %v3864 = vpop.f32.mrb[0].mxu0
        %v3865 = vadd.f32 0.0, %v3864
        %v3866 = vpop.f32.mrb[0].mxu0
        %3867 = vmatprep.mubr.bf16.mxu0 0
        %3868 = vmatmul.mubr.bf16.gmra.mrb[0].mxu0 %v3657
        %v3869 = vpop.f32.mrb[0].mxu0
        %v3870 = vadd.f32 0.0, %v3869
        %v3871 = vpop.f32.mrb[0].mxu0
        %v3872 = vpop.f32.mrb[0].mxu0
        %v3873 = vadd.f32 0.0, %v3872
        %v3874 = vpop.f32.mrb[0].mxu0
        %3875 = vmatprep.mubr.bf16.mxu0 0
        %3876 = vmatmul.mubr.bf16.gmra.mrb[0].mxu0 %v3658
        %v3877 = vpop.f32.mrb[0].mxu0
        %v3878 = vadd.f32 0.0, %v3877
        %v3879 = vpop.f32.mrb[0].mxu0
        %v3880 = vpop.f32.mrb[0].mxu0
        %v3881 = vadd.f32 0.0, %v3880
        %v3882 = vpop.f32.mrb[0].mxu0
        %3883 = vdwg.mxu0
        %v3884 = vadd.f32 %v3130, %v3758
        %v3885 = vadd.f32 %v3131, %v3761
        %v3886 = vadd.f32 %v3132, %v3766
        %v3887 = vadd.f32 %v3133, %v3769
        %v3888 = vadd.f32 %v3134, %v3774
        %v3889 = vadd.f32 %v3135, %v3777
        %v3890 = vadd.f32 %v3136, %v3782
        %v3891 = vadd.f32 %v3137, %v3785
        %v3892 = vadd.f32 %v3138, %v3790
        %v3893 = vadd.f32 %v3139, %v3793
        %v3894 = vadd.f32 %v3140, %v3798
        %v3895 = vadd.f32 %v3141, %v3801
        %v3896 = vadd.f32 %v3142, %v3806
        %v3897 = vadd.f32 %v3143, %v3809
        %v3898 = vadd.f32 %v3144, %v3814
        %v3899 = vadd.f32 %v3145, %v3817
        %v3900 = vadd.f32 %v3146, %v3822
        %v3901 = vadd.f32 %v3147, %v3825
        %v3902 = vadd.f32 %v3148, %v3830
        %v3903 = vadd.f32 %v3149, %v3833
        %v3904 = vadd.f32 %v3150, %v3838
        %v3905 = vadd.f32 %v3151, %v3841
        %v3906 = vadd.f32 %v3152, %v3846
        %v3907 = vadd.f32 %v3153, %v3849
        %v3908 = vadd.f32 %v3154, %v3854
        %v3909 = vadd.f32 %v3155, %v3857
        %v3910 = vadd.f32 %v3156, %v3862
        %v3911 = vadd.f32 %v3157, %v3865
        %v3912 = vadd.f32 %v3158, %v3870
        %v3913 = vadd.f32 %v3159, %v3873
        %v3914 = vadd.f32 %v3160, %v3878
        %v3915 = vadd.f32 %v3161, %v3881
        %v3916 = vld [vmem:[%s1127] sm:$0xe]
        %v3917 = vld [vmem:[%s1127 + $0xc] sm:$0xe]
        %v3918 = vld [vmem:[%s1127 + $0x18] sm:$0xe]
        %v3919 = vld [vmem:[%s1127 + $0x24] sm:$0xe]
        %v3920 = vld [vmem:[%s1127 + $0x30] sm:$0xe]
        %v3921 = vld [vmem:[%s1127 + $0x3c] sm:$0xe]
        %v3922 = vld [vmem:[%s1127 + $0x48] sm:$0xe]
        %v3923 = vld [vmem:[%s1127 + $0x54] sm:$0xe]
        %v3924 = vld [vmem:[%s1127 + $0x60] sm:$0xe]
        %v3925 = vld [vmem:[%s1127 + $0x6c] sm:$0xe]
        %v3926 = vld [vmem:[%s1127 + $0x78] sm:$0xe]
        %v3927 = vld [vmem:[%s1127 + $0x84] sm:$0xe]
        %v3928 = vld [vmem:[%s1127 + $0x90] sm:$0xe]
        %v3929 = vld [vmem:[%s1127 + $0x9c] sm:$0xe]
        %v3930 = vld [vmem:[%s1127 + $0xa8] sm:$0xe]
        %v3931 = vld [vmem:[%s1127 + $0xb4] sm:$0xe]
        %v3980 = vrot.slane %v3916, 5
        %v3981 = vrot.slane %v3980, 4
        %v3982 = vrot.slane %v3163, 5
        %v3983 = vsel %vm2341, %v3981, %v3982
        %v3984 = vrot.slane %v3982, 4
        %v3985 = vrot.slane %v3164, 5
        %v3986 = vsel %vm2341, %v3984, %v3985
        %v3987 = vrot.slane %v3917, 5
        %v3988 = vrot.slane %v3987, 4
        %v3989 = vrot.slane %v3166, 5
        %v3990 = vsel %vm2341, %v3988, %v3989
        %v3991 = vrot.slane %v3989, 4
        %v3992 = vrot.slane %v3167, 5
        %v3993 = vsel %vm2341, %v3991, %v3992
        %v3994 = vrot.slane %v3918, 5
        %v3995 = vrot.slane %v3994, 4
        %v3996 = vrot.slane %v3169, 5
        %v3997 = vsel %vm2341, %v3995, %v3996
        %v3998 = vrot.slane %v3996, 4
        %v3999 = vrot.slane %v3170, 5
        %v4000 = vsel %vm2341, %v3998, %v3999
        %v4001 = vrot.slane %v3919, 5
        %v4002 = vrot.slane %v4001, 4
        %v4003 = vrot.slane %v3172, 5
        %v4004 = vsel %vm2341, %v4002, %v4003
        %v4005 = vrot.slane %v4003, 4
        %v4006 = vrot.slane %v3173, 5
        %v4007 = vsel %vm2341, %v4005, %v4006
        %v4008 = vrot.slane %v3920, 5
        %v4009 = vrot.slane %v4008, 4
        %v4010 = vrot.slane %v3175, 5
        %v4011 = vsel %vm2341, %v4009, %v4010
        %v4012 = vrot.slane %v4010, 4
        %v4013 = vrot.slane %v3176, 5
        %v4014 = vsel %vm2341, %v4012, %v4013
        %v4015 = vrot.slane %v3921, 5
        %v4016 = vrot.slane %v4015, 4
        %v4017 = vrot.slane %v3178, 5
        %v4018 = vsel %vm2341, %v4016, %v4017
        %v4019 = vrot.slane %v4017, 4
        %v4020 = vrot.slane %v3179, 5
        %v4021 = vsel %vm2341, %v4019, %v4020
        %v4022 = vrot.slane %v3922, 5
        %v4023 = vrot.slane %v4022, 4
        %v4024 = vrot.slane %v3181, 5
        %v4025 = vsel %vm2341, %v4023, %v4024
        %v4026 = vrot.slane %v4024, 4
        %v4027 = vrot.slane %v3182, 5
        %v4028 = vsel %vm2341, %v4026, %v4027
        %v4029 = vrot.slane %v3923, 5
        %v4030 = vrot.slane %v4029, 4
        %v4031 = vrot.slane %v3184, 5
        %v4032 = vsel %vm2341, %v4030, %v4031
        %v4033 = vrot.slane %v4031, 4
        %v4034 = vrot.slane %v3185, 5
        %v4035 = vsel %vm2341, %v4033, %v4034
        %v4036 = vrot.slane %v3924, 5
        %v4037 = vrot.slane %v4036, 4
        %v4038 = vrot.slane %v3187, 5
        %v4039 = vsel %vm2341, %v4037, %v4038
        %v4040 = vrot.slane %v4038, 4
        %v4041 = vrot.slane %v3188, 5
        %v4042 = vsel %vm2341, %v4040, %v4041
        %v4043 = vrot.slane %v3925, 5
        %v4044 = vrot.slane %v4043, 4
        %v4045 = vrot.slane %v3190, 5
        %v4046 = vsel %vm2341, %v4044, %v4045
        %v4047 = vrot.slane %v4045, 4
        %v4048 = vrot.slane %v3191, 5
        %v4049 = vsel %vm2341, %v4047, %v4048
        %v4050 = vrot.slane %v3926, 5
        %v4051 = vrot.slane %v4050, 4
        %v4052 = vrot.slane %v3193, 5
        %v4053 = vsel %vm2341, %v4051, %v4052
        %v4054 = vrot.slane %v4052, 4
        %v4055 = vrot.slane %v3194, 5
        %v4056 = vsel %vm2341, %v4054, %v4055
        %v4057 = vrot.slane %v3927, 5
        %v4058 = vrot.slane %v4057, 4
        %v4059 = vrot.slane %v3196, 5
        %v4060 = vsel %vm2341, %v4058, %v4059
        %v4061 = vrot.slane %v4059, 4
        %v4062 = vrot.slane %v3197, 5
        %v4063 = vsel %vm2341, %v4061, %v4062
        %v4064 = vrot.slane %v3928, 5
        %v4065 = vrot.slane %v4064, 4
        %v4066 = vrot.slane %v3199, 5
        %v4067 = vsel %vm2341, %v4065, %v4066
        %v4068 = vrot.slane %v4066, 4
        %v4069 = vrot.slane %v3200, 5
        %v4070 = vsel %vm2341, %v4068, %v4069
        %v4071 = vrot.slane %v3929, 5
        %v4072 = vrot.slane %v4071, 4
        %v4073 = vrot.slane %v3202, 5
        %v4074 = vsel %vm2341, %v4072, %v4073
        %v4075 = vrot.slane %v4073, 4
        %v4076 = vrot.slane %v3203, 5
        %v4077 = vsel %vm2341, %v4075, %v4076
        %v4078 = vrot.slane %v3930, 5
        %v4079 = vrot.slane %v4078, 4
        %v4080 = vrot.slane %v3205, 5
        %v4081 = vsel %vm2341, %v4079, %v4080
        %v4082 = vrot.slane %v4080, 4
        %v4083 = vrot.slane %v3206, 5
        %v4084 = vsel %vm2341, %v4082, %v4083
        %v4085 = vrot.slane %v3931, 5
        %v4086 = vrot.slane %v4085, 4
        %v4087 = vrot.slane %v3208, 5
        %v4088 = vsel %vm2341, %v4086, %v4087
        %v4089 = vrot.slane %v4087, 4
        %v4090 = vrot.slane %v3209, 5
        %v4091 = vsel %vm2341, %v4089, %v4090
        %s4092 = scalar_lea.vmem [#allocation8], 320
        %v4093 = vld [vmem:[%s4092] sm:$0xf]
        %v4094 = vld [vmem:[%s4092 + $0x4] sm:$0xf]
        %v4095 = vld [vmem:[%s4092 + $0x8] sm:$0xf]
        %v4096 = vld [vmem:[%s4092 + $0xc] sm:$0xf]
        %v4097 = vld [vmem:[%s4092 + $0x10] sm:$0xf]
        %v4098 = vld [vmem:[%s4092 + $0x14] sm:$0xf]
        %v4099 = vld [vmem:[%s4092 + $0x18] sm:$0xf]
        %v4100 = vld [vmem:[%s4092 + $0x1c] sm:$0xf]
        %v4101 = vld [vmem:[%s4092 + $0x20] sm:$0xf]
        %v4102 = vld [vmem:[%s4092 + $0x24] sm:$0xf]
        %v4103 = vld [vmem:[%s4092 + $0x28] sm:$0xf]
        %v4104 = vld [vmem:[%s4092 + $0x2c] sm:$0xf]
        %v4105 = vld [vmem:[%s4092 + $0x30] sm:$0xf]
        %v4106 = vld [vmem:[%s4092 + $0x34] sm:$0xf]
        %v4107 = vld [vmem:[%s4092 + $0x38] sm:$0xf]
        %v4108 = vld [vmem:[%s4092 + $0x3c] sm:$0xf]
        %v4109 = vunpack.c.l.b16 %v3983
        %v4110 = vunpack.c.l.b16 %v3986
        %v4111 = vunpack.c.l.b16 %v3990
        %v4112 = vunpack.c.l.b16 %v3993
        %v4113 = vunpack.c.l.b16 %v3997
        %v4114 = vunpack.c.l.b16 %v4000
        %v4115 = vunpack.c.l.b16 %v4004
        %v4116 = vunpack.c.l.b16 %v4007
        %v4117 = vunpack.c.l.b16 %v4011
        %v4118 = vunpack.c.l.b16 %v4014
        %v4119 = vunpack.c.l.b16 %v4018
        %v4120 = vunpack.c.l.b16 %v4021
        %v4121 = vunpack.c.l.b16 %v4025
        %v4122 = vunpack.c.l.b16 %v4028
        %v4123 = vunpack.c.l.b16 %v4032
        %v4124 = vunpack.c.l.b16 %v4035
        %v4125 = vunpack.c.l.b16 %v4039
        %v4126 = vunpack.c.l.b16 %v4042
        %v4127 = vunpack.c.l.b16 %v4046
        %v4128 = vunpack.c.l.b16 %v4049
        %v4129 = vunpack.c.l.b16 %v4053
        %v4130 = vunpack.c.l.b16 %v4056
        %v4131 = vunpack.c.l.b16 %v4060
        %v4132 = vunpack.c.l.b16 %v4063
        %v4133 = vunpack.c.l.b16 %v4067
        %v4134 = vunpack.c.l.b16 %v4070
        %v4135 = vunpack.c.l.b16 %v4074
        %v4136 = vunpack.c.l.b16 %v4077
        %v4137 = vunpack.c.l.b16 %v4081
        %v4138 = vunpack.c.l.b16 %v4084
        %v4139 = vunpack.c.l.b16 %v4088
        %v4140 = vunpack.c.l.b16 %v4091
        %v4141 = vpack.c.b16 %v4110, %v4109
        %v4142 = vpack.c.b16 %v4112, %v4111
        %v4143 = vpack.c.b16 %v4114, %v4113
        %v4144 = vpack.c.b16 %v4116, %v4115
        %v4145 = vpack.c.b16 %v4118, %v4117
        %v4146 = vpack.c.b16 %v4120, %v4119
        %v4147 = vpack.c.b16 %v4122, %v4121
        %v4148 = vpack.c.b16 %v4124, %v4123
        %v4149 = vpack.c.b16 %v4126, %v4125
        %v4150 = vpack.c.b16 %v4128, %v4127
        %v4151 = vpack.c.b16 %v4130, %v4129
        %v4152 = vpack.c.b16 %v4132, %v4131
        %v4153 = vpack.c.b16 %v4134, %v4133
        %v4154 = vpack.c.b16 %v4136, %v4135
        %v4155 = vpack.c.b16 %v4138, %v4137
        %v4156 = vpack.c.b16 %v4140, %v4139
        %v4189 = vunpack.c.l.b16 %v4093
        %v4190 = vunpack.c.l.b16 %v4094
        %v4191 = vunpack.c.l.b16 %v4095
        %v4192 = vunpack.c.l.b16 %v4096
        %v4193 = vunpack.c.l.b16 %v4097
        %v4194 = vunpack.c.l.b16 %v4098
        %v4195 = vunpack.c.l.b16 %v4099
        %v4196 = vunpack.c.l.b16 %v4100
        %v4197 = vunpack.c.l.b16 %v4101
        %v4198 = vunpack.c.l.b16 %v4102
        %v4199 = vunpack.c.l.b16 %v4103
        %v4200 = vunpack.c.l.b16 %v4104
        %v4201 = vunpack.c.l.b16 %v4105
        %v4202 = vunpack.c.l.b16 %v4106
        %v4203 = vunpack.c.l.b16 %v4107
        %v4204 = vunpack.c.l.b16 %v4108
        %v4205 = vpack.c.b16 %v4190, %v4189
        %v4206 = vpack.c.b16 %v4192, %v4191
        %v4207 = vpack.c.b16 %v4194, %v4193
        %v4208 = vpack.c.b16 %v4196, %v4195
        %v4209 = vpack.c.b16 %v4198, %v4197
        %v4210 = vpack.c.b16 %v4200, %v4199
        %v4211 = vpack.c.b16 %v4202, %v4201
        %v4212 = vpack.c.b16 %v4204, %v4203
        %4221 = vmatprep.subr.bf16.mxu0 0
        %4222 = vmatpush1.bf16.msra.mxu0 %v4205
        %4223 = vmatprep.subr.bf16.mxu0 0
        %4224 = vmatpush1.bf16.msra.mxu0 %v4206
        %4225 = vmatprep.subr.bf16.mxu0 0
        %4226 = vmatpush1.bf16.msra.mxu0 %v4207
        %4227 = vmatprep.subr.bf16.mxu0 0
        %4228 = vmatpush1.bf16.msra.mxu0 %v4208
        %4229 = vmatprep.subr.bf16.mxu0 0
        %4230 = vmatpush1.bf16.msra.mxu0 %v4209
        %4231 = vmatprep.subr.bf16.mxu0 0
        %4232 = vmatpush1.bf16.msra.mxu0 %v4210
        %4233 = vmatprep.subr.bf16.mxu0 0
        %4234 = vmatpush1.bf16.msra.mxu0 %v4211
        %4235 = vmatprep.subr.bf16.mxu0 0
        %4236 = vmatpush1.bf16.msra.mxu0 %v4212
        %4237 = vmatprep.subr.bf16.mxu0 0
        %4238 = vmatpush1.bf16.msra.mxu0 0
        %4239 = vmatprep.subr.bf16.mxu0 0
        %4240 = vmatpush1.bf16.msra.mxu0 0
        %4241 = vmatprep.subr.bf16.mxu0 0
        %4242 = vmatpush1.bf16.msra.mxu0 0
        %4243 = vmatprep.subr.bf16.mxu0 0
        %4244 = vmatpush1.bf16.msra.mxu0 0
        %4245 = vmatprep.subr.bf16.mxu0 0
        %4246 = vmatpush1.bf16.msra.mxu0 0
        %4247 = vmatprep.subr.bf16.mxu0 0
        %4248 = vmatpush1.bf16.msra.mxu0 0
        %4249 = vmatprep.subr.bf16.mxu0 0
        %4250 = vmatpush1.bf16.msra.mxu0 0
        %4251 = vmatprep.subr.bf16.mxu0 0
        %4252 = vmatpush1.bf16.msra.mxu0 0
        %4253 = vmatprep.mubr.bf16.mxu0 0
        %4254 = vmatmul.mubr.bf16.gmra.mrb[0].mxu0 %v4141
        %v4255 = vpop.f32.mrb[0].mxu0
        %v4256 = vadd.f32 0.0, %v4255
        %v4257 = vpop.f32.mrb[0].mxu0
        %v4258 = vpop.f32.mrb[0].mxu0
        %v4259 = vadd.f32 0.0, %v4258
        %v4260 = vpop.f32.mrb[0].mxu0
        %4261 = vmatprep.mubr.bf16.mxu0 0
        %4262 = vmatmul.mubr.bf16.gmra.mrb[0].mxu0 %v4142
        %v4263 = vpop.f32.mrb[0].mxu0
        %v4264 = vadd.f32 0.0, %v4263
        %v4265 = vpop.f32.mrb[0].mxu0
        %v4266 = vpop.f32.mrb[0].mxu0
        %v4267 = vadd.f32 0.0, %v4266
        %v4268 = vpop.f32.mrb[0].mxu0
        %4269 = vmatprep.mubr.bf16.mxu0 0
        %4270 = vmatmul.mubr.bf16.gmra.mrb[0].mxu0 %v4143
        %v4271 = vpop.f32.mrb[0].mxu0
        %v4272 = vadd.f32 0.0, %v4271
        %v4273 = vpop.f32.mrb[0].mxu0
        %v4274 = vpop.f32.mrb[0].mxu0
        %v4275 = vadd.f32 0.0, %v4274
        %v4276 = vpop.f32.mrb[0].mxu0
        %4277 = vmatprep.mubr.bf16.mxu0 0
        %4278 = vmatmul.mubr.bf16.gmra.mrb[0].mxu0 %v4144
        %v4279 = vpop.f32.mrb[0].mxu0
        %v4280 = vadd.f32 0.0, %v4279
        %v4281 = vpop.f32.mrb[0].mxu0
        %v4282 = vpop.f32.mrb[0].mxu0
        %v4283 = vadd.f32 0.0, %v4282
        %v4284 = vpop.f32.mrb[0].mxu0
        %4285 = vmatprep.mubr.bf16.mxu0 0
        %4286 = vmatmul.mubr.bf16.gmra.mrb[0].mxu0 %v4145
        %v4287 = vpop.f32.mrb[0].mxu0
        %v4288 = vadd.f32 0.0, %v4287
        %v4289 = vpop.f32.mrb[0].mxu0
        %v4290 = vpop.f32.mrb[0].mxu0
        %v4291 = vadd.f32 0.0, %v4290
        %v4292 = vpop.f32.mrb[0].mxu0
        %4293 = vmatprep.mubr.bf16.mxu0 0
        %4294 = vmatmul.mubr.bf16.gmra.mrb[0].mxu0 %v4146
        %v4295 = vpop.f32.mrb[0].mxu0
        %v4296 = vadd.f32 0.0, %v4295
        %v4297 = vpop.f32.mrb[0].mxu0
        %v4298 = vpop.f32.mrb[0].mxu0
        %v4299 = vadd.f32 0.0, %v4298
        %v4300 = vpop.f32.mrb[0].mxu0
        %4301 = vmatprep.mubr.bf16.mxu0 0
        %4302 = vmatmul.mubr.bf16.gmra.mrb[0].mxu0 %v4147
        %v4303 = vpop.f32.mrb[0].mxu0
        %v4304 = vadd.f32 0.0, %v4303
        %v4305 = vpop.f32.mrb[0].mxu0
        %v4306 = vpop.f32.mrb[0].mxu0
        %v4307 = vadd.f32 0.0, %v4306
        %v4308 = vpop.f32.mrb[0].mxu0
        %4309 = vmatprep.mubr.bf16.mxu0 0
        %4310 = vmatmul.mubr.bf16.gmra.mrb[0].mxu0 %v4148
        %v4311 = vpop.f32.mrb[0].mxu0
        %v4312 = vadd.f32 0.0, %v4311
        %v4313 = vpop.f32.mrb[0].mxu0
        %v4314 = vpop.f32.mrb[0].mxu0
        %v4315 = vadd.f32 0.0, %v4314
        %v4316 = vpop.f32.mrb[0].mxu0
        %4317 = vmatprep.mubr.bf16.mxu0 0
        %4318 = vmatmul.mubr.bf16.gmra.mrb[0].mxu0 %v4149
        %v4319 = vpop.f32.mrb[0].mxu0
        %v4320 = vadd.f32 0.0, %v4319
        %v4321 = vpop.f32.mrb[0].mxu0
        %v4322 = vpop.f32.mrb[0].mxu0
        %v4323 = vadd.f32 0.0, %v4322
        %v4324 = vpop.f32.mrb[0].mxu0
        %4325 = vmatprep.mubr.bf16.mxu0 0
        %4326 = vmatmul.mubr.bf16.gmra.mrb[0].mxu0 %v4150
        %v4327 = vpop.f32.mrb[0].mxu0
        %v4328 = vadd.f32 0.0, %v4327
        %v4329 = vpop.f32.mrb[0].mxu0
        %v4330 = vpop.f32.mrb[0].mxu0
        %v4331 = vadd.f32 0.0, %v4330
        %v4332 = vpop.f32.mrb[0].mxu0
        %4333 = vmatprep.mubr.bf16.mxu0 0
        %4334 = vmatmul.mubr.bf16.gmra.mrb[0].mxu0 %v4151
        %v4335 = vpop.f32.mrb[0].mxu0
        %v4336 = vadd.f32 0.0, %v4335
        %v4337 = vpop.f32.mrb[0].mxu0
        %v4338 = vpop.f32.mrb[0].mxu0
        %v4339 = vadd.f32 0.0, %v4338
        %v4340 = vpop.f32.mrb[0].mxu0
        %4341 = vmatprep.mubr.bf16.mxu0 0
        %4342 = vmatmul.mubr.bf16.gmra.mrb[0].mxu0 %v4152
        %v4343 = vpop.f32.mrb[0].mxu0
        %v4344 = vadd.f32 0.0, %v4343
        %v4345 = vpop.f32.mrb[0].mxu0
        %v4346 = vpop.f32.mrb[0].mxu0
        %v4347 = vadd.f32 0.0, %v4346
        %v4348 = vpop.f32.mrb[0].mxu0
        %4349 = vmatprep.mubr.bf16.mxu0 0
        %4350 = vmatmul.mubr.bf16.gmra.mrb[0].mxu0 %v4153
        %v4351 = vpop.f32.mrb[0].mxu0
        %v4352 = vadd.f32 0.0, %v4351
        %v4353 = vpop.f32.mrb[0].mxu0
        %v4354 = vpop.f32.mrb[0].mxu0
        %v4355 = vadd.f32 0.0, %v4354
        %v4356 = vpop.f32.mrb[0].mxu0
        %4357 = vmatprep.mubr.bf16.mxu0 0
        %4358 = vmatmul.mubr.bf16.gmra.mrb[0].mxu0 %v4154
        %v4359 = vpop.f32.mrb[0].mxu0
        %v4360 = vadd.f32 0.0, %v4359
        %v4361 = vpop.f32.mrb[0].mxu0
        %v4362 = vpop.f32.mrb[0].mxu0
        %v4363 = vadd.f32 0.0, %v4362
        %v4364 = vpop.f32.mrb[0].mxu0
        %4365 = vmatprep.mubr.bf16.mxu0 0
        %4366 = vmatmul.mubr.bf16.gmra.mrb[0].mxu0 %v4155
        %v4367 = vpop.f32.mrb[0].mxu0
        %v4368 = vadd.f32 0.0, %v4367
        %v4369 = vpop.f32.mrb[0].mxu0
        %v4370 = vpop.f32.mrb[0].mxu0
        %v4371 = vadd.f32 0.0, %v4370
        %v4372 = vpop.f32.mrb[0].mxu0
        %4373 = vmatprep.mubr.bf16.mxu0 0
        %4374 = vmatmul.mubr.bf16.gmra.mrb[0].mxu0 %v4156
        %v4375 = vpop.f32.mrb[0].mxu0
        %v4376 = vadd.f32 0.0, %v4375
        %v4377 = vpop.f32.mrb[0].mxu0
        %v4378 = vpop.f32.mrb[0].mxu0
        %v4379 = vadd.f32 0.0, %v4378
        %v4380 = vpop.f32.mrb[0].mxu0
        %4381 = vdwg.mxu0
        %v4382 = vadd.f32 %v3884, %v4256
        %v4383 = vadd.f32 %v3885, %v4259
        %v4384 = vadd.f32 %v3886, %v4264
        %v4385 = vadd.f32 %v3887, %v4267
        %v4386 = vadd.f32 %v3888, %v4272
        %v4387 = vadd.f32 %v3889, %v4275
        %v4388 = vadd.f32 %v3890, %v4280
        %v4389 = vadd.f32 %v3891, %v4283
        %v4390 = vadd.f32 %v3892, %v4288
        %v4391 = vadd.f32 %v3893, %v4291
        %v4392 = vadd.f32 %v3894, %v4296
        %v4393 = vadd.f32 %v3895, %v4299
        %v4394 = vadd.f32 %v3896, %v4304
        %v4395 = vadd.f32 %v3897, %v4307
        %v4396 = vadd.f32 %v3898, %v4312
        %v4397 = vadd.f32 %v3899, %v4315
        %v4398 = vadd.f32 %v3900, %v4320
        %v4399 = vadd.f32 %v3901, %v4323
        %v4400 = vadd.f32 %v3902, %v4328
        %v4401 = vadd.f32 %v3903, %v4331
        %v4402 = vadd.f32 %v3904, %v4336
        %v4403 = vadd.f32 %v3905, %v4339
        %v4404 = vadd.f32 %v3906, %v4344
        %v4405 = vadd.f32 %v3907, %v4347
        %v4406 = vadd.f32 %v3908, %v4352
        %v4407 = vadd.f32 %v3909, %v4355
        %v4408 = vadd.f32 %v3910, %v4360
        %v4409 = vadd.f32 %v3911, %v4363
        %v4410 = vadd.f32 %v3912, %v4368
        %v4411 = vadd.f32 %v3913, %v4371
        %v4412 = vadd.f32 %v3914, %v4376
        %v4413 = vadd.f32 %v3915, %v4379
        %s4414 = scalar_lea.vmem [#allocation2], 24
        %v4415 = vld [vmem:[%s4414] sm:$0xf]
        %v4416 = vld [vmem:[%s4414 + $0x4] sm:$0xf]
        %v4417 = vld [vmem:[%s4414 + $0xc] sm:$0xf]
        %v4418 = vld [vmem:[%s4414 + $0x10] sm:$0xf]
        %v4419 = vld [vmem:[%s4414 + $0x18] sm:$0xf]
        %v4420 = vld [vmem:[%s4414 + $0x1c] sm:$0xf]
        %v4421 = vld [vmem:[%s4414 + $0x24] sm:$0xf]
        %v4422 = vld [vmem:[%s4414 + $0x28] sm:$0xf]
        %v4423 = vld [vmem:[%s4414 + $0x30] sm:$0xf]
        %v4424 = vld [vmem:[%s4414 + $0x34] sm:$0xf]
        %v4425 = vld [vmem:[%s4414 + $0x3c] sm:$0xf]
        %v4426 = vld [vmem:[%s4414 + $0x40] sm:$0xf]
        %v4427 = vld [vmem:[%s4414 + $0x48] sm:$0xf]
        %v4428 = vld [vmem:[%s4414 + $0x4c] sm:$0xf]
        %v4429 = vld [vmem:[%s4414 + $0x54] sm:$0xf]
        %v4430 = vld [vmem:[%s4414 + $0x58] sm:$0xf]
        %v4431 = vld [vmem:[%s4414 + $0x60] sm:$0xf]
        %v4432 = vld [vmem:[%s4414 + $0x64] sm:$0xf]
        %v4433 = vld [vmem:[%s4414 + $0x6c] sm:$0xf]
        %v4434 = vld [vmem:[%s4414 + $0x70] sm:$0xf]
        %v4435 = vld [vmem:[%s4414 + $0x78] sm:$0xf]
        %v4436 = vld [vmem:[%s4414 + $0x7c] sm:$0xf]
        %v4437 = vld [vmem:[%s4414 + $0x84] sm:$0xf]
        %v4438 = vld [vmem:[%s4414 + $0x88] sm:$0xf]
        %v4439 = vld [vmem:[%s4414 + $0x90] sm:$0xf]
        %v4440 = vld [vmem:[%s4414 + $0x94] sm:$0xf]
        %v4441 = vld [vmem:[%s4414 + $0x9c] sm:$0xf]
        %v4442 = vld [vmem:[%s4414 + $0xa0] sm:$0xf]
        %v4443 = vld [vmem:[%s4414 + $0xa8] sm:$0xf]
        %v4444 = vld [vmem:[%s4414 + $0xac] sm:$0xf]
        %v4445 = vld [vmem:[%s4414 + $0xb4] sm:$0xf]
        %v4446 = vld [vmem:[%s4414 + $0xb8] sm:$0xf]
        %s4447 = scalar_lea.vmem [#allocation8], 384
        %v4448 = vld [vmem:[%s4447] sm:$0xf]
        %v4449 = vld [vmem:[%s4447 + $0x4] sm:$0xf]
        %v4450 = vld [vmem:[%s4447 + $0x8] sm:$0xf]
        %v4451 = vld [vmem:[%s4447 + $0xc] sm:$0xf]
        %v4452 = vld [vmem:[%s4447 + $0x10] sm:$0xf]
        %v4453 = vld [vmem:[%s4447 + $0x14] sm:$0xf]
        %v4454 = vld [vmem:[%s4447 + $0x18] sm:$0xf]
        %v4455 = vld [vmem:[%s4447 + $0x1c] sm:$0xf]
        %v4456 = vld [vmem:[%s4447 + $0x20] sm:$0xf]
        %v4457 = vld [vmem:[%s4447 + $0x24] sm:$0xf]
        %v4458 = vld [vmem:[%s4447 + $0x28] sm:$0xf]
        %v4459 = vld [vmem:[%s4447 + $0x2c] sm:$0xf]
        %v4460 = vld [vmem:[%s4447 + $0x30] sm:$0xf]
        %v4461 = vld [vmem:[%s4447 + $0x34] sm:$0xf]
        %v4462 = vld [vmem:[%s4447 + $0x38] sm:$0xf]
        %v4463 = vld [vmem:[%s4447 + $0x3c] sm:$0xf]
        %v4496 = vunpack.c.l.b16 %v4415
        %v4497 = vunpack.c.l.b16 %v4416
        %v4498 = vunpack.c.l.b16 %v4417
        %v4499 = vunpack.c.l.b16 %v4418
        %v4500 = vunpack.c.l.b16 %v4419
        %v4501 = vunpack.c.l.b16 %v4420
        %v4502 = vunpack.c.l.b16 %v4421
        %v4503 = vunpack.c.l.b16 %v4422
        %v4504 = vunpack.c.l.b16 %v4423
        %v4505 = vunpack.c.l.b16 %v4424
        %v4506 = vunpack.c.l.b16 %v4425
        %v4507 = vunpack.c.l.b16 %v4426
        %v4508 = vunpack.c.l.b16 %v4427
        %v4509 = vunpack.c.l.b16 %v4428
        %v4510 = vunpack.c.l.b16 %v4429
        %v4511 = vunpack.c.l.b16 %v4430
        %v4512 = vunpack.c.l.b16 %v4431
        %v4513 = vunpack.c.l.b16 %v4432
        %v4514 = vunpack.c.l.b16 %v4433
        %v4515 = vunpack.c.l.b16 %v4434
        %v4516 = vunpack.c.l.b16 %v4435
        %v4517 = vunpack.c.l.b16 %v4436
        %v4518 = vunpack.c.l.b16 %v4437
        %v4519 = vunpack.c.l.b16 %v4438
        %v4520 = vunpack.c.l.b16 %v4439
        %v4521 = vunpack.c.l.b16 %v4440
        %v4522 = vunpack.c.l.b16 %v4441
        %v4523 = vunpack.c.l.b16 %v4442
        %v4524 = vunpack.c.l.b16 %v4443
        %v4525 = vunpack.c.l.b16 %v4444
        %v4526 = vunpack.c.l.b16 %v4445
        %v4527 = vunpack.c.l.b16 %v4446
        %v4528 = vpack.c.b16 %v4497, %v4496
        %v4529 = vpack.c.b16 %v4499, %v4498
        %v4530 = vpack.c.b16 %v4501, %v4500
        %v4531 = vpack.c.b16 %v4503, %v4502
        %v4532 = vpack.c.b16 %v4505, %v4504
        %v4533 = vpack.c.b16 %v4507, %v4506
        %v4534 = vpack.c.b16 %v4509, %v4508
        %v4535 = vpack.c.b16 %v4511, %v4510
        %v4536 = vpack.c.b16 %v4513, %v4512
        %v4537 = vpack.c.b16 %v4515, %v4514
        %v4538 = vpack.c.b16 %v4517, %v4516
        %v4539 = vpack.c.b16 %v4519, %v4518
        %v4540 = vpack.c.b16 %v4521, %v4520
        %v4541 = vpack.c.b16 %v4523, %v4522
        %v4542 = vpack.c.b16 %v4525, %v4524
        %v4543 = vpack.c.b16 %v4527, %v4526
        %v4576 = vunpack.c.l.b16 %v4448
        %v4577 = vunpack.c.l.b16 %v4449
        %v4578 = vunpack.c.l.b16 %v4450
        %v4579 = vunpack.c.l.b16 %v4451
        %v4580 = vunpack.c.l.b16 %v4452
        %v4581 = vunpack.c.l.b16 %v4453
        %v4582 = vunpack.c.l.b16 %v4454
        %v4583 = vunpack.c.l.b16 %v4455
        %v4584 = vunpack.c.l.b16 %v4456
        %v4585 = vunpack.c.l.b16 %v4457
        %v4586 = vunpack.c.l.b16 %v4458
        %v4587 = vunpack.c.l.b16 %v4459
        %v4588 = vunpack.c.l.b16 %v4460
        %v4589 = vunpack.c.l.b16 %v4461
        %v4590 = vunpack.c.l.b16 %v4462
        %v4591 = vunpack.c.l.b16 %v4463
        %v4592 = vpack.c.b16 %v4577, %v4576
        %v4593 = vpack.c.b16 %v4579, %v4578
        %v4594 = vpack.c.b16 %v4581, %v4580
        %v4595 = vpack.c.b16 %v4583, %v4582
        %v4596 = vpack.c.b16 %v4585, %v4584
        %v4597 = vpack.c.b16 %v4587, %v4586
        %v4598 = vpack.c.b16 %v4589, %v4588
        %v4599 = vpack.c.b16 %v4591, %v4590
        %4608 = vmatprep.subr.bf16.mxu0 0
        %4609 = vmatpush1.bf16.msra.mxu0 %v4592
        %4610 = vmatprep.subr.bf16.mxu0 0
        %4611 = vmatpush1.bf16.msra.mxu0 %v4593
        %4612 = vmatprep.subr.bf16.mxu0 0
        %4613 = vmatpush1.bf16.msra.mxu0 %v4594
        %4614 = vmatprep.subr.bf16.mxu0 0
        %4615 = vmatpush1.bf16.msra.mxu0 %v4595
        %4616 = vmatprep.subr.bf16.mxu0 0
        %4617 = vmatpush1.bf16.msra.mxu0 %v4596
        %4618 = vmatprep.subr.bf16.mxu0 0
        %4619 = vmatpush1.bf16.msra.mxu0 %v4597
        %4620 = vmatprep.subr.bf16.mxu0 0
        %4621 = vmatpush1.bf16.msra.mxu0 %v4598
        %4622 = vmatprep.subr.bf16.mxu0 0
        %4623 = vmatpush1.bf16.msra.mxu0 %v4599
        %4624 = vmatprep.subr.bf16.mxu0 0
        %4625 = vmatpush1.bf16.msra.mxu0 0
        %4626 = vmatprep.subr.bf16.mxu0 0
        %4627 = vmatpush1.bf16.msra.mxu0 0
        %4628 = vmatprep.subr.bf16.mxu0 0
        %4629 = vmatpush1.bf16.msra.mxu0 0
        %4630 = vmatprep.subr.bf16.mxu0 0
        %4631 = vmatpush1.bf16.msra.mxu0 0
        %4632 = vmatprep.subr.bf16.mxu0 0
        %4633 = vmatpush1.bf16.msra.mxu0 0
        %4634 = vmatprep.subr.bf16.mxu0 0
        %4635 = vmatpush1.bf16.msra.mxu0 0
        %4636 = vmatprep.subr.bf16.mxu0 0
        %4637 = vmatpush1.bf16.msra.mxu0 0
        %4638 = vmatprep.subr.bf16.mxu0 0
        %4639 = vmatpush1.bf16.msra.mxu0 0
        %4640 = vmatprep.mubr.bf16.mxu0 0
        %4641 = vmatmul.mubr.bf16.gmra.mrb[0].mxu0 %v4528
        %v4642 = vpop.f32.mrb[0].mxu0
        %v4643 = vadd.f32 0.0, %v4642
        %v4644 = vpop.f32.mrb[0].mxu0
        %v4645 = vpop.f32.mrb[0].mxu0
        %v4646 = vadd.f32 0.0, %v4645
        %v4647 = vpop.f32.mrb[0].mxu0
        %4648 = vmatprep.mubr.bf16.mxu0 0
        %4649 = vmatmul.mubr.bf16.gmra.mrb[0].mxu0 %v4529
        %v4650 = vpop.f32.mrb[0].mxu0
        %v4651 = vadd.f32 0.0, %v4650
        %v4652 = vpop.f32.mrb[0].mxu0
        %v4653 = vpop.f32.mrb[0].mxu0
        %v4654 = vadd.f32 0.0, %v4653
        %v4655 = vpop.f32.mrb[0].mxu0
        %4656 = vmatprep.mubr.bf16.mxu0 0
        %4657 = vmatmul.mubr.bf16.gmra.mrb[0].mxu0 %v4530
        %v4658 = vpop.f32.mrb[0].mxu0
        %v4659 = vadd.f32 0.0, %v4658
        %v4660 = vpop.f32.mrb[0].mxu0
        %v4661 = vpop.f32.mrb[0].mxu0
        %v4662 = vadd.f32 0.0, %v4661
        %v4663 = vpop.f32.mrb[0].mxu0
        %4664 = vmatprep.mubr.bf16.mxu0 0
        %4665 = vmatmul.mubr.bf16.gmra.mrb[0].mxu0 %v4531
        %v4666 = vpop.f32.mrb[0].mxu0
        %v4667 = vadd.f32 0.0, %v4666
        %v4668 = vpop.f32.mrb[0].mxu0
        %v4669 = vpop.f32.mrb[0].mxu0
        %v4670 = vadd.f32 0.0, %v4669
        %v4671 = vpop.f32.mrb[0].mxu0
        %4672 = vmatprep.mubr.bf16.mxu0 0
        %4673 = vmatmul.mubr.bf16.gmra.mrb[0].mxu0 %v4532
        %v4674 = vpop.f32.mrb[0].mxu0
        %v4675 = vadd.f32 0.0, %v4674
        %v4676 = vpop.f32.mrb[0].mxu0
        %v4677 = vpop.f32.mrb[0].mxu0
        %v4678 = vadd.f32 0.0, %v4677
        %v4679 = vpop.f32.mrb[0].mxu0
        %4680 = vmatprep.mubr.bf16.mxu0 0
        %4681 = vmatmul.mubr.bf16.gmra.mrb[0].mxu0 %v4533
        %v4682 = vpop.f32.mrb[0].mxu0
        %v4683 = vadd.f32 0.0, %v4682
        %v4684 = vpop.f32.mrb[0].mxu0
        %v4685 = vpop.f32.mrb[0].mxu0
        %v4686 = vadd.f32 0.0, %v4685
        %v4687 = vpop.f32.mrb[0].mxu0
        %4688 = vmatprep.mubr.bf16.mxu0 0
        %4689 = vmatmul.mubr.bf16.gmra.mrb[0].mxu0 %v4534
        %v4690 = vpop.f32.mrb[0].mxu0
        %v4691 = vadd.f32 0.0, %v4690
        %v4692 = vpop.f32.mrb[0].mxu0
        %v4693 = vpop.f32.mrb[0].mxu0
        %v4694 = vadd.f32 0.0, %v4693
        %v4695 = vpop.f32.mrb[0].mxu0
        %4696 = vmatprep.mubr.bf16.mxu0 0
        %4697 = vmatmul.mubr.bf16.gmra.mrb[0].mxu0 %v4535
        %v4698 = vpop.f32.mrb[0].mxu0
        %v4699 = vadd.f32 0.0, %v4698
        %v4700 = vpop.f32.mrb[0].mxu0
        %v4701 = vpop.f32.mrb[0].mxu0
        %v4702 = vadd.f32 0.0, %v4701
        %v4703 = vpop.f32.mrb[0].mxu0
        %4704 = vmatprep.mubr.bf16.mxu0 0
        %4705 = vmatmul.mubr.bf16.gmra.mrb[0].mxu0 %v4536
        %v4706 = vpop.f32.mrb[0].mxu0
        %v4707 = vadd.f32 0.0, %v4706
        %v4708 = vpop.f32.mrb[0].mxu0
        %v4709 = vpop.f32.mrb[0].mxu0
        %v4710 = vadd.f32 0.0, %v4709
        %v4711 = vpop.f32.mrb[0].mxu0
        %4712 = vmatprep.mubr.bf16.mxu0 0
        %4713 = vmatmul.mubr.bf16.gmra.mrb[0].mxu0 %v4537
        %v4714 = vpop.f32.mrb[0].mxu0
        %v4715 = vadd.f32 0.0, %v4714
        %v4716 = vpop.f32.mrb[0].mxu0
        %v4717 = vpop.f32.mrb[0].mxu0
        %v4718 = vadd.f32 0.0, %v4717
        %v4719 = vpop.f32.mrb[0].mxu0
        %4720 = vmatprep.mubr.bf16.mxu0 0
        %4721 = vmatmul.mubr.bf16.gmra.mrb[0].mxu0 %v4538
        %v4722 = vpop.f32.mrb[0].mxu0
        %v4723 = vadd.f32 0.0, %v4722
        %v4724 = vpop.f32.mrb[0].mxu0
        %v4725 = vpop.f32.mrb[0].mxu0
        %v4726 = vadd.f32 0.0, %v4725
        %v4727 = vpop.f32.mrb[0].mxu0
        %4728 = vmatprep.mubr.bf16.mxu0 0
        %4729 = vmatmul.mubr.bf16.gmra.mrb[0].mxu0 %v4539
        %v4730 = vpop.f32.mrb[0].mxu0
        %v4731 = vadd.f32 0.0, %v4730
        %v4732 = vpop.f32.mrb[0].mxu0
        %v4733 = vpop.f32.mrb[0].mxu0
        %v4734 = vadd.f32 0.0, %v4733
        %v4735 = vpop.f32.mrb[0].mxu0
        %4736 = vmatprep.mubr.bf16.mxu0 0
        %4737 = vmatmul.mubr.bf16.gmra.mrb[0].mxu0 %v4540
        %v4738 = vpop.f32.mrb[0].mxu0
        %v4739 = vadd.f32 0.0, %v4738
        %v4740 = vpop.f32.mrb[0].mxu0
        %v4741 = vpop.f32.mrb[0].mxu0
        %v4742 = vadd.f32 0.0, %v4741
        %v4743 = vpop.f32.mrb[0].mxu0
        %4744 = vmatprep.mubr.bf16.mxu0 0
        %4745 = vmatmul.mubr.bf16.gmra.mrb[0].mxu0 %v4541
        %v4746 = vpop.f32.mrb[0].mxu0
        %v4747 = vadd.f32 0.0, %v4746
        %v4748 = vpop.f32.mrb[0].mxu0
        %v4749 = vpop.f32.mrb[0].mxu0
        %v4750 = vadd.f32 0.0, %v4749
        %v4751 = vpop.f32.mrb[0].mxu0
        %4752 = vmatprep.mubr.bf16.mxu0 0
        %4753 = vmatmul.mubr.bf16.gmra.mrb[0].mxu0 %v4542
        %v4754 = vpop.f32.mrb[0].mxu0
        %v4755 = vadd.f32 0.0, %v4754
        %v4756 = vpop.f32.mrb[0].mxu0
        %v4757 = vpop.f32.mrb[0].mxu0
        %v4758 = vadd.f32 0.0, %v4757
        %v4759 = vpop.f32.mrb[0].mxu0
        %4760 = vmatprep.mubr.bf16.mxu0 0
        %4761 = vmatmul.mubr.bf16.gmra.mrb[0].mxu0 %v4543
        %v4762 = vpop.f32.mrb[0].mxu0
        %v4763 = vadd.f32 0.0, %v4762
        %v4764 = vpop.f32.mrb[0].mxu0
        %v4765 = vpop.f32.mrb[0].mxu0
        %v4766 = vadd.f32 0.0, %v4765
        %v4767 = vpop.f32.mrb[0].mxu0
        %4768 = vdwg.mxu0
        %v4769 = vadd.f32 %v4382, %v4643
        %v4770 = vadd.f32 %v4383, %v4646
        %v4771 = vadd.f32 %v4384, %v4651
        %v4772 = vadd.f32 %v4385, %v4654
        %v4773 = vadd.f32 %v4386, %v4659
        %v4774 = vadd.f32 %v4387, %v4662
        %v4775 = vadd.f32 %v4388, %v4667
        %v4776 = vadd.f32 %v4389, %v4670
        %v4777 = vadd.f32 %v4390, %v4675
        %v4778 = vadd.f32 %v4391, %v4678
        %v4779 = vadd.f32 %v4392, %v4683
        %v4780 = vadd.f32 %v4393, %v4686
        %v4781 = vadd.f32 %v4394, %v4691
        %v4782 = vadd.f32 %v4395, %v4694
        %v4783 = vadd.f32 %v4396, %v4699
        %v4784 = vadd.f32 %v4397, %v4702
        %v4785 = vadd.f32 %v4398, %v4707
        %v4786 = vadd.f32 %v4399, %v4710
        %v4787 = vadd.f32 %v4400, %v4715
        %v4788 = vadd.f32 %v4401, %v4718
        %v4789 = vadd.f32 %v4402, %v4723
        %v4790 = vadd.f32 %v4403, %v4726
        %v4791 = vadd.f32 %v4404, %v4731
        %v4792 = vadd.f32 %v4405, %v4734
        %v4793 = vadd.f32 %v4406, %v4739
        %v4794 = vadd.f32 %v4407, %v4742
        %v4795 = vadd.f32 %v4408, %v4747
        %v4796 = vadd.f32 %v4409, %v4750
        %v4797 = vadd.f32 %v4410, %v4755
        %v4798 = vadd.f32 %v4411, %v4758
        %v4799 = vadd.f32 %v4412, %v4763
        %v4800 = vadd.f32 %v4413, %v4766
        %v4801 = vld [vmem:[%s4414] sm:$0xf]
        %v4802 = vld [vmem:[%s4414 + $0x4] sm:$0xf]
        %v4803 = vld [vmem:[%s4414 + $0x8] sm:$0x1]
        %v4804 = vld [vmem:[%s4414 + $0xc] sm:$0xf]
        %v4805 = vld [vmem:[%s4414 + $0x10] sm:$0xf]
        %v4806 = vld [vmem:[%s4414 + $0x14] sm:$0x1]
        %v4807 = vld [vmem:[%s4414 + $0x18] sm:$0xf]
        %v4808 = vld [vmem:[%s4414 + $0x1c] sm:$0xf]
        %v4809 = vld [vmem:[%s4414 + $0x20] sm:$0x1]
        %v4810 = vld [vmem:[%s4414 + $0x24] sm:$0xf]
        %v4811 = vld [vmem:[%s4414 + $0x28] sm:$0xf]
        %v4812 = vld [vmem:[%s4414 + $0x2c] sm:$0x1]
        %v4813 = vld [vmem:[%s4414 + $0x30] sm:$0xf]
        %v4814 = vld [vmem:[%s4414 + $0x34] sm:$0xf]
        %v4815 = vld [vmem:[%s4414 + $0x38] sm:$0x1]
        %v4816 = vld [vmem:[%s4414 + $0x3c] sm:$0xf]
        %v4817 = vld [vmem:[%s4414 + $0x40] sm:$0xf]
        %v4818 = vld [vmem:[%s4414 + $0x44] sm:$0x1]
        %v4819 = vld [vmem:[%s4414 + $0x48] sm:$0xf]
        %v4820 = vld [vmem:[%s4414 + $0x4c] sm:$0xf]
        %v4821 = vld [vmem:[%s4414 + $0x50] sm:$0x1]
        %v4822 = vld [vmem:[%s4414 + $0x54] sm:$0xf]
        %v4823 = vld [vmem:[%s4414 + $0x58] sm:$0xf]
        %v4824 = vld [vmem:[%s4414 + $0x5c] sm:$0x1]
        %v4825 = vld [vmem:[%s4414 + $0x60] sm:$0xf]
        %v4826 = vld [vmem:[%s4414 + $0x64] sm:$0xf]
        %v4827 = vld [vmem:[%s4414 + $0x68] sm:$0x1]
        %v4828 = vld [vmem:[%s4414 + $0x6c] sm:$0xf]
        %v4829 = vld [vmem:[%s4414 + $0x70] sm:$0xf]
        %v4830 = vld [vmem:[%s4414 + $0x74] sm:$0x1]
        %v4831 = vld [vmem:[%s4414 + $0x78] sm:$0xf]
        %v4832 = vld [vmem:[%s4414 + $0x7c] sm:$0xf]
        %v4833 = vld [vmem:[%s4414 + $0x80] sm:$0x1]
        %v4834 = vld [vmem:[%s4414 + $0x84] sm:$0xf]
        %v4835 = vld [vmem:[%s4414 + $0x88] sm:$0xf]
        %v4836 = vld [vmem:[%s4414 + $0x8c] sm:$0x1]
        %v4837 = vld [vmem:[%s4414 + $0x90] sm:$0xf]
        %v4838 = vld [vmem:[%s4414 + $0x94] sm:$0xf]
        %v4839 = vld [vmem:[%s4414 + $0x98] sm:$0x1]
        %v4840 = vld [vmem:[%s4414 + $0x9c] sm:$0xf]
        %v4841 = vld [vmem:[%s4414 + $0xa0] sm:$0xf]
        %v4842 = vld [vmem:[%s4414 + $0xa4] sm:$0x1]
        %v4843 = vld [vmem:[%s4414 + $0xa8] sm:$0xf]
        %v4844 = vld [vmem:[%s4414 + $0xac] sm:$0xf]
        %v4845 = vld [vmem:[%s4414 + $0xb0] sm:$0x1]
        %v4846 = vld [vmem:[%s4414 + $0xb4] sm:$0xf]
        %v4847 = vld [vmem:[%s4414 + $0xb8] sm:$0xf]
        %v4848 = vld [vmem:[%s4414 + $0xbc] sm:$0x1]
        %v4850 = vshrl.u32 %v4801, 16
        %v4852 = vrot.slane %v4850, 4
        %v4853 = vshll.u32 %v4801, 16
        %v4855 = vrot.slane %v4853, 5
        %v4856 = vor.u32 %v4852, %v4855
        %v4857 = vrot.slane %v4856, 4
        %v4859 = vshll.u32 %v4802, 16
        %v4861 = vrot.slane %v4859, 5
        %v4862 = vsel %vm1311, %v4857, %v4861
        %v4863 = vshrl.u32 %v4802, 16
        %v4865 = vrot.slane %v4863, 4
        %v4866 = vor.u32 %v4865, %v4861
        %v4867 = vrot.slane %v4866, 4
        %v4869 = vshll.u32 %v4803, 16
        %v4871 = vrot.slane %v4869, 5
        %v4872 = vsel %vm1311, %v4867, %v4871
        %v4874 = vshrl.u32 %v4804, 16
        %v4876 = vrot.slane %v4874, 4
        %v4877 = vshll.u32 %v4804, 16
        %v4879 = vrot.slane %v4877, 5
        %v4880 = vor.u32 %v4876, %v4879
        %v4881 = vrot.slane %v4880, 4
        %v4883 = vshll.u32 %v4805, 16
        %v4885 = vrot.slane %v4883, 5
        %v4886 = vsel %vm1311, %v4881, %v4885
        %v4887 = vshrl.u32 %v4805, 16
        %v4889 = vrot.slane %v4887, 4
        %v4890 = vor.u32 %v4889, %v4885
        %v4891 = vrot.slane %v4890, 4
        %v4893 = vshll.u32 %v4806, 16
        %v4895 = vrot.slane %v4893, 5
        %v4896 = vsel %vm1311, %v4891, %v4895
        %v4898 = vshrl.u32 %v4807, 16
        %v4900 = vrot.slane %v4898, 4
        %v4901 = vshll.u32 %v4807, 16
        %v4903 = vrot.slane %v4901, 5
        %v4904 = vor.u32 %v4900, %v4903
        %v4905 = vrot.slane %v4904, 4
        %v4907 = vshll.u32 %v4808, 16
        %v4909 = vrot.slane %v4907, 5
        %v4910 = vsel %vm1311, %v4905, %v4909
        %v4911 = vshrl.u32 %v4808, 16
        %v4913 = vrot.slane %v4911, 4
        %v4914 = vor.u32 %v4913, %v4909
        %v4915 = vrot.slane %v4914, 4
        %v4917 = vshll.u32 %v4809, 16
        %v4919 = vrot.slane %v4917, 5
        %v4920 = vsel %vm1311, %v4915, %v4919
        %v4922 = vshrl.u32 %v4810, 16
        %v4924 = vrot.slane %v4922, 4
        %v4925 = vshll.u32 %v4810, 16
        %v4927 = vrot.slane %v4925, 5
        %v4928 = vor.u32 %v4924, %v4927
        %v4929 = vrot.slane %v4928, 4
        %v4931 = vshll.u32 %v4811, 16
        %v4933 = vrot.slane %v4931, 5
        %v4934 = vsel %vm1311, %v4929, %v4933
        %v4935 = vshrl.u32 %v4811, 16
        %v4937 = vrot.slane %v4935, 4
        %v4938 = vor.u32 %v4937, %v4933
        %v4939 = vrot.slane %v4938, 4
        %v4941 = vshll.u32 %v4812, 16
        %v4943 = vrot.slane %v4941, 5
        %v4944 = vsel %vm1311, %v4939, %v4943
        %v4946 = vshrl.u32 %v4813, 16
        %v4948 = vrot.slane %v4946, 4
        %v4949 = vshll.u32 %v4813, 16
        %v4951 = vrot.slane %v4949, 5
        %v4952 = vor.u32 %v4948, %v4951
        %v4953 = vrot.slane %v4952, 4
        %v4955 = vshll.u32 %v4814, 16
        %v4957 = vrot.slane %v4955, 5
        %v4958 = vsel %vm1311, %v4953, %v4957
        %v4959 = vshrl.u32 %v4814, 16
        %v4961 = vrot.slane %v4959, 4
        %v4962 = vor.u32 %v4961, %v4957
        %v4963 = vrot.slane %v4962, 4
        %v4965 = vshll.u32 %v4815, 16
        %v4967 = vrot.slane %v4965, 5
        %v4968 = vsel %vm1311, %v4963, %v4967
        %v4970 = vshrl.u32 %v4816, 16
        %v4972 = vrot.slane %v4970, 4
        %v4973 = vshll.u32 %v4816, 16
        %v4975 = vrot.slane %v4973, 5
        %v4976 = vor.u32 %v4972, %v4975
        %v4977 = vrot.slane %v4976, 4
        %v4979 = vshll.u32 %v4817, 16
        %v4981 = vrot.slane %v4979, 5
        %v4982 = vsel %vm1311, %v4977, %v4981
        %v4983 = vshrl.u32 %v4817, 16
        %v4985 = vrot.slane %v4983, 4
        %v4986 = vor.u32 %v4985, %v4981
        %v4987 = vrot.slane %v4986, 4
        %v4989 = vshll.u32 %v4818, 16
        %v4991 = vrot.slane %v4989, 5
        %v4992 = vsel %vm1311, %v4987, %v4991
        %v4994 = vshrl.u32 %v4819, 16
        %v4996 = vrot.slane %v4994, 4
        %v4997 = vshll.u32 %v4819, 16
        %v4999 = vrot.slane %v4997, 5
        %v5000 = vor.u32 %v4996, %v4999
        %v5001 = vrot.slane %v5000, 4
        %v5003 = vshll.u32 %v4820, 16
        %v5005 = vrot.slane %v5003, 5
        %v5006 = vsel %vm1311, %v5001, %v5005
        %v5007 = vshrl.u32 %v4820, 16
        %v5009 = vrot.slane %v5007, 4
        %v5010 = vor.u32 %v5009, %v5005
        %v5011 = vrot.slane %v5010, 4
        %v5013 = vshll.u32 %v4821, 16
        %v5015 = vrot.slane %v5013, 5
        %v5016 = vsel %vm1311, %v5011, %v5015
        %v5018 = vshrl.u32 %v4822, 16
        %v5020 = vrot.slane %v5018, 4
        %v5021 = vshll.u32 %v4822, 16
        %v5023 = vrot.slane %v5021, 5
        %v5024 = vor.u32 %v5020, %v5023
        %v5025 = vrot.slane %v5024, 4
        %v5027 = vshll.u32 %v4823, 16
        %v5029 = vrot.slane %v5027, 5
        %v5030 = vsel %vm1311, %v5025, %v5029
        %v5031 = vshrl.u32 %v4823, 16
        %v5033 = vrot.slane %v5031, 4
        %v5034 = vor.u32 %v5033, %v5029
        %v5035 = vrot.slane %v5034, 4
        %v5037 = vshll.u32 %v4824, 16
        %v5039 = vrot.slane %v5037, 5
        %v5040 = vsel %vm1311, %v5035, %v5039
        %v5042 = vshrl.u32 %v4825, 16
        %v5044 = vrot.slane %v5042, 4
        %v5045 = vshll.u32 %v4825, 16
        %v5047 = vrot.slane %v5045, 5
        %v5048 = vor.u32 %v5044, %v5047
        %v5049 = vrot.slane %v5048, 4
        %v5051 = vshll.u32 %v4826, 16
        %v5053 = vrot.slane %v5051, 5
        %v5054 = vsel %vm1311, %v5049, %v5053
        %v5055 = vshrl.u32 %v4826, 16
        %v5057 = vrot.slane %v5055, 4
        %v5058 = vor.u32 %v5057, %v5053
        %v5059 = vrot.slane %v5058, 4
        %v5061 = vshll.u32 %v4827, 16
        %v5063 = vrot.slane %v5061, 5
        %v5064 = vsel %vm1311, %v5059, %v5063
        %v5066 = vshrl.u32 %v4828, 16
        %v5068 = vrot.slane %v5066, 4
        %v5069 = vshll.u32 %v4828, 16
        %v5071 = vrot.slane %v5069, 5
        %v5072 = vor.u32 %v5068, %v5071
        %v5073 = vrot.slane %v5072, 4
        %v5075 = vshll.u32 %v4829, 16
        %v5077 = vrot.slane %v5075, 5
        %v5078 = vsel %vm1311, %v5073, %v5077
        %v5079 = vshrl.u32 %v4829, 16
        %v5081 = vrot.slane %v5079, 4
        %v5082 = vor.u32 %v5081, %v5077
        %v5083 = vrot.slane %v5082, 4
        %v5085 = vshll.u32 %v4830, 16
        %v5087 = vrot.slane %v5085, 5
        %v5088 = vsel %vm1311, %v5083, %v5087
        %v5090 = vshrl.u32 %v4831, 16
        %v5092 = vrot.slane %v5090, 4
        %v5093 = vshll.u32 %v4831, 16
        %v5095 = vrot.slane %v5093, 5
        %v5096 = vor.u32 %v5092, %v5095
        %v5097 = vrot.slane %v5096, 4
        %v5099 = vshll.u32 %v4832, 16
        %v5101 = vrot.slane %v5099, 5
        %v5102 = vsel %vm1311, %v5097, %v5101
        %v5103 = vshrl.u32 %v4832, 16
        %v5105 = vrot.slane %v5103, 4
        %v5106 = vor.u32 %v5105, %v5101
        %v5107 = vrot.slane %v5106, 4
        %v5109 = vshll.u32 %v4833, 16
        %v5111 = vrot.slane %v5109, 5
        %v5112 = vsel %vm1311, %v5107, %v5111
        %v5114 = vshrl.u32 %v4834, 16
        %v5116 = vrot.slane %v5114, 4
        %v5117 = vshll.u32 %v4834, 16
        %v5119 = vrot.slane %v5117, 5
        %v5120 = vor.u32 %v5116, %v5119
        %v5121 = vrot.slane %v5120, 4
        %v5123 = vshll.u32 %v4835, 16
        %v5125 = vrot.slane %v5123, 5
        %v5126 = vsel %vm1311, %v5121, %v5125
        %v5127 = vshrl.u32 %v4835, 16
        %v5129 = vrot.slane %v5127, 4
        %v5130 = vor.u32 %v5129, %v5125
        %v5131 = vrot.slane %v5130, 4
        %v5133 = vshll.u32 %v4836, 16
        %v5135 = vrot.slane %v5133, 5
        %v5136 = vsel %vm1311, %v5131, %v5135
        %v5138 = vshrl.u32 %v4837, 16
        %v5140 = vrot.slane %v5138, 4
        %v5141 = vshll.u32 %v4837, 16
        %v5143 = vrot.slane %v5141, 5
        %v5144 = vor.u32 %v5140, %v5143
        %v5145 = vrot.slane %v5144, 4
        %v5147 = vshll.u32 %v4838, 16
        %v5149 = vrot.slane %v5147, 5
        %v5150 = vsel %vm1311, %v5145, %v5149
        %v5151 = vshrl.u32 %v4838, 16
        %v5153 = vrot.slane %v5151, 4
        %v5154 = vor.u32 %v5153, %v5149
        %v5155 = vrot.slane %v5154, 4
        %v5157 = vshll.u32 %v4839, 16
        %v5159 = vrot.slane %v5157, 5
        %v5160 = vsel %vm1311, %v5155, %v5159
        %v5162 = vshrl.u32 %v4840, 16
        %v5164 = vrot.slane %v5162, 4
        %v5165 = vshll.u32 %v4840, 16
        %v5167 = vrot.slane %v5165, 5
        %v5168 = vor.u32 %v5164, %v5167
        %v5169 = vrot.slane %v5168, 4
        %v5171 = vshll.u32 %v4841, 16
        %v5173 = vrot.slane %v5171, 5
        %v5174 = vsel %vm1311, %v5169, %v5173
        %v5175 = vshrl.u32 %v4841, 16
        %v5177 = vrot.slane %v5175, 4
        %v5178 = vor.u32 %v5177, %v5173
        %v5179 = vrot.slane %v5178, 4
        %v5181 = vshll.u32 %v4842, 16
        %v5183 = vrot.slane %v5181, 5
        %v5184 = vsel %vm1311, %v5179, %v5183
        %v5186 = vshrl.u32 %v4843, 16
        %v5188 = vrot.slane %v5186, 4
        %v5189 = vshll.u32 %v4843, 16
        %v5191 = vrot.slane %v5189, 5
        %v5192 = vor.u32 %v5188, %v5191
        %v5193 = vrot.slane %v5192, 4
        %v5195 = vshll.u32 %v4844, 16
        %v5197 = vrot.slane %v5195, 5
        %v5198 = vsel %vm1311, %v5193, %v5197
        %v5199 = vshrl.u32 %v4844, 16
        %v5201 = vrot.slane %v5199, 4
        %v5202 = vor.u32 %v5201, %v5197
        %v5203 = vrot.slane %v5202, 4
        %v5205 = vshll.u32 %v4845, 16
        %v5207 = vrot.slane %v5205, 5
        %v5208 = vsel %vm1311, %v5203, %v5207
        %v5210 = vshrl.u32 %v4846, 16
        %v5212 = vrot.slane %v5210, 4
        %v5213 = vshll.u32 %v4846, 16
        %v5215 = vrot.slane %v5213, 5
        %v5216 = vor.u32 %v5212, %v5215
        %v5217 = vrot.slane %v5216, 4
        %v5219 = vshll.u32 %v4847, 16
        %v5221 = vrot.slane %v5219, 5
        %v5222 = vsel %vm1311, %v5217, %v5221
        %v5223 = vshrl.u32 %v4847, 16
        %v5225 = vrot.slane %v5223, 4
        %v5226 = vor.u32 %v5225, %v5221
        %v5227 = vrot.slane %v5226, 4
        %v5229 = vshll.u32 %v4848, 16
        %v5231 = vrot.slane %v5229, 5
        %v5232 = vsel %vm1311, %v5227, %v5231
        %s5233 = scalar_lea.vmem [#allocation8], 448
        %v5234 = vld [vmem:[%s5233] sm:$0xf]
        %v5235 = vld [vmem:[%s5233 + $0x4] sm:$0xf]
        %v5236 = vld [vmem:[%s5233 + $0x8] sm:$0xf]
        %v5237 = vld [vmem:[%s5233 + $0xc] sm:$0xf]
        %v5238 = vld [vmem:[%s5233 + $0x10] sm:$0xf]
        %v5239 = vld [vmem:[%s5233 + $0x14] sm:$0xf]
        %v5240 = vld [vmem:[%s5233 + $0x18] sm:$0xf]
        %v5241 = vld [vmem:[%s5233 + $0x1c] sm:$0xf]
        %v5242 = vld [vmem:[%s5233 + $0x20] sm:$0xf]
        %v5243 = vld [vmem:[%s5233 + $0x24] sm:$0xf]
        %v5244 = vld [vmem:[%s5233 + $0x28] sm:$0xf]
        %v5245 = vld [vmem:[%s5233 + $0x2c] sm:$0xf]
        %v5246 = vld [vmem:[%s5233 + $0x30] sm:$0xf]
        %v5247 = vld [vmem:[%s5233 + $0x34] sm:$0xf]
        %v5248 = vld [vmem:[%s5233 + $0x38] sm:$0xf]
        %v5249 = vld [vmem:[%s5233 + $0x3c] sm:$0xf]
        %v5250 = vunpack.c.l.b16 %v4862
        %v5251 = vunpack.c.l.b16 %v4872
        %v5252 = vunpack.c.l.b16 %v4886
        %v5253 = vunpack.c.l.b16 %v4896
        %v5254 = vunpack.c.l.b16 %v4910
        %v5255 = vunpack.c.l.b16 %v4920
        %v5256 = vunpack.c.l.b16 %v4934
        %v5257 = vunpack.c.l.b16 %v4944
        %v5258 = vunpack.c.l.b16 %v4958
        %v5259 = vunpack.c.l.b16 %v4968
        %v5260 = vunpack.c.l.b16 %v4982
        %v5261 = vunpack.c.l.b16 %v4992
        %v5262 = vunpack.c.l.b16 %v5006
        %v5263 = vunpack.c.l.b16 %v5016
        %v5264 = vunpack.c.l.b16 %v5030
        %v5265 = vunpack.c.l.b16 %v5040
        %v5266 = vunpack.c.l.b16 %v5054
        %v5267 = vunpack.c.l.b16 %v5064
        %v5268 = vunpack.c.l.b16 %v5078
        %v5269 = vunpack.c.l.b16 %v5088
        %v5270 = vunpack.c.l.b16 %v5102
        %v5271 = vunpack.c.l.b16 %v5112
        %v5272 = vunpack.c.l.b16 %v5126
        %v5273 = vunpack.c.l.b16 %v5136
        %v5274 = vunpack.c.l.b16 %v5150
        %v5275 = vunpack.c.l.b16 %v5160
        %v5276 = vunpack.c.l.b16 %v5174
        %v5277 = vunpack.c.l.b16 %v5184
        %v5278 = vunpack.c.l.b16 %v5198
        %v5279 = vunpack.c.l.b16 %v5208
        %v5280 = vunpack.c.l.b16 %v5222
        %v5281 = vunpack.c.l.b16 %v5232
        %v5282 = vpack.c.b16 %v5251, %v5250
        %v5283 = vpack.c.b16 %v5253, %v5252
        %v5284 = vpack.c.b16 %v5255, %v5254
        %v5285 = vpack.c.b16 %v5257, %v5256
        %v5286 = vpack.c.b16 %v5259, %v5258
        %v5287 = vpack.c.b16 %v5261, %v5260
        %v5288 = vpack.c.b16 %v5263, %v5262
        %v5289 = vpack.c.b16 %v5265, %v5264
        %v5290 = vpack.c.b16 %v5267, %v5266
        %v5291 = vpack.c.b16 %v5269, %v5268
        %v5292 = vpack.c.b16 %v5271, %v5270
        %v5293 = vpack.c.b16 %v5273, %v5272
        %v5294 = vpack.c.b16 %v5275, %v5274
        %v5295 = vpack.c.b16 %v5277, %v5276
        %v5296 = vpack.c.b16 %v5279, %v5278
        %v5297 = vpack.c.b16 %v5281, %v5280
        %v5330 = vunpack.c.l.b16 %v5234
        %v5331 = vunpack.c.l.b16 %v5235
        %v5332 = vunpack.c.l.b16 %v5236
        %v5333 = vunpack.c.l.b16 %v5237
        %v5334 = vunpack.c.l.b16 %v5238
        %v5335 = vunpack.c.l.b16 %v5239
        %v5336 = vunpack.c.l.b16 %v5240
        %v5337 = vunpack.c.l.b16 %v5241
        %v5338 = vunpack.c.l.b16 %v5242
        %v5339 = vunpack.c.l.b16 %v5243
        %v5340 = vunpack.c.l.b16 %v5244
        %v5341 = vunpack.c.l.b16 %v5245
        %v5342 = vunpack.c.l.b16 %v5246
        %v5343 = vunpack.c.l.b16 %v5247
        %v5344 = vunpack.c.l.b16 %v5248
        %v5345 = vunpack.c.l.b16 %v5249
        %v5346 = vpack.c.b16 %v5331, %v5330
        %v5347 = vpack.c.b16 %v5333, %v5332
        %v5348 = vpack.c.b16 %v5335, %v5334
        %v5349 = vpack.c.b16 %v5337, %v5336
        %v5350 = vpack.c.b16 %v5339, %v5338
        %v5351 = vpack.c.b16 %v5341, %v5340
        %v5352 = vpack.c.b16 %v5343, %v5342
        %v5353 = vpack.c.b16 %v5345, %v5344
        %5362 = vmatprep.subr.bf16.mxu0 0
        %5363 = vmatpush1.bf16.msra.mxu0 %v5346
        %5364 = vmatprep.subr.bf16.mxu0 0
        %5365 = vmatpush1.bf16.msra.mxu0 %v5347
        %5366 = vmatprep.subr.bf16.mxu0 0
        %5367 = vmatpush1.bf16.msra.mxu0 %v5348
        %5368 = vmatprep.subr.bf16.mxu0 0
        %5369 = vmatpush1.bf16.msra.mxu0 %v5349
        %5370 = vmatprep.subr.bf16.mxu0 0
        %5371 = vmatpush1.bf16.msra.mxu0 %v5350
        %5372 = vmatprep.subr.bf16.mxu0 0
        %5373 = vmatpush1.bf16.msra.mxu0 %v5351
        %5374 = vmatprep.subr.bf16.mxu0 0
        %5375 = vmatpush1.bf16.msra.mxu0 %v5352
        %5376 = vmatprep.subr.bf16.mxu0 0
        %5377 = vmatpush1.bf16.msra.mxu0 %v5353
        %5378 = vmatprep.subr.bf16.mxu0 0
        %5379 = vmatpush1.bf16.msra.mxu0 0
        %5380 = vmatprep.subr.bf16.mxu0 0
        %5381 = vmatpush1.bf16.msra.mxu0 0
        %5382 = vmatprep.subr.bf16.mxu0 0
        %5383 = vmatpush1.bf16.msra.mxu0 0
        %5384 = vmatprep.subr.bf16.mxu0 0
        %5385 = vmatpush1.bf16.msra.mxu0 0
        %5386 = vmatprep.subr.bf16.mxu0 0
        %5387 = vmatpush1.bf16.msra.mxu0 0
        %5388 = vmatprep.subr.bf16.mxu0 0
        %5389 = vmatpush1.bf16.msra.mxu0 0
        %5390 = vmatprep.subr.bf16.mxu0 0
        %5391 = vmatpush1.bf16.msra.mxu0 0
        %5392 = vmatprep.subr.bf16.mxu0 0
        %5393 = vmatpush1.bf16.msra.mxu0 0
        %5394 = vmatprep.mubr.bf16.mxu0 0
        %5395 = vmatmul.mubr.bf16.gmra.mrb[0].mxu0 %v5282
        %v5396 = vpop.f32.mrb[0].mxu0
        %v5397 = vadd.f32 0.0, %v5396
        %v5398 = vpop.f32.mrb[0].mxu0
        %v5399 = vpop.f32.mrb[0].mxu0
        %v5400 = vadd.f32 0.0, %v5399
        %v5401 = vpop.f32.mrb[0].mxu0
        %5402 = vmatprep.mubr.bf16.mxu0 0
        %5403 = vmatmul.mubr.bf16.gmra.mrb[0].mxu0 %v5283
        %v5404 = vpop.f32.mrb[0].mxu0
        %v5405 = vadd.f32 0.0, %v5404
        %v5406 = vpop.f32.mrb[0].mxu0
        %v5407 = vpop.f32.mrb[0].mxu0
        %v5408 = vadd.f32 0.0, %v5407
        %v5409 = vpop.f32.mrb[0].mxu0
        %5410 = vmatprep.mubr.bf16.mxu0 0
        %5411 = vmatmul.mubr.bf16.gmra.mrb[0].mxu0 %v5284
        %v5412 = vpop.f32.mrb[0].mxu0
        %v5413 = vadd.f32 0.0, %v5412
        %v5414 = vpop.f32.mrb[0].mxu0
        %v5415 = vpop.f32.mrb[0].mxu0
        %v5416 = vadd.f32 0.0, %v5415
        %v5417 = vpop.f32.mrb[0].mxu0
        %5418 = vmatprep.mubr.bf16.mxu0 0
        %5419 = vmatmul.mubr.bf16.gmra.mrb[0].mxu0 %v5285
        %v5420 = vpop.f32.mrb[0].mxu0
        %v5421 = vadd.f32 0.0, %v5420
        %v5422 = vpop.f32.mrb[0].mxu0
        %v5423 = vpop.f32.mrb[0].mxu0
        %v5424 = vadd.f32 0.0, %v5423
        %v5425 = vpop.f32.mrb[0].mxu0
        %5426 = vmatprep.mubr.bf16.mxu0 0
        %5427 = vmatmul.mubr.bf16.gmra.mrb[0].mxu0 %v5286
        %v5428 = vpop.f32.mrb[0].mxu0
        %v5429 = vadd.f32 0.0, %v5428
        %v5430 = vpop.f32.mrb[0].mxu0
        %v5431 = vpop.f32.mrb[0].mxu0
        %v5432 = vadd.f32 0.0, %v5431
        %v5433 = vpop.f32.mrb[0].mxu0
        %5434 = vmatprep.mubr.bf16.mxu0 0
        %5435 = vmatmul.mubr.bf16.gmra.mrb[0].mxu0 %v5287
        %v5436 = vpop.f32.mrb[0].mxu0
        %v5437 = vadd.f32 0.0, %v5436
        %v5438 = vpop.f32.mrb[0].mxu0
        %v5439 = vpop.f32.mrb[0].mxu0
        %v5440 = vadd.f32 0.0, %v5439
        %v5441 = vpop.f32.mrb[0].mxu0
        %5442 = vmatprep.mubr.bf16.mxu0 0
        %5443 = vmatmul.mubr.bf16.gmra.mrb[0].mxu0 %v5288
        %v5444 = vpop.f32.mrb[0].mxu0
        %v5445 = vadd.f32 0.0, %v5444
        %v5446 = vpop.f32.mrb[0].mxu0
        %v5447 = vpop.f32.mrb[0].mxu0
        %v5448 = vadd.f32 0.0, %v5447
        %v5449 = vpop.f32.mrb[0].mxu0
        %5450 = vmatprep.mubr.bf16.mxu0 0
        %5451 = vmatmul.mubr.bf16.gmra.mrb[0].mxu0 %v5289
        %v5452 = vpop.f32.mrb[0].mxu0
        %v5453 = vadd.f32 0.0, %v5452
        %v5454 = vpop.f32.mrb[0].mxu0
        %v5455 = vpop.f32.mrb[0].mxu0
        %v5456 = vadd.f32 0.0, %v5455
        %v5457 = vpop.f32.mrb[0].mxu0
        %5458 = vmatprep.mubr.bf16.mxu0 0
        %5459 = vmatmul.mubr.bf16.gmra.mrb[0].mxu0 %v5290
        %v5460 = vpop.f32.mrb[0].mxu0
        %v5461 = vadd.f32 0.0, %v5460
        %v5462 = vpop.f32.mrb[0].mxu0
        %v5463 = vpop.f32.mrb[0].mxu0
        %v5464 = vadd.f32 0.0, %v5463
        %v5465 = vpop.f32.mrb[0].mxu0
        %5466 = vmatprep.mubr.bf16.mxu0 0
        %5467 = vmatmul.mubr.bf16.gmra.mrb[0].mxu0 %v5291
        %v5468 = vpop.f32.mrb[0].mxu0
        %v5469 = vadd.f32 0.0, %v5468
        %v5470 = vpop.f32.mrb[0].mxu0
        %v5471 = vpop.f32.mrb[0].mxu0
        %v5472 = vadd.f32 0.0, %v5471
        %v5473 = vpop.f32.mrb[0].mxu0
        %5474 = vmatprep.mubr.bf16.mxu0 0
        %5475 = vmatmul.mubr.bf16.gmra.mrb[0].mxu0 %v5292
        %v5476 = vpop.f32.mrb[0].mxu0
        %v5477 = vadd.f32 0.0, %v5476
        %v5478 = vpop.f32.mrb[0].mxu0
        %v5479 = vpop.f32.mrb[0].mxu0
        %v5480 = vadd.f32 0.0, %v5479
        %v5481 = vpop.f32.mrb[0].mxu0
        %5482 = vmatprep.mubr.bf16.mxu0 0
        %5483 = vmatmul.mubr.bf16.gmra.mrb[0].mxu0 %v5293
        %v5484 = vpop.f32.mrb[0].mxu0
        %v5485 = vadd.f32 0.0, %v5484
        %v5486 = vpop.f32.mrb[0].mxu0
        %v5487 = vpop.f32.mrb[0].mxu0
        %v5488 = vadd.f32 0.0, %v5487
        %v5489 = vpop.f32.mrb[0].mxu0
        %5490 = vmatprep.mubr.bf16.mxu0 0
        %5491 = vmatmul.mubr.bf16.gmra.mrb[0].mxu0 %v5294
        %v5492 = vpop.f32.mrb[0].mxu0
        %v5493 = vadd.f32 0.0, %v5492
        %v5494 = vpop.f32.mrb[0].mxu0
        %v5495 = vpop.f32.mrb[0].mxu0
        %v5496 = vadd.f32 0.0, %v5495
        %v5497 = vpop.f32.mrb[0].mxu0
        %5498 = vmatprep.mubr.bf16.mxu0 0
        %5499 = vmatmul.mubr.bf16.gmra.mrb[0].mxu0 %v5295
        %v5500 = vpop.f32.mrb[0].mxu0
        %v5501 = vadd.f32 0.0, %v5500
        %v5502 = vpop.f32.mrb[0].mxu0
        %v5503 = vpop.f32.mrb[0].mxu0
        %v5504 = vadd.f32 0.0, %v5503
        %v5505 = vpop.f32.mrb[0].mxu0
        %5506 = vmatprep.mubr.bf16.mxu0 0
        %5507 = vmatmul.mubr.bf16.gmra.mrb[0].mxu0 %v5296
        %v5508 = vpop.f32.mrb[0].mxu0
        %v5509 = vadd.f32 0.0, %v5508
        %v5510 = vpop.f32.mrb[0].mxu0
        %v5511 = vpop.f32.mrb[0].mxu0
        %v5512 = vadd.f32 0.0, %v5511
        %v5513 = vpop.f32.mrb[0].mxu0
        %5514 = vmatprep.mubr.bf16.mxu0 0
        %5515 = vmatmul.mubr.bf16.gmra.mrb[0].mxu0 %v5297
        %v5516 = vpop.f32.mrb[0].mxu0
        %v5517 = vadd.f32 0.0, %v5516
        %v5518 = vpop.f32.mrb[0].mxu0
        %v5519 = vpop.f32.mrb[0].mxu0
        %v5520 = vadd.f32 0.0, %v5519
        %v5521 = vpop.f32.mrb[0].mxu0
        %5522 = vdwg.mxu0
        %v5523 = vadd.f32 %v4769, %v5397
        %v5524 = vadd.f32 %v4770, %v5400
        %v5525 = vadd.f32 %v4771, %v5405
        %v5526 = vadd.f32 %v4772, %v5408
        %v5527 = vadd.f32 %v4773, %v5413
        %v5528 = vadd.f32 %v4774, %v5416
        %v5529 = vadd.f32 %v4775, %v5421
        %v5530 = vadd.f32 %v4776, %v5424
        %v5531 = vadd.f32 %v4777, %v5429
        %v5532 = vadd.f32 %v4778, %v5432
        %v5533 = vadd.f32 %v4779, %v5437
        %v5534 = vadd.f32 %v4780, %v5440
        %v5535 = vadd.f32 %v4781, %v5445
        %v5536 = vadd.f32 %v4782, %v5448
        %v5537 = vadd.f32 %v4783, %v5453
        %v5538 = vadd.f32 %v4784, %v5456
        %v5539 = vadd.f32 %v4785, %v5461
        %v5540 = vadd.f32 %v4786, %v5464
        %v5541 = vadd.f32 %v4787, %v5469
        %v5542 = vadd.f32 %v4788, %v5472
        %v5543 = vadd.f32 %v4789, %v5477
        %v5544 = vadd.f32 %v4790, %v5480
        %v5545 = vadd.f32 %v4791, %v5485
        %v5546 = vadd.f32 %v4792, %v5488
        %v5547 = vadd.f32 %v4793, %v5493
        %v5548 = vadd.f32 %v4794, %v5496
        %v5549 = vadd.f32 %v4795, %v5501
        %v5550 = vadd.f32 %v4796, %v5504
        %v5551 = vadd.f32 %v4797, %v5509
        %v5552 = vadd.f32 %v4798, %v5512
        %v5553 = vadd.f32 %v4799, %v5517
        %v5554 = vadd.f32 %v4800, %v5520
        %v5555 = vld [vmem:[%s4414] sm:$0xe]
        %v5556 = vld [vmem:[%s4414 + $0xc] sm:$0xe]
        %v5557 = vld [vmem:[%s4414 + $0x18] sm:$0xe]
        %v5558 = vld [vmem:[%s4414 + $0x24] sm:$0xe]
        %v5559 = vld [vmem:[%s4414 + $0x30] sm:$0xe]
        %v5560 = vld [vmem:[%s4414 + $0x3c] sm:$0xe]
        %v5561 = vld [vmem:[%s4414 + $0x48] sm:$0xe]
        %v5562 = vld [vmem:[%s4414 + $0x54] sm:$0xe]
        %v5563 = vld [vmem:[%s4414 + $0x60] sm:$0xe]
        %v5564 = vld [vmem:[%s4414 + $0x6c] sm:$0xe]
        %v5565 = vld [vmem:[%s4414 + $0x78] sm:$0xe]
        %v5566 = vld [vmem:[%s4414 + $0x84] sm:$0xe]
        %v5567 = vld [vmem:[%s4414 + $0x90] sm:$0xe]
        %v5568 = vld [vmem:[%s4414 + $0x9c] sm:$0xe]
        %v5569 = vld [vmem:[%s4414 + $0xa8] sm:$0xe]
        %v5570 = vld [vmem:[%s4414 + $0xb4] sm:$0xe]
        %v5619 = vrot.slane %v5555, 5
        %v5620 = vrot.slane %v5619, 4
        %v5621 = vrot.slane %v4802, 5
        %v5622 = vsel %vm2341, %v5620, %v5621
        %v5623 = vrot.slane %v5621, 4
        %v5624 = vrot.slane %v4803, 5
        %v5625 = vsel %vm2341, %v5623, %v5624
        %v5626 = vrot.slane %v5556, 5
        %v5627 = vrot.slane %v5626, 4
        %v5628 = vrot.slane %v4805, 5
        %v5629 = vsel %vm2341, %v5627, %v5628
        %v5630 = vrot.slane %v5628, 4
        %v5631 = vrot.slane %v4806, 5
        %v5632 = vsel %vm2341, %v5630, %v5631
        %v5633 = vrot.slane %v5557, 5
        %v5634 = vrot.slane %v5633, 4
        %v5635 = vrot.slane %v4808, 5
        %v5636 = vsel %vm2341, %v5634, %v5635
        %v5637 = vrot.slane %v5635, 4
        %v5638 = vrot.slane %v4809, 5
        %v5639 = vsel %vm2341, %v5637, %v5638
        %v5640 = vrot.slane %v5558, 5
        %v5641 = vrot.slane %v5640, 4
        %v5642 = vrot.slane %v4811, 5
        %v5643 = vsel %vm2341, %v5641, %v5642
        %v5644 = vrot.slane %v5642, 4
        %v5645 = vrot.slane %v4812, 5
        %v5646 = vsel %vm2341, %v5644, %v5645
        %v5647 = vrot.slane %v5559, 5
        %v5648 = vrot.slane %v5647, 4
        %v5649 = vrot.slane %v4814, 5
        %v5650 = vsel %vm2341, %v5648, %v5649
        %v5651 = vrot.slane %v5649, 4
        %v5652 = vrot.slane %v4815, 5
        %v5653 = vsel %vm2341, %v5651, %v5652
        %v5654 = vrot.slane %v5560, 5
        %v5655 = vrot.slane %v5654, 4
        %v5656 = vrot.slane %v4817, 5
        %v5657 = vsel %vm2341, %v5655, %v5656
        %v5658 = vrot.slane %v5656, 4
        %v5659 = vrot.slane %v4818, 5
        %v5660 = vsel %vm2341, %v5658, %v5659
        %v5661 = vrot.slane %v5561, 5
        %v5662 = vrot.slane %v5661, 4
        %v5663 = vrot.slane %v4820, 5
        %v5664 = vsel %vm2341, %v5662, %v5663
        %v5665 = vrot.slane %v5663, 4
        %v5666 = vrot.slane %v4821, 5
        %v5667 = vsel %vm2341, %v5665, %v5666
        %v5668 = vrot.slane %v5562, 5
        %v5669 = vrot.slane %v5668, 4
        %v5670 = vrot.slane %v4823, 5
        %v5671 = vsel %vm2341, %v5669, %v5670
        %v5672 = vrot.slane %v5670, 4
        %v5673 = vrot.slane %v4824, 5
        %v5674 = vsel %vm2341, %v5672, %v5673
        %v5675 = vrot.slane %v5563, 5
        %v5676 = vrot.slane %v5675, 4
        %v5677 = vrot.slane %v4826, 5
        %v5678 = vsel %vm2341, %v5676, %v5677
        %v5679 = vrot.slane %v5677, 4
        %v5680 = vrot.slane %v4827, 5
        %v5681 = vsel %vm2341, %v5679, %v5680
        %v5682 = vrot.slane %v5564, 5
        %v5683 = vrot.slane %v5682, 4
        %v5684 = vrot.slane %v4829, 5
        %v5685 = vsel %vm2341, %v5683, %v5684
        %v5686 = vrot.slane %v5684, 4
        %v5687 = vrot.slane %v4830, 5
        %v5688 = vsel %vm2341, %v5686, %v5687
        %v5689 = vrot.slane %v5565, 5
        %v5690 = vrot.slane %v5689, 4
        %v5691 = vrot.slane %v4832, 5
        %v5692 = vsel %vm2341, %v5690, %v5691
        %v5693 = vrot.slane %v5691, 4
        %v5694 = vrot.slane %v4833, 5
        %v5695 = vsel %vm2341, %v5693, %v5694
        %v5696 = vrot.slane %v5566, 5
        %v5697 = vrot.slane %v5696, 4
        %v5698 = vrot.slane %v4835, 5
        %v5699 = vsel %vm2341, %v5697, %v5698
        %v5700 = vrot.slane %v5698, 4
        %v5701 = vrot.slane %v4836, 5
        %v5702 = vsel %vm2341, %v5700, %v5701
        %v5703 = vrot.slane %v5567, 5
        %v5704 = vrot.slane %v5703, 4
        %v5705 = vrot.slane %v4838, 5
        %v5706 = vsel %vm2341, %v5704, %v5705
        %v5707 = vrot.slane %v5705, 4
        %v5708 = vrot.slane %v4839, 5
        %v5709 = vsel %vm2341, %v5707, %v5708
        %v5710 = vrot.slane %v5568, 5
        %v5711 = vrot.slane %v5710, 4
        %v5712 = vrot.slane %v4841, 5
        %v5713 = vsel %vm2341, %v5711, %v5712
        %v5714 = vrot.slane %v5712, 4
        %v5715 = vrot.slane %v4842, 5
        %v5716 = vsel %vm2341, %v5714, %v5715
        %v5717 = vrot.slane %v5569, 5
        %v5718 = vrot.slane %v5717, 4
        %v5719 = vrot.slane %v4844, 5
        %v5720 = vsel %vm2341, %v5718, %v5719
        %v5721 = vrot.slane %v5719, 4
        %v5722 = vrot.slane %v4845, 5
        %v5723 = vsel %vm2341, %v5721, %v5722
        %v5724 = vrot.slane %v5570, 5
        %v5725 = vrot.slane %v5724, 4
        %v5726 = vrot.slane %v4847, 5
        %v5727 = vsel %vm2341, %v5725, %v5726
        %v5728 = vrot.slane %v5726, 4
        %v5729 = vrot.slane %v4848, 5
        %v5730 = vsel %vm2341, %v5728, %v5729
        %s5731 = scalar_lea.vmem [#allocation8], 512
        %v5732 = vld [vmem:[%s5731] sm:$0xf]
        %v5733 = vld [vmem:[%s5731 + $0x4] sm:$0xf]
        %v5734 = vld [vmem:[%s5731 + $0x8] sm:$0xf]
        %v5735 = vld [vmem:[%s5731 + $0xc] sm:$0xf]
        %v5736 = vld [vmem:[%s5731 + $0x10] sm:$0xf]
        %v5737 = vld [vmem:[%s5731 + $0x14] sm:$0xf]
        %v5738 = vld [vmem:[%s5731 + $0x18] sm:$0xf]
        %v5739 = vld [vmem:[%s5731 + $0x1c] sm:$0xf]
        %v5740 = vld [vmem:[%s5731 + $0x20] sm:$0xf]
        %v5741 = vld [vmem:[%s5731 + $0x24] sm:$0xf]
        %v5742 = vld [vmem:[%s5731 + $0x28] sm:$0xf]
        %v5743 = vld [vmem:[%s5731 + $0x2c] sm:$0xf]
        %v5744 = vld [vmem:[%s5731 + $0x30] sm:$0xf]
        %v5745 = vld [vmem:[%s5731 + $0x34] sm:$0xf]
        %v5746 = vld [vmem:[%s5731 + $0x38] sm:$0xf]
        %v5747 = vld [vmem:[%s5731 + $0x3c] sm:$0xf]
        %v5748 = vunpack.c.l.b16 %v5622
        %v5749 = vunpack.c.l.b16 %v5625
        %v5750 = vunpack.c.l.b16 %v5629
        %v5751 = vunpack.c.l.b16 %v5632
        %v5752 = vunpack.c.l.b16 %v5636
        %v5753 = vunpack.c.l.b16 %v5639
        %v5754 = vunpack.c.l.b16 %v5643
        %v5755 = vunpack.c.l.b16 %v5646
        %v5756 = vunpack.c.l.b16 %v5650
        %v5757 = vunpack.c.l.b16 %v5653
        %v5758 = vunpack.c.l.b16 %v5657
        %v5759 = vunpack.c.l.b16 %v5660
        %v5760 = vunpack.c.l.b16 %v5664
        %v5761 = vunpack.c.l.b16 %v5667
        %v5762 = vunpack.c.l.b16 %v5671
        %v5763 = vunpack.c.l.b16 %v5674
        %v5764 = vunpack.c.l.b16 %v5678
        %v5765 = vunpack.c.l.b16 %v5681
        %v5766 = vunpack.c.l.b16 %v5685
        %v5767 = vunpack.c.l.b16 %v5688
        %v5768 = vunpack.c.l.b16 %v5692
        %v5769 = vunpack.c.l.b16 %v5695
        %v5770 = vunpack.c.l.b16 %v5699
        %v5771 = vunpack.c.l.b16 %v5702
        %v5772 = vunpack.c.l.b16 %v5706
        %v5773 = vunpack.c.l.b16 %v5709
        %v5774 = vunpack.c.l.b16 %v5713
        %v5775 = vunpack.c.l.b16 %v5716
        %v5776 = vunpack.c.l.b16 %v5720
        %v5777 = vunpack.c.l.b16 %v5723
        %v5778 = vunpack.c.l.b16 %v5727
        %v5779 = vunpack.c.l.b16 %v5730
        %v5780 = vpack.c.b16 %v5749, %v5748
        %v5781 = vpack.c.b16 %v5751, %v5750
        %v5782 = vpack.c.b16 %v5753, %v5752
        %v5783 = vpack.c.b16 %v5755, %v5754
        %v5784 = vpack.c.b16 %v5757, %v5756
        %v5785 = vpack.c.b16 %v5759, %v5758
        %v5786 = vpack.c.b16 %v5761, %v5760
        %v5787 = vpack.c.b16 %v5763, %v5762
        %v5788 = vpack.c.b16 %v5765, %v5764
        %v5789 = vpack.c.b16 %v5767, %v5766
        %v5790 = vpack.c.b16 %v5769, %v5768
        %v5791 = vpack.c.b16 %v5771, %v5770
        %v5792 = vpack.c.b16 %v5773, %v5772
        %v5793 = vpack.c.b16 %v5775, %v5774
        %v5794 = vpack.c.b16 %v5777, %v5776
        %v5795 = vpack.c.b16 %v5779, %v5778
        %v5828 = vunpack.c.l.b16 %v5732
        %v5829 = vunpack.c.l.b16 %v5733
        %v5830 = vunpack.c.l.b16 %v5734
        %v5831 = vunpack.c.l.b16 %v5735
        %v5832 = vunpack.c.l.b16 %v5736
        %v5833 = vunpack.c.l.b16 %v5737
        %v5834 = vunpack.c.l.b16 %v5738
        %v5835 = vunpack.c.l.b16 %v5739
        %v5836 = vunpack.c.l.b16 %v5740
        %v5837 = vunpack.c.l.b16 %v5741
        %v5838 = vunpack.c.l.b16 %v5742
        %v5839 = vunpack.c.l.b16 %v5743
        %v5840 = vunpack.c.l.b16 %v5744
        %v5841 = vunpack.c.l.b16 %v5745
        %v5842 = vunpack.c.l.b16 %v5746
        %v5843 = vunpack.c.l.b16 %v5747
        %v5844 = vpack.c.b16 %v5829, %v5828
        %v5845 = vpack.c.b16 %v5831, %v5830
        %v5846 = vpack.c.b16 %v5833, %v5832
        %v5847 = vpack.c.b16 %v5835, %v5834
        %v5848 = vpack.c.b16 %v5837, %v5836
        %v5849 = vpack.c.b16 %v5839, %v5838
        %v5850 = vpack.c.b16 %v5841, %v5840
        %v5851 = vpack.c.b16 %v5843, %v5842
        %5860 = vmatprep.subr.bf16.mxu0 0
        %5861 = vmatpush1.bf16.msra.mxu0 %v5844
        %5862 = vmatprep.subr.bf16.mxu0 0
        %5863 = vmatpush1.bf16.msra.mxu0 %v5845
        %5864 = vmatprep.subr.bf16.mxu0 0
        %5865 = vmatpush1.bf16.msra.mxu0 %v5846
        %5866 = vmatprep.subr.bf16.mxu0 0
        %5867 = vmatpush1.bf16.msra.mxu0 %v5847
        %5868 = vmatprep.subr.bf16.mxu0 0
        %5869 = vmatpush1.bf16.msra.mxu0 %v5848
        %5870 = vmatprep.subr.bf16.mxu0 0
        %5871 = vmatpush1.bf16.msra.mxu0 %v5849
        %5872 = vmatprep.subr.bf16.mxu0 0
        %5873 = vmatpush1.bf16.msra.mxu0 %v5850
        %5874 = vmatprep.subr.bf16.mxu0 0
        %5875 = vmatpush1.bf16.msra.mxu0 %v5851
        %5876 = vmatprep.subr.bf16.mxu0 0
        %5877 = vmatpush1.bf16.msra.mxu0 0
        %5878 = vmatprep.subr.bf16.mxu0 0
        %5879 = vmatpush1.bf16.msra.mxu0 0
        %5880 = vmatprep.subr.bf16.mxu0 0
        %5881 = vmatpush1.bf16.msra.mxu0 0
        %5882 = vmatprep.subr.bf16.mxu0 0
        %5883 = vmatpush1.bf16.msra.mxu0 0
        %5884 = vmatprep.subr.bf16.mxu0 0
        %5885 = vmatpush1.bf16.msra.mxu0 0
        %5886 = vmatprep.subr.bf16.mxu0 0
        %5887 = vmatpush1.bf16.msra.mxu0 0
        %5888 = vmatprep.subr.bf16.mxu0 0
        %5889 = vmatpush1.bf16.msra.mxu0 0
        %5890 = vmatprep.subr.bf16.mxu0 0
        %5891 = vmatpush1.bf16.msra.mxu0 0
        %5892 = vmatprep.mubr.bf16.mxu0 0
        %5893 = vmatmul.mubr.bf16.gmra.mrb[0].mxu0 %v5780
        %v5894 = vpop.f32.mrb[0].mxu0
        %v5895 = vadd.f32 0.0, %v5894
        %v5896 = vpop.f32.mrb[0].mxu0
        %v5897 = vpop.f32.mrb[0].mxu0
        %v5898 = vadd.f32 0.0, %v5897
        %v5899 = vpop.f32.mrb[0].mxu0
        %5900 = vmatprep.mubr.bf16.mxu0 0
        %5901 = vmatmul.mubr.bf16.gmra.mrb[0].mxu0 %v5781
        %v5902 = vpop.f32.mrb[0].mxu0
        %v5903 = vadd.f32 0.0, %v5902
        %v5904 = vpop.f32.mrb[0].mxu0
        %v5905 = vpop.f32.mrb[0].mxu0
        %v5906 = vadd.f32 0.0, %v5905
        %v5907 = vpop.f32.mrb[0].mxu0
        %5908 = vmatprep.mubr.bf16.mxu0 0
        %5909 = vmatmul.mubr.bf16.gmra.mrb[0].mxu0 %v5782
        %v5910 = vpop.f32.mrb[0].mxu0
        %v5911 = vadd.f32 0.0, %v5910
        %v5912 = vpop.f32.mrb[0].mxu0
        %v5913 = vpop.f32.mrb[0].mxu0
        %v5914 = vadd.f32 0.0, %v5913
        %v5915 = vpop.f32.mrb[0].mxu0
        %5916 = vmatprep.mubr.bf16.mxu0 0
        %5917 = vmatmul.mubr.bf16.gmra.mrb[0].mxu0 %v5783
        %v5918 = vpop.f32.mrb[0].mxu0
        %v5919 = vadd.f32 0.0, %v5918
        %v5920 = vpop.f32.mrb[0].mxu0
        %v5921 = vpop.f32.mrb[0].mxu0
        %v5922 = vadd.f32 0.0, %v5921
        %v5923 = vpop.f32.mrb[0].mxu0
        %5924 = vmatprep.mubr.bf16.mxu0 0
        %5925 = vmatmul.mubr.bf16.gmra.mrb[0].mxu0 %v5784
        %v5926 = vpop.f32.mrb[0].mxu0
        %v5927 = vadd.f32 0.0, %v5926
        %v5928 = vpop.f32.mrb[0].mxu0
        %v5929 = vpop.f32.mrb[0].mxu0
        %v5930 = vadd.f32 0.0, %v5929
        %v5931 = vpop.f32.mrb[0].mxu0
        %5932 = vmatprep.mubr.bf16.mxu0 0
        %5933 = vmatmul.mubr.bf16.gmra.mrb[0].mxu0 %v5785
        %v5934 = vpop.f32.mrb[0].mxu0
        %v5935 = vadd.f32 0.0, %v5934
        %v5936 = vpop.f32.mrb[0].mxu0
        %v5937 = vpop.f32.mrb[0].mxu0
        %v5938 = vadd.f32 0.0, %v5937
        %v5939 = vpop.f32.mrb[0].mxu0
        %5940 = vmatprep.mubr.bf16.mxu0 0
        %5941 = vmatmul.mubr.bf16.gmra.mrb[0].mxu0 %v5786
        %v5942 = vpop.f32.mrb[0].mxu0
        %v5943 = vadd.f32 0.0, %v5942
        %v5944 = vpop.f32.mrb[0].mxu0
        %v5945 = vpop.f32.mrb[0].mxu0
        %v5946 = vadd.f32 0.0, %v5945
        %v5947 = vpop.f32.mrb[0].mxu0
        %5948 = vmatprep.mubr.bf16.mxu0 0
        %5949 = vmatmul.mubr.bf16.gmra.mrb[0].mxu0 %v5787
        %v5950 = vpop.f32.mrb[0].mxu0
        %v5951 = vadd.f32 0.0, %v5950
        %v5952 = vpop.f32.mrb[0].mxu0
        %v5953 = vpop.f32.mrb[0].mxu0
        %v5954 = vadd.f32 0.0, %v5953
        %v5955 = vpop.f32.mrb[0].mxu0
        %5956 = vmatprep.mubr.bf16.mxu0 0
        %5957 = vmatmul.mubr.bf16.gmra.mrb[0].mxu0 %v5788
        %v5958 = vpop.f32.mrb[0].mxu0
        %v5959 = vadd.f32 0.0, %v5958
        %v5960 = vpop.f32.mrb[0].mxu0
        %v5961 = vpop.f32.mrb[0].mxu0
        %v5962 = vadd.f32 0.0, %v5961
        %v5963 = vpop.f32.mrb[0].mxu0
        %5964 = vmatprep.mubr.bf16.mxu0 0
        %5965 = vmatmul.mubr.bf16.gmra.mrb[0].mxu0 %v5789
        %v5966 = vpop.f32.mrb[0].mxu0
        %v5967 = vadd.f32 0.0, %v5966
        %v5968 = vpop.f32.mrb[0].mxu0
        %v5969 = vpop.f32.mrb[0].mxu0
        %v5970 = vadd.f32 0.0, %v5969
        %v5971 = vpop.f32.mrb[0].mxu0
        %5972 = vmatprep.mubr.bf16.mxu0 0
        %5973 = vmatmul.mubr.bf16.gmra.mrb[0].mxu0 %v5790
        %v5974 = vpop.f32.mrb[0].mxu0
        %v5975 = vadd.f32 0.0, %v5974
        %v5976 = vpop.f32.mrb[0].mxu0
        %v5977 = vpop.f32.mrb[0].mxu0
        %v5978 = vadd.f32 0.0, %v5977
        %v5979 = vpop.f32.mrb[0].mxu0
        %5980 = vmatprep.mubr.bf16.mxu0 0
        %5981 = vmatmul.mubr.bf16.gmra.mrb[0].mxu0 %v5791
        %v5982 = vpop.f32.mrb[0].mxu0
        %v5983 = vadd.f32 0.0, %v5982
        %v5984 = vpop.f32.mrb[0].mxu0
        %v5985 = vpop.f32.mrb[0].mxu0
        %v5986 = vadd.f32 0.0, %v5985
        %v5987 = vpop.f32.mrb[0].mxu0
        %5988 = vmatprep.mubr.bf16.mxu0 0
        %5989 = vmatmul.mubr.bf16.gmra.mrb[0].mxu0 %v5792
        %v5990 = vpop.f32.mrb[0].mxu0
        %v5991 = vadd.f32 0.0, %v5990
        %v5992 = vpop.f32.mrb[0].mxu0
        %v5993 = vpop.f32.mrb[0].mxu0
        %v5994 = vadd.f32 0.0, %v5993
        %v5995 = vpop.f32.mrb[0].mxu0
        %5996 = vmatprep.mubr.bf16.mxu0 0
        %5997 = vmatmul.mubr.bf16.gmra.mrb[0].mxu0 %v5793
        %v5998 = vpop.f32.mrb[0].mxu0
        %v5999 = vadd.f32 0.0, %v5998
        %v6000 = vpop.f32.mrb[0].mxu0
        %v6001 = vpop.f32.mrb[0].mxu0
        %v6002 = vadd.f32 0.0, %v6001
        %v6003 = vpop.f32.mrb[0].mxu0
        %6004 = vmatprep.mubr.bf16.mxu0 0
        %6005 = vmatmul.mubr.bf16.gmra.mrb[0].mxu0 %v5794
        %v6006 = vpop.f32.mrb[0].mxu0
        %v6007 = vadd.f32 0.0, %v6006
        %v6008 = vpop.f32.mrb[0].mxu0
        %v6009 = vpop.f32.mrb[0].mxu0
        %v6010 = vadd.f32 0.0, %v6009
        %v6011 = vpop.f32.mrb[0].mxu0
        %6012 = vmatprep.mubr.bf16.mxu0 0
        %6013 = vmatmul.mubr.bf16.gmra.mrb[0].mxu0 %v5795
        %v6014 = vpop.f32.mrb[0].mxu0
        %v6015 = vadd.f32 0.0, %v6014
        %v6016 = vpop.f32.mrb[0].mxu0
        %v6017 = vpop.f32.mrb[0].mxu0
        %v6018 = vadd.f32 0.0, %v6017
        %v6019 = vpop.f32.mrb[0].mxu0
        %6020 = vdwg.mxu0
        %v6021 = vadd.f32 %v5523, %v5895
        %v6022 = vadd.f32 %v5524, %v5898
        %v6023 = vadd.f32 %v5525, %v5903
        %v6024 = vadd.f32 %v5526, %v5906
        %v6025 = vadd.f32 %v5527, %v5911
        %v6026 = vadd.f32 %v5528, %v5914
        %v6027 = vadd.f32 %v5529, %v5919
        %v6028 = vadd.f32 %v5530, %v5922
        %v6029 = vadd.f32 %v5531, %v5927
        %v6030 = vadd.f32 %v5532, %v5930
        %v6031 = vadd.f32 %v5533, %v5935
        %v6032 = vadd.f32 %v5534, %v5938
        %v6033 = vadd.f32 %v5535, %v5943
        %v6034 = vadd.f32 %v5536, %v5946
        %v6035 = vadd.f32 %v5537, %v5951
        %v6036 = vadd.f32 %v5538, %v5954
        %v6037 = vadd.f32 %v5539, %v5959
        %v6038 = vadd.f32 %v5540, %v5962
        %v6039 = vadd.f32 %v5541, %v5967
        %v6040 = vadd.f32 %v5542, %v5970
        %v6041 = vadd.f32 %v5543, %v5975
        %v6042 = vadd.f32 %v5544, %v5978
        %v6043 = vadd.f32 %v5545, %v5983
        %v6044 = vadd.f32 %v5546, %v5986
        %v6045 = vadd.f32 %v5547, %v5991
        %v6046 = vadd.f32 %v5548, %v5994
        %v6047 = vadd.f32 %v5549, %v5999
        %v6048 = vadd.f32 %v5550, %v6002
        %v6049 = vadd.f32 %v5551, %v6007
        %v6050 = vadd.f32 %v5552, %v6010
        %v6051 = vadd.f32 %v5553, %v6015
        %v6052 = vadd.f32 %v5554, %v6018
        %v6053 = vld [vmem:[%s4] sm:$0x1]
        %v6055 = vlaneseq
        %v6056 = vshrl.u32 %v6055, 7
        %v6057 = vsub.s32 0, %v6056
        %v6058 = vrot.slane %v6053, %v6057
        %v6060 = vadd.f32 %v6021, %v6058
        %v6061 = vadd.f32 %v6022, %v6058
        %v6062 = vadd.f32 %v6023, %v6058
        %v6063 = vadd.f32 %v6024, %v6058
        %v6064 = vadd.f32 %v6025, %v6058
        %v6065 = vadd.f32 %v6026, %v6058
        %v6066 = vadd.f32 %v6027, %v6058
        %v6067 = vadd.f32 %v6028, %v6058
        %v6068 = vadd.f32 %v6029, %v6058
        %v6069 = vadd.f32 %v6030, %v6058
        %v6070 = vadd.f32 %v6031, %v6058
        %v6071 = vadd.f32 %v6032, %v6058
        %v6072 = vadd.f32 %v6033, %v6058
        %v6073 = vadd.f32 %v6034, %v6058
        %v6074 = vadd.f32 %v6035, %v6058
        %v6075 = vadd.f32 %v6036, %v6058
        %v6076 = vadd.f32 %v6037, %v6058
        %v6077 = vadd.f32 %v6038, %v6058
        %v6078 = vadd.f32 %v6039, %v6058
        %v6079 = vadd.f32 %v6040, %v6058
        %v6080 = vadd.f32 %v6041, %v6058
        %v6081 = vadd.f32 %v6042, %v6058
        %v6082 = vadd.f32 %v6043, %v6058
        %v6083 = vadd.f32 %v6044, %v6058
        %v6084 = vadd.f32 %v6045, %v6058
        %v6085 = vadd.f32 %v6046, %v6058
        %v6086 = vadd.f32 %v6047, %v6058
        %v6087 = vadd.f32 %v6048, %v6058
        %v6088 = vadd.f32 %v6049, %v6058
        %v6089 = vadd.f32 %v6050, %v6058
        %v6090 = vadd.f32 %v6051, %v6058
        %v6091 = vadd.f32 %v6052, %v6058
        %v6092 = vmax.f32 %v6060, 0.0
        %v6093 = vmax.f32 %v6061, 0.0
        %v6094 = vmax.f32 %v6062, 0.0
        %v6095 = vmax.f32 %v6063, 0.0
        %v6096 = vmax.f32 %v6064, 0.0
        %v6097 = vmax.f32 %v6065, 0.0
        %v6098 = vmax.f32 %v6066, 0.0
        %v6099 = vmax.f32 %v6067, 0.0
        %v6100 = vmax.f32 %v6068, 0.0
        %v6101 = vmax.f32 %v6069, 0.0
        %v6102 = vmax.f32 %v6070, 0.0
        %v6103 = vmax.f32 %v6071, 0.0
        %v6104 = vmax.f32 %v6072, 0.0
        %v6105 = vmax.f32 %v6073, 0.0
        %v6106 = vmax.f32 %v6074, 0.0
        %v6107 = vmax.f32 %v6075, 0.0
        %v6108 = vmax.f32 %v6076, 0.0
        %v6109 = vmax.f32 %v6077, 0.0
        %v6110 = vmax.f32 %v6078, 0.0
        %v6111 = vmax.f32 %v6079, 0.0
        %v6112 = vmax.f32 %v6080, 0.0
        %v6113 = vmax.f32 %v6081, 0.0
        %v6114 = vmax.f32 %v6082, 0.0
        %v6115 = vmax.f32 %v6083, 0.0
        %v6116 = vmax.f32 %v6084, 0.0
        %v6117 = vmax.f32 %v6085, 0.0
        %v6118 = vmax.f32 %v6086, 0.0
        %v6119 = vmax.f32 %v6087, 0.0
        %v6120 = vmax.f32 %v6088, 0.0
        %v6121 = vmax.f32 %v6089, 0.0
        %v6122 = vmax.f32 %v6090, 0.0
        %v6123 = vmax.f32 %v6091, 0.0
        %v6124 = vpack.c.bf16 %v6093, %v6092
        %v6125 = vpack.c.bf16 %v6095, %v6094
        %v6126 = vpack.c.bf16 %v6097, %v6096
        %v6127 = vpack.c.bf16 %v6099, %v6098
        %v6128 = vpack.c.bf16 %v6101, %v6100
        %v6129 = vpack.c.bf16 %v6103, %v6102
        %v6130 = vpack.c.bf16 %v6105, %v6104
        %v6131 = vpack.c.bf16 %v6107, %v6106
        %v6132 = vpack.c.bf16 %v6109, %v6108
        %v6133 = vpack.c.bf16 %v6111, %v6110
        %v6134 = vpack.c.bf16 %v6113, %v6112
        %v6135 = vpack.c.bf16 %v6115, %v6114
        %v6136 = vpack.c.bf16 %v6117, %v6116
        %v6137 = vpack.c.bf16 %v6119, %v6118
        %v6138 = vpack.c.bf16 %v6121, %v6120
        %v6139 = vpack.c.bf16 %v6123, %v6122
        %v6140 = vld [vmem:[#allocation9] sm:$0xf]
        %v6141 = vld [vmem:[#allocation9 + $0x4] sm:$0xf]
        %v6142 = vld [vmem:[#allocation9 + $0x8] sm:$0xf]
        %v6143 = vld [vmem:[#allocation9 + $0xc] sm:$0xf]
        %v6144 = vld [vmem:[#allocation9 + $0x10] sm:$0xf]
        %v6145 = vld [vmem:[#allocation9 + $0x14] sm:$0xf]
        %v6146 = vld [vmem:[#allocation9 + $0x18] sm:$0xf]
        %v6147 = vld [vmem:[#allocation9 + $0x1c] sm:$0xf]
        %v6148 = vld [vmem:[#allocation9 + $0x20] sm:$0xf]
        %v6149 = vld [vmem:[#allocation9 + $0x24] sm:$0xf]
        %v6150 = vld [vmem:[#allocation9 + $0x28] sm:$0xf]
        %v6151 = vld [vmem:[#allocation9 + $0x2c] sm:$0xf]
        %v6152 = vld [vmem:[#allocation9 + $0x30] sm:$0xf]
        %v6153 = vld [vmem:[#allocation9 + $0x34] sm:$0xf]
        %v6154 = vld [vmem:[#allocation9 + $0x38] sm:$0xf]
        %v6155 = vld [vmem:[#allocation9 + $0x3c] sm:$0xf]
        %v6156 = vld [vmem:[%s6] sm:$0x1]
        %v6158 = vlaneseq
        %v6159 = vshrl.u32 %v6158, 7
        %v6160 = vsub.s32 0, %v6159
        %v6161 = vrot.slane %v6156, %v6160
        %v6179 = vunpack.c.l.b16 %v6140
        %v6180 = vunpack.c.l.b16 %v6141
        %v6181 = vunpack.c.l.b16 %v6142
        %v6182 = vunpack.c.l.b16 %v6143
        %v6183 = vunpack.c.l.b16 %v6144
        %v6184 = vunpack.c.l.b16 %v6145
        %v6185 = vunpack.c.l.b16 %v6146
        %v6186 = vunpack.c.l.b16 %v6147
        %v6187 = vunpack.c.l.b16 %v6148
        %v6188 = vunpack.c.l.b16 %v6149
        %v6189 = vunpack.c.l.b16 %v6150
        %v6190 = vunpack.c.l.b16 %v6151
        %v6191 = vunpack.c.l.b16 %v6152
        %v6192 = vunpack.c.l.b16 %v6153
        %v6193 = vunpack.c.l.b16 %v6154
        %v6194 = vunpack.c.l.b16 %v6155
        %v6195 = vpack.c.b16 %v6180, %v6179
        %v6196 = vpack.c.b16 %v6182, %v6181
        %v6197 = vpack.c.b16 %v6184, %v6183
        %v6198 = vpack.c.b16 %v6186, %v6185
        %v6199 = vpack.c.b16 %v6188, %v6187
        %v6200 = vpack.c.b16 %v6190, %v6189
        %v6201 = vpack.c.b16 %v6192, %v6191
        %v6202 = vpack.c.b16 %v6194, %v6193
        %6211 = vmatprep.subr.bf16.mxu0 0
        %6212 = vmatpush1.bf16.msra.mxu0 %v6195
        %6213 = vmatprep.subr.bf16.mxu0 0
        %6214 = vmatpush1.bf16.msra.mxu0 %v6196
        %6215 = vmatprep.subr.bf16.mxu0 0
        %6216 = vmatpush1.bf16.msra.mxu0 %v6197
        %6217 = vmatprep.subr.bf16.mxu0 0
        %6218 = vmatpush1.bf16.msra.mxu0 %v6198
        %6219 = vmatprep.subr.bf16.mxu0 0
        %6220 = vmatpush1.bf16.msra.mxu0 %v6199
        %6221 = vmatprep.subr.bf16.mxu0 0
        %6222 = vmatpush1.bf16.msra.mxu0 %v6200
        %6223 = vmatprep.subr.bf16.mxu0 0
        %6224 = vmatpush1.bf16.msra.mxu0 %v6201
        %6225 = vmatprep.subr.bf16.mxu0 0
        %6226 = vmatpush1.bf16.msra.mxu0 %v6202
        %6227 = vmatprep.subr.bf16.mxu0 0
        %6228 = vmatpush1.bf16.msra.mxu0 0
        %6229 = vmatprep.subr.bf16.mxu0 0
        %6230 = vmatpush1.bf16.msra.mxu0 0
        %6231 = vmatprep.subr.bf16.mxu0 0
        %6232 = vmatpush1.bf16.msra.mxu0 0
        %6233 = vmatprep.subr.bf16.mxu0 0
        %6234 = vmatpush1.bf16.msra.mxu0 0
        %6235 = vmatprep.subr.bf16.mxu0 0
        %6236 = vmatpush1.bf16.msra.mxu0 0
        %6237 = vmatprep.subr.bf16.mxu0 0
        %6238 = vmatpush1.bf16.msra.mxu0 0
        %6239 = vmatprep.subr.bf16.mxu0 0
        %6240 = vmatpush1.bf16.msra.mxu0 0
        %6241 = vmatprep.subr.bf16.mxu0 0
        %6242 = vmatpush1.bf16.msra.mxu0 0
        %6243 = vmatprep.mubr.bf16.mxu0 0
        %6244 = vmatmul.mubr.bf16.gmra.mrb[0].mxu0 %v6124
        %v6245 = vpop.f32.mrb[0].mxu0
        %v6246 = vadd.f32 %v6161, %v6245
        %v6247 = vpop.f32.mrb[0].mxu0
        %v6248 = vpop.f32.mrb[0].mxu0
        %v6249 = vadd.f32 %v6161, %v6248
        %v6250 = vpop.f32.mrb[0].mxu0
        %6251 = vmatprep.mubr.bf16.mxu0 0
        %6252 = vmatmul.mubr.bf16.gmra.mrb[0].mxu0 %v6125
        %v6253 = vpop.f32.mrb[0].mxu0
        %v6254 = vadd.f32 %v6161, %v6253
        %v6255 = vpop.f32.mrb[0].mxu0
        %v6256 = vpop.f32.mrb[0].mxu0
        %v6257 = vadd.f32 %v6161, %v6256
        %v6258 = vpop.f32.mrb[0].mxu0
        %6259 = vmatprep.mubr.bf16.mxu0 0
        %6260 = vmatmul.mubr.bf16.gmra.mrb[0].mxu0 %v6126
        %v6261 = vpop.f32.mrb[0].mxu0
        %v6262 = vadd.f32 %v6161, %v6261
        %v6263 = vpop.f32.mrb[0].mxu0
        %v6264 = vpop.f32.mrb[0].mxu0
        %v6265 = vadd.f32 %v6161, %v6264
        %v6266 = vpop.f32.mrb[0].mxu0
        %6267 = vmatprep.mubr.bf16.mxu0 0
        %6268 = vmatmul.mubr.bf16.gmra.mrb[0].mxu0 %v6127
        %v6269 = vpop.f32.mrb[0].mxu0
        %v6270 = vadd.f32 %v6161, %v6269
        %v6271 = vpop.f32.mrb[0].mxu0
        %v6272 = vpop.f32.mrb[0].mxu0
        %v6273 = vadd.f32 %v6161, %v6272
        %v6274 = vpop.f32.mrb[0].mxu0
        %6275 = vmatprep.mubr.bf16.mxu0 0
        %6276 = vmatmul.mubr.bf16.gmra.mrb[0].mxu0 %v6128
        %v6277 = vpop.f32.mrb[0].mxu0
        %v6278 = vadd.f32 %v6161, %v6277
        %v6279 = vpop.f32.mrb[0].mxu0
        %v6280 = vpop.f32.mrb[0].mxu0
        %v6281 = vadd.f32 %v6161, %v6280
        %v6282 = vpop.f32.mrb[0].mxu0
        %6283 = vmatprep.mubr.bf16.mxu0 0
        %6284 = vmatmul.mubr.bf16.gmra.mrb[0].mxu0 %v6129
        %v6285 = vpop.f32.mrb[0].mxu0
        %v6286 = vadd.f32 %v6161, %v6285
        %v6287 = vpop.f32.mrb[0].mxu0
        %v6288 = vpop.f32.mrb[0].mxu0
        %v6289 = vadd.f32 %v6161, %v6288
        %v6290 = vpop.f32.mrb[0].mxu0
        %6291 = vmatprep.mubr.bf16.mxu0 0
        %6292 = vmatmul.mubr.bf16.gmra.mrb[0].mxu0 %v6130
        %v6293 = vpop.f32.mrb[0].mxu0
        %v6294 = vadd.f32 %v6161, %v6293
        %v6295 = vpop.f32.mrb[0].mxu0
        %v6296 = vpop.f32.mrb[0].mxu0
        %v6297 = vadd.f32 %v6161, %v6296
        %v6298 = vpop.f32.mrb[0].mxu0
        %6299 = vmatprep.mubr.bf16.mxu0 0
        %6300 = vmatmul.mubr.bf16.gmra.mrb[0].mxu0 %v6131
        %v6301 = vpop.f32.mrb[0].mxu0
        %v6302 = vadd.f32 %v6161, %v6301
        %v6303 = vpop.f32.mrb[0].mxu0
        %v6304 = vpop.f32.mrb[0].mxu0
        %v6305 = vadd.f32 %v6161, %v6304
        %v6306 = vpop.f32.mrb[0].mxu0
        %6307 = vmatprep.mubr.bf16.mxu0 0
        %6308 = vmatmul.mubr.bf16.gmra.mrb[0].mxu0 %v6132
        %v6309 = vpop.f32.mrb[0].mxu0
        %v6310 = vadd.f32 %v6161, %v6309
        %v6311 = vpop.f32.mrb[0].mxu0
        %v6312 = vpop.f32.mrb[0].mxu0
        %v6313 = vadd.f32 %v6161, %v6312
        %v6314 = vpop.f32.mrb[0].mxu0
        %6315 = vmatprep.mubr.bf16.mxu0 0
        %6316 = vmatmul.mubr.bf16.gmra.mrb[0].mxu0 %v6133
        %v6317 = vpop.f32.mrb[0].mxu0
        %v6318 = vadd.f32 %v6161, %v6317
        %v6319 = vpop.f32.mrb[0].mxu0
        %v6320 = vpop.f32.mrb[0].mxu0
        %v6321 = vadd.f32 %v6161, %v6320
        %v6322 = vpop.f32.mrb[0].mxu0
        %6323 = vmatprep.mubr.bf16.mxu0 0
        %6324 = vmatmul.mubr.bf16.gmra.mrb[0].mxu0 %v6134
        %v6325 = vpop.f32.mrb[0].mxu0
        %v6326 = vadd.f32 %v6161, %v6325
        %v6327 = vpop.f32.mrb[0].mxu0
        %v6328 = vpop.f32.mrb[0].mxu0
        %v6329 = vadd.f32 %v6161, %v6328
        %v6330 = vpop.f32.mrb[0].mxu0
        %6331 = vmatprep.mubr.bf16.mxu0 0
        %6332 = vmatmul.mubr.bf16.gmra.mrb[0].mxu0 %v6135
        %v6333 = vpop.f32.mrb[0].mxu0
        %v6334 = vadd.f32 %v6161, %v6333
        %v6335 = vpop.f32.mrb[0].mxu0
        %v6336 = vpop.f32.mrb[0].mxu0
        %v6337 = vadd.f32 %v6161, %v6336
        %v6338 = vpop.f32.mrb[0].mxu0
        %6339 = vmatprep.mubr.bf16.mxu0 0
        %6340 = vmatmul.mubr.bf16.gmra.mrb[0].mxu0 %v6136
        %v6341 = vpop.f32.mrb[0].mxu0
        %v6342 = vadd.f32 %v6161, %v6341
        %v6343 = vpop.f32.mrb[0].mxu0
        %v6344 = vpop.f32.mrb[0].mxu0
        %v6345 = vadd.f32 %v6161, %v6344
        %v6346 = vpop.f32.mrb[0].mxu0
        %6347 = vmatprep.mubr.bf16.mxu0 0
        %6348 = vmatmul.mubr.bf16.gmra.mrb[0].mxu0 %v6137
        %v6349 = vpop.f32.mrb[0].mxu0
        %v6350 = vadd.f32 %v6161, %v6349
        %v6351 = vpop.f32.mrb[0].mxu0
        %v6352 = vpop.f32.mrb[0].mxu0
        %v6353 = vadd.f32 %v6161, %v6352
        %v6354 = vpop.f32.mrb[0].mxu0
        %6355 = vmatprep.mubr.bf16.mxu0 0
        %6356 = vmatmul.mubr.bf16.gmra.mrb[0].mxu0 %v6138
        %v6357 = vpop.f32.mrb[0].mxu0
        %v6358 = vadd.f32 %v6161, %v6357
        %v6359 = vpop.f32.mrb[0].mxu0
        %v6360 = vpop.f32.mrb[0].mxu0
        %v6361 = vadd.f32 %v6161, %v6360
        %v6362 = vpop.f32.mrb[0].mxu0
        %6363 = vmatprep.mubr.bf16.mxu0 0
        %6364 = vmatmul.mubr.bf16.gmra.mrb[0].mxu0 %v6139
        %v6365 = vpop.f32.mrb[0].mxu0
        %v6366 = vadd.f32 %v6161, %v6365
        %v6367 = vpop.f32.mrb[0].mxu0
        %v6368 = vpop.f32.mrb[0].mxu0
        %v6369 = vadd.f32 %v6161, %v6368
        %v6370 = vpop.f32.mrb[0].mxu0
        %6371 = vdwg.mxu0
        %v6372 = vadd.f32 %v6246, %v396
        %v6373 = vadd.f32 %v6249, %v397
        %v6374 = vadd.f32 %v6254, %v398
        %v6375 = vadd.f32 %v6257, %v399
        %v6376 = vadd.f32 %v6262, %v400
        %v6377 = vadd.f32 %v6265, %v401
        %v6378 = vadd.f32 %v6270, %v402
        %v6379 = vadd.f32 %v6273, %v403
        %v6380 = vadd.f32 %v6278, %v404
        %v6381 = vadd.f32 %v6281, %v405
        %v6382 = vadd.f32 %v6286, %v406
        %v6383 = vadd.f32 %v6289, %v407
        %v6384 = vadd.f32 %v6294, %v408
        %v6385 = vadd.f32 %v6297, %v409
        %v6386 = vadd.f32 %v6302, %v410
        %v6387 = vadd.f32 %v6305, %v411
        %v6388 = vadd.f32 %v6310, %v412
        %v6389 = vadd.f32 %v6313, %v413
        %v6390 = vadd.f32 %v6318, %v414
        %v6391 = vadd.f32 %v6321, %v415
        %v6392 = vadd.f32 %v6326, %v416
        %v6393 = vadd.f32 %v6329, %v417
        %v6394 = vadd.f32 %v6334, %v418
        %v6395 = vadd.f32 %v6337, %v419
        %v6396 = vadd.f32 %v6342, %v420
        %v6397 = vadd.f32 %v6345, %v421
        %v6398 = vadd.f32 %v6350, %v422
        %v6399 = vadd.f32 %v6353, %v423
        %v6400 = vadd.f32 %v6358, %v424
        %v6401 = vadd.f32 %v6361, %v425
        %v6402 = vadd.f32 %v6366, %v426
        %v6403 = vadd.f32 %v6369, %v427
        %v6404 = vmax.f32 %v6372, 0.0
        %v6405 = vmax.f32 %v6373, 0.0
        %v6406 = vmax.f32 %v6374, 0.0
        %v6407 = vmax.f32 %v6375, 0.0
        %v6408 = vmax.f32 %v6376, 0.0
        %v6409 = vmax.f32 %v6377, 0.0
        %v6410 = vmax.f32 %v6378, 0.0
        %v6411 = vmax.f32 %v6379, 0.0
        %v6412 = vmax.f32 %v6380, 0.0
        %v6413 = vmax.f32 %v6381, 0.0
        %v6414 = vmax.f32 %v6382, 0.0
        %v6415 = vmax.f32 %v6383, 0.0
        %v6416 = vmax.f32 %v6384, 0.0
        %v6417 = vmax.f32 %v6385, 0.0
        %v6418 = vmax.f32 %v6386, 0.0
        %v6419 = vmax.f32 %v6387, 0.0
        %v6420 = vmax.f32 %v6388, 0.0
        %v6421 = vmax.f32 %v6389, 0.0
        %v6422 = vmax.f32 %v6390, 0.0
        %v6423 = vmax.f32 %v6391, 0.0
        %v6424 = vmax.f32 %v6392, 0.0
        %v6425 = vmax.f32 %v6393, 0.0
        %v6426 = vmax.f32 %v6394, 0.0
        %v6427 = vmax.f32 %v6395, 0.0
        %v6428 = vmax.f32 %v6396, 0.0
        %v6429 = vmax.f32 %v6397, 0.0
        %v6430 = vmax.f32 %v6398, 0.0
        %v6431 = vmax.f32 %v6399, 0.0
        %v6432 = vmax.f32 %v6400, 0.0
        %v6433 = vmax.f32 %v6401, 0.0
        %v6434 = vmax.f32 %v6402, 0.0
        %v6435 = vmax.f32 %v6403, 0.0
        %v6436 = vpack.c.bf16 %v6405, %v6404
        %v6437 = vpack.c.bf16 %v6407, %v6406
        %v6438 = vpack.c.bf16 %v6409, %v6408
        %v6439 = vpack.c.bf16 %v6411, %v6410
        %v6440 = vpack.c.bf16 %v6413, %v6412
        %v6441 = vpack.c.bf16 %v6415, %v6414
        %v6442 = vpack.c.bf16 %v6417, %v6416
        %v6443 = vpack.c.bf16 %v6419, %v6418
        %v6444 = vpack.c.bf16 %v6421, %v6420
        %v6445 = vpack.c.bf16 %v6423, %v6422
        %v6446 = vpack.c.bf16 %v6425, %v6424
        %v6447 = vpack.c.bf16 %v6427, %v6426
        %v6448 = vpack.c.bf16 %v6429, %v6428
        %v6449 = vpack.c.bf16 %v6431, %v6430
        %v6450 = vpack.c.bf16 %v6433, %v6432
        %v6451 = vpack.c.bf16 %v6435, %v6434
        %v6468 = vunpack.c.l.b16 %v6436
        %v6469 = vunpack.c.h.b16 %v6436
        %v6470 = vunpack.c.l.b16 %v6437
        %v6471 = vunpack.c.h.b16 %v6437
        %v6472 = vunpack.c.l.b16 %v6438
        %v6473 = vunpack.c.h.b16 %v6438
        %v6474 = vunpack.c.l.b16 %v6439
        %v6475 = vunpack.c.h.b16 %v6439
        %v6476 = vunpack.c.l.b16 %v6440
        %v6477 = vunpack.c.h.b16 %v6440
        %v6478 = vunpack.c.l.b16 %v6441
        %v6479 = vunpack.c.h.b16 %v6441
        %v6480 = vunpack.c.l.b16 %v6442
        %v6481 = vunpack.c.h.b16 %v6442
        %v6482 = vunpack.c.l.b16 %v6443
        %v6483 = vunpack.c.h.b16 %v6443
        %v6484 = vunpack.c.l.b16 %v6444
        %v6485 = vunpack.c.h.b16 %v6444
        %v6486 = vunpack.c.l.b16 %v6445
        %v6487 = vunpack.c.h.b16 %v6445
        %v6488 = vunpack.c.l.b16 %v6446
        %v6489 = vunpack.c.h.b16 %v6446
        %v6490 = vunpack.c.l.b16 %v6447
        %v6491 = vunpack.c.h.b16 %v6447
        %v6492 = vunpack.c.l.b16 %v6448
        %v6493 = vunpack.c.h.b16 %v6448
        %v6494 = vunpack.c.l.b16 %v6449
        %v6495 = vunpack.c.h.b16 %v6449
        %v6496 = vunpack.c.l.b16 %v6450
        %v6497 = vunpack.c.h.b16 %v6450
        %v6498 = vunpack.c.l.b16 %v6451
        %v6499 = vunpack.c.h.b16 %v6451
        %v6500 = vpack.c.b16 %v6468, %v6468
        %v6501 = vpack.c.b16 %v6469, %v6469
        %v6502 = vpack.c.b16 %v6470, %v6470
        %v6503 = vpack.c.b16 %v6471, %v6471
        %v6504 = vpack.c.b16 %v6472, %v6472
        %v6505 = vpack.c.b16 %v6473, %v6473
        %v6506 = vpack.c.b16 %v6474, %v6474
        %v6507 = vpack.c.b16 %v6475, %v6475
        %v6508 = vpack.c.b16 %v6476, %v6476
        %v6509 = vpack.c.b16 %v6477, %v6477
        %v6510 = vpack.c.b16 %v6478, %v6478
        %v6511 = vpack.c.b16 %v6479, %v6479
        %v6512 = vpack.c.b16 %v6480, %v6480
        %v6513 = vpack.c.b16 %v6481, %v6481
        %v6514 = vpack.c.b16 %v6482, %v6482
        %v6515 = vpack.c.b16 %v6483, %v6483
        %v6516 = vpack.c.b16 %v6484, %v6484
        %v6517 = vpack.c.b16 %v6485, %v6485
        %v6518 = vpack.c.b16 %v6486, %v6486
        %v6519 = vpack.c.b16 %v6487, %v6487
        %v6520 = vpack.c.b16 %v6488, %v6488
        %v6521 = vpack.c.b16 %v6489, %v6489
        %v6522 = vpack.c.b16 %v6490, %v6490
        %v6523 = vpack.c.b16 %v6491, %v6491
        %v6524 = vpack.c.b16 %v6492, %v6492
        %v6525 = vpack.c.b16 %v6493, %v6493
        %v6526 = vpack.c.b16 %v6494, %v6494
        %v6527 = vpack.c.b16 %v6495, %v6495
        %v6528 = vpack.c.b16 %v6496, %v6496
        %v6529 = vpack.c.b16 %v6497, %v6497
        %v6530 = vpack.c.b16 %v6498, %v6498
        %v6531 = vpack.c.b16 %v6499, %v6499
        %6564 = vst [vmem:[%s340] sm:$0xf] %v6500
        %6565 = vst [vmem:[%s340 + $0x4] sm:$0xf] %v6501
        %6566 = vst [vmem:[%s340 + $0x8] sm:$0xf] %v6502
        %6567 = vst [vmem:[%s340 + $0xc] sm:$0xf] %v6503
        %6568 = vst [vmem:[%s340 + $0x10] sm:$0xf] %v6504
        %6569 = vst [vmem:[%s340 + $0x14] sm:$0xf] %v6505
        %6570 = vst [vmem:[%s340 + $0x18] sm:$0xf] %v6506
        %6571 = vst [vmem:[%s340 + $0x1c] sm:$0xf] %v6507
        %6572 = vst [vmem:[%s340 + $0x20] sm:$0xf] %v6508
        %6573 = vst [vmem:[%s340 + $0x24] sm:$0xf] %v6509
        %6574 = vst [vmem:[%s340 + $0x28] sm:$0xf] %v6510
        %6575 = vst [vmem:[%s340 + $0x2c] sm:$0xf] %v6511
        %6576 = vst [vmem:[%s340 + $0x30] sm:$0xf] %v6512
        %6577 = vst [vmem:[%s340 + $0x34] sm:$0xf] %v6513
        %6578 = vst [vmem:[%s340 + $0x38] sm:$0xf] %v6514
        %6579 = vst [vmem:[%s340 + $0x3c] sm:$0xf] %v6515
        %6580 = vst [vmem:[%s340 + $0x40] sm:$0xf] %v6516
        %6581 = vst [vmem:[%s340 + $0x44] sm:$0xf] %v6517
        %6582 = vst [vmem:[%s340 + $0x48] sm:$0xf] %v6518
        %6583 = vst [vmem:[%s340 + $0x4c] sm:$0xf] %v6519
        %6584 = vst [vmem:[%s340 + $0x50] sm:$0xf] %v6520
        %6585 = vst [vmem:[%s340 + $0x54] sm:$0xf] %v6521
        %6586 = vst [vmem:[%s340 + $0x58] sm:$0xf] %v6522
        %6587 = vst [vmem:[%s340 + $0x5c] sm:$0xf] %v6523
        %6588 = vst [vmem:[%s340 + $0x60] sm:$0xf] %v6524
        %6589 = vst [vmem:[%s340 + $0x64] sm:$0xf] %v6525
        %6590 = vst [vmem:[%s340 + $0x68] sm:$0xf] %v6526
        %6591 = vst [vmem:[%s340 + $0x6c] sm:$0xf] %v6527
        %6592 = vst [vmem:[%s340 + $0x70] sm:$0xf] %v6528
        %6593 = vst [vmem:[%s340 + $0x74] sm:$0xf] %v6529
        %6594 = vst [vmem:[%s340 + $0x78] sm:$0xf] %v6530
        %6595 = vst [vmem:[%s340 + $0x7c] sm:$0xf] %v6531
        %s6596 = sand.u32 %s186, 1
        %s6597 = scalar_lea.sflag [#allocation5], %s6596
        %s6598 = sand.u32 %s186, 1
        %s6599 = smul.addr %s6598, 128
        %s6600 = scalar_lea.vmem [#allocation11], %s6599
        // Predicated region
        $region65: #{tpu_custom_call.1} parent=47 // pred_check
          %p6601 = pneg %p196
        $region66: #{tpu_custom_call.1} parent=47 // pred_check_branch
          %6603 = sbr.rel (%p6601) target = $region68
        $region67: #{tpu_custom_call.1} parent=47 // pred_region
          %s6605 = ssub.s32 2048, 2048
          %6606 = vsyncadd %s6597, %s6605
          %s6607 = smul.addr %s26, 32
          %s6608 = smul.addr %s6607, 64
          %s6609 = scalar_lea.hbm %s7, %s6608
          %s6610 = sshll.u32 %s6600, 4
          %s6611 = int_to_ptr.vmem [resolvable:$true] %s6610
          %6616 = dma.vmem_to_hbm [thread:$0]  %s6611, 2048, %s6609, %s6597, 64, 64, 4
        $region68: #{tpu_custom_call.1} parent=47 // pred_fallthru
          _
      $region48: #{tpu_custom_call.1} parent=5 // pred_fallthru
        _
      %p6617 = scmp.le.s32.totalorder 2, %s21
      // Predicated region
      $region69: #{tpu_custom_call.1} parent=5 // pred_check
        %p6618 = pneg %p6617
      $region70: #{tpu_custom_call.1} parent=5 // pred_check_branch
        %6620 = sbr.rel (%p6618) target = $region72
      $region71: #{tpu_custom_call.1} parent=5 // pred_region
        %s6621 = ssub.s32 %s21, 2
        // Predicated region
        $region73: #{tpu_custom_call.1} parent=71 // pred_check
          %p6622 = pneg %p202
        $region74: #{tpu_custom_call.1} parent=71 // pred_check_branch
          %6624 = sbr.rel (%p6622) target = $region76
        $region75: #{tpu_custom_call.1} parent=71 // pred_region
          %s6625 = sand.u32 %s187, 1
          %s6626 = scalar_lea.sflag [#allocation5], %s6625
          %s6627 = sand.u32 %s187, 1
          %s6628 = smul.addr %s6627, 128
          %s6629 = scalar_lea.vmem [#allocation11], %s6628
          %6630 = dma.done %s6626, 2048
        $region76: #{tpu_custom_call.1} parent=71 // pred_fallthru
          _
      $region72: #{tpu_custom_call.1} parent=5 // pred_fallthru
        _
    $region6: #{tpu_custom_call.1} parent=1 // loop_footer
      %s25 = sadd.s32 1, %s21
    $region7: #{tpu_custom_call.1} parent=1 // loop_footer_branch
      %20 = sbr.rel target = $region3
    $region8: #{tpu_custom_call.1} parent=1 // loop_exit
      _
    %6631 = vsyncpa [#allocation4], 1
    %s6632 = scalar_lea.sflag [#allocation4], 1
    %6633 = vsyncpa %s6632, 1
    %6634 = vsyncpa [#allocation7], 1
    %6635 = vsyncpa [#allocation10], 1
    %6636 = vsyncpa [#allocation5], 1
    %s6637 = scalar_lea.sflag [#allocation5], 1
    %6638 = vsyncpa %s6637, 1

</llo_original>
